<compile_context>
chip_gen: v5e
topology: v5e:2x2
jax: 0.10.0
libtpu: 0.0.40
codegen_flags: <defaults>
</compile_context>

<pallas_src>
import functools

import numpy as np
import jax
import jax.numpy as jnp
from jax.experimental import pallas as pl
from jax.experimental.pallas import tpu as pltpu

LANE_WIDTH = 512                      # lane-dense last dim -> wide unmasked vst

# Leaves routed through the Pallas kernel must carry enough bytes to be worth a
# custom-call dispatch (and must be exactly reshapeable to (rows, 512)).
# Everything smaller / odd-sized goes through a fused jnp expression instead.
PALLAS_MIN_ELEMS = 128 * LANE_WIDTH   # 64K elems (256 KiB at f32)


def _chip_tuning():
    """Per-generation tile budget (bytes per ref) and v7x two-TensorCore flag."""
    kind = jax.devices()[0].device_kind.lower()
    if "v7" in kind or "7x" in kind:
        # 4 MiB/ref -> 3 refs x 2 buffers = 24 MiB (< 32 MiB scoped, < 64 MiB phys).
        return 4 * 1024 * 1024, True
    if "v6" in kind:
        # 24 MiB of pipeline buffers fits v6e's 32 MiB default scoped VMEM.
        return 4 * 1024 * 1024, False
    # v5e and older / unknown: 1 MiB/ref (6 MiB buffers) stays far inside the
    # 16 MiB default scoped VMEM with no vmem_limit override.
    return 1 * 1024 * 1024, False


MAX_TILE_BYTES_PER_REF, SPLIT_FOR_TWO_CORES = _chip_tuning()


def ema_kernel(omd_ref, shadow_ref, param_ref, out_ref):
    """out = shadow - one_minus_decay * (shadow - param)   (pure elementwise)."""
    omd = omd_ref[0]                                  # f32 scalar in SMEM
    s = shadow_ref[...].astype(jnp.float32)
    p = param_ref[...].astype(jnp.float32)            # cast on VPU, not in HBM
    out_ref[...] = (s - omd * (s - p)).astype(out_ref.dtype)


def _round_up(x, m):
    return -(-x // m) * m


def _ema_slab_update(shadow_slab, param_slab, omd):
    """EMA update of one persistent (rows, LANE_WIDTH) shadow slab, in place."""
    R, C = shadow_slab.shape
    itemsize = max(shadow_slab.dtype.itemsize, param_slab.dtype.itemsize)
    # Byte-budget -> row budget (multiple of 8); bf16 automatically gets 2x rows.
    max_rows = max(8, (MAX_TILE_BYTES_PER_REF // (C * itemsize)) // 8 * 8)

    if R <= max_rows:
        if SPLIT_FOR_TWO_CORES:
            # Ensure grid >= 2 so the "parallel" axis uses both v7x TensorCores.
            block_rows = min(_round_up(-(-R // 2), 8), R)
        else:
            block_rows = R
    else:
        block_rows = max_rows

    grid = (pl.cdiv(R, block_rows),)
    tile = pl.BlockSpec((block_rows, C), lambda i: (i, 0))

    return pl.pallas_call(
        ema_kernel,
        out_shape=jax.ShapeDtypeStruct((R, C), shadow_slab.dtype),
        grid=grid,
        in_specs=[
            pl.BlockSpec(memory_space=pltpu.MemorySpace.SMEM),  # omd scalar
            tile,                                               # shadow
            tile,                                               # param
        ],
        out_specs=tile,
        # Operands are (omd, shadow, param): input 1 == shadow aliases output 0,
        # so the shadow buffer is updated in place (no extra HBM output).
        input_output_aliases={1: 0},
        compiler_params=pltpu.CompilerParams(
            dimension_semantics=("parallel",)),
    )(omd, shadow_slab, param_slab)


def ema_init(params):
    """Clone params into persistent shadow state (like register_buffer).

    Big, 512-divisible leaves are stored once in lane-dense (rows, 512) slab
    form (Pallas path); everything else keeps its original shape (jnp path).
    """
    shadow = {"slabs": {}, "small": {}}
    meta = {}
    for name, p in params.items():
        p = jnp.asarray(p)
        if p.size >= PALLAS_MIN_ELEMS and p.size % LANE_WIDTH == 0:
            rows = p.size // LANE_WIDTH
            shadow["slabs"][name] = p.reshape(rows, LANE_WIDTH)
            meta[name] = ("slab", p.shape, p.dtype)
        else:
            shadow["small"][name] = p
            meta[name] = ("small", p.shape, p.dtype)
    return shadow, meta


@functools.partial(jax.jit, donate_argnums=(0,))
def ema_update(shadow, params, num_updates, base_decay):
    """One EMAModel.forward() step; `shadow` is donated and updated in place."""
    n = jnp.asarray(num_updates, jnp.int32)
    base = jnp.asarray(base_decay, jnp.float32)
    # decay = min(base, (1 + n_new) / (10 + n_new)) if n >= 0 else base, n_new = n+1
    n_new_f = (n + 1).astype(jnp.float32)
    dyn = (1.0 + n_new_f) / (10.0 + n_new_f)
    decay = jnp.where(n >= 0, jnp.minimum(base, dyn), base)
    omd_scalar = (1.0 - decay).astype(jnp.float32)     # one_minus_decay
    omd = omd_scalar.reshape((1,))                     # SMEM operand for the kernel

    new_shadow = {"slabs": {}, "small": {}}

    # Big weights: one Pallas streaming call per leaf (free reshape, native dtype).
    for name, slab in shadow["slabs"].items():
        param_slab = params[name].reshape(slab.shape[0], LANE_WIDTH)
        new_shadow["slabs"][name] = _ema_slab_update(slab, param_slab, omd)

    # Long tail of tiny leaves: plain fused jnp expressions (no per-leaf dispatch).
    for name, s in shadow["small"].items():
        p = params[name]
        upd = s.astype(jnp.float32) - omd_scalar * (s.astype(jnp.float32)
                                                    - p.astype(jnp.float32))
        new_shadow["small"][name] = upd.astype(s.dtype)

    new_num_updates = jnp.where(n >= 0, n + 1, n)
    return new_shadow, new_num_updates


def ema_copy_to(shadow, meta):
    """Unpack shadow state back to original parameter shapes (EMAModel.copy_to)."""
    out = {}
    for name, (kind, shape, dtype) in meta.items():
        src = shadow["slabs"][name] if kind == "slab" else shadow["small"][name]
        out[name] = src.reshape(shape).astype(dtype)
    return out


if __name__ == "__main__":
    key = jax.random.PRNGKey(0)
    ks = jax.random.split(key, 6)

    # Synthetic "model" parameters: a couple of weights large enough to stream
    # through the Pallas kernel plus the usual long tail of tiny leaves.
    model_params = {
        "conv.weight":         jax.random.normal(ks[0], (4, 4, 3, 3), jnp.float32),
        "conv.bias":           jax.random.normal(ks[1], (4,), jnp.float32),
        "fc.weight":           jax.random.normal(ks[2], (32, 64), jnp.float32),
        "fc.bias":             jax.random.normal(ks[3], (32,), jnp.float32),
        "attn.in_proj.weight": jax.random.normal(ks[4], (384, 512), jnp.float32),
        "mlp.fc1.weight":      jax.random.normal(ks[5], (1024, 768), jnp.float32),
    }
    # Shadow (EMA) params: a perturbed clone so the update is non-trivial.
    shadow_params = jax.tree_util.tree_map(lambda p: p + 0.1, model_params)

    base_decay = 0.9999
    num_updates = jnp.int32(0)          # use_num_updates=True -> starts at 0

    # Host-side reference, materialized BEFORE the donating update call.
    shadow_np = {k: np.asarray(v) for k, v in shadow_params.items()}
    param_np = {k: np.asarray(v) for k, v in model_params.items()}
    n_int = int(num_updates)
    n_new = n_int + 1
    ref_decay = min(base_decay, (1 + n_new) / (10 + n_new)) if n_int >= 0 else base_decay
    ref_omd = np.float32(1.0 - ref_decay)
    ref_shadow = {k: shadow_np[k] - ref_omd * (shadow_np[k] - param_np[k])
                  for k in model_params}

    # EMA state (packed once, like __init__ / register_buffer).
    shadow_state, meta = ema_init(shadow_params)

    # One EMAModel.forward() step (shadow updated in place via donation + aliasing).
    new_state, new_num_updates = ema_update(shadow_state, model_params,
                                            num_updates, base_decay)
    jax.block_until_ready(new_state)

    new_shadow = ema_copy_to(new_state, meta)
    for k in model_params:
        np.testing.assert_allclose(np.asarray(new_shadow[k]), ref_shadow[k],
                                   rtol=1e-5, atol=1e-5)
    expected_n = n_new if n_int >= 0 else n_int
    assert int(new_num_updates) == expected_n

    # TODO(synk): store()/restore()/copy_to() onto a live torch model are host-side
    # parameter bookkeeping (plain copies); they carry no kernel content.
    print("KERNEL_OK")
</pallas_src>

<mosaic_0001>
module attributes {stable_mosaic.version = 11 : i64} {
  func.func @ema_kernel(%arg0: i32, %arg1: memref<1xf32, #tpu.memory_space<smem>>, %arg2: memref<384x512xf32, #tpu.memory_space<vmem>>, %arg3: memref<384x512xf32, #tpu.memory_space<vmem>>, %arg4: memref<384x512xf32, #tpu.memory_space<vmem>>) attributes {dimension_semantics = [#tpu.dimension_semantics<parallel>], iteration_bounds = array<i64: 1>, scalar_prefetch = 0 : i64, scratch_operands = 0 : i64, tpu.core_type = #tpu.core_type<tc>, window_params = [{transform_indices = @transform_0, window_bounds = array<i64: 1>}, {transform_indices = @transform_1, window_bounds = array<i64: 384, 512>}, {transform_indices = @transform_2, window_bounds = array<i64: 384, 512>}, {transform_indices = @transform_3, window_bounds = array<i64: 384, 512>}]} {
    %c0 = arith.constant 0 : index
    %0 = memref.load %arg1[%c0] : memref<1xf32, #tpu.memory_space<smem>>
    %c0_0 = arith.constant 0 : index
    %c0_1 = arith.constant 0 : index
    %1 = vector.load %arg2[%c0_0, %c0_1] : memref<384x512xf32, #tpu.memory_space<vmem>>, vector<384x512xf32>
    %c0_2 = arith.constant 0 : index
    %c0_3 = arith.constant 0 : index
    %2 = vector.load %arg3[%c0_2, %c0_3] : memref<384x512xf32, #tpu.memory_space<vmem>>, vector<384x512xf32>
    %3 = arith.subf %1, %2 : vector<384x512xf32>
    %4 = vector.broadcast %0 : f32 to vector<384x512xf32>
    %5 = arith.mulf %4, %3 : vector<384x512xf32>
    %6 = arith.subf %1, %5 : vector<384x512xf32>
    %c0_4 = arith.constant 0 : index
    %c0_5 = arith.constant 0 : index
    %7 = vector.load %arg4[%c0_4, %c0_5] : memref<384x512xf32, #tpu.memory_space<vmem>>, vector<384x512xf32>
    tpu.vector_store %arg4[%c0_4, %c0_5], %6 {strides = array<i32>} : memref<384x512xf32, #tpu.memory_space<vmem>>, vector<384x512xf32>,
    return
  }
  func.func @transform_0(%arg0: i32) -> i32 {
    %c0_i32 = arith.constant 0 : i32
    %c0_i32_0 = arith.constant 0 : i32
    return %c0_i32 : i32
  }
  func.func @transform_1(%arg0: i32) -> (i32, i32) {
    %c0_i32 = arith.constant 0 : i32
    %c0_i32_0 = arith.constant 0 : i32
    return %arg0, %c0_i32 : i32, i32
  }
  func.func @transform_2(%arg0: i32) -> (i32, i32) {
    %c0_i32 = arith.constant 0 : i32
    %c0_i32_0 = arith.constant 0 : i32
    return %arg0, %c0_i32 : i32, i32
  }
  func.func @transform_3(%arg0: i32) -> (i32, i32) {
    %c0_i32 = arith.constant 0 : i32
    %c0_i32_0 = arith.constant 0 : i32
    return %arg0, %c0_i32 : i32, i32
  }
}

module attributes {stable_mosaic.version = 11 : i64} {
  func.func @ema_kernel(%arg0: i32, %arg1: memref<1xf32, #tpu.memory_space<smem>>, %arg2: memref<512x512xf32, #tpu.memory_space<vmem>>, %arg3: memref<512x512xf32, #tpu.memory_space<vmem>>, %arg4: memref<512x512xf32, #tpu.memory_space<vmem>>) attributes {dimension_semantics = [#tpu.dimension_semantics<parallel>], iteration_bounds = array<i64: 3>, scalar_prefetch = 0 : i64, scratch_operands = 0 : i64, tpu.core_type = #tpu.core_type<tc>, window_params = [{transform_indices = @transform_0, window_bounds = array<i64: 1>}, {transform_indices = @transform_1, window_bounds = array<i64: 512, 512>}, {transform_indices = @transform_2, window_bounds = array<i64: 512, 512>}, {transform_indices = @transform_3, window_bounds = array<i64: 512, 512>}]} {
    %c0 = arith.constant 0 : index
    %0 = memref.load %arg1[%c0] : memref<1xf32, #tpu.memory_space<smem>>
    %c0_0 = arith.constant 0 : index
    %c0_1 = arith.constant 0 : index
    %1 = vector.load %arg2[%c0_0, %c0_1] : memref<512x512xf32, #tpu.memory_space<vmem>>, vector<512x512xf32>
    %c0_2 = arith.constant 0 : index
    %c0_3 = arith.constant 0 : index
    %2 = vector.load %arg3[%c0_2, %c0_3] : memref<512x512xf32, #tpu.memory_space<vmem>>, vector<512x512xf32>
    %3 = arith.subf %1, %2 : vector<512x512xf32>
    %4 = vector.broadcast %0 : f32 to vector<512x512xf32>
    %5 = arith.mulf %4, %3 : vector<512x512xf32>
    %6 = arith.subf %1, %5 : vector<512x512xf32>
    %c0_4 = arith.constant 0 : index
    %c0_5 = arith.constant 0 : index
    %7 = vector.load %arg4[%c0_4, %c0_5] : memref<512x512xf32, #tpu.memory_space<vmem>>, vector<512x512xf32>
    tpu.vector_store %arg4[%c0_4, %c0_5], %6 {strides = array<i32>} : memref<512x512xf32, #tpu.memory_space<vmem>>, vector<512x512xf32>,
    return
  }
  func.func @transform_0(%arg0: i32) -> i32 {
    %c0_i32 = arith.constant 0 : i32
    %c0_i32_0 = arith.constant 0 : i32
    return %c0_i32 : i32
  }
  func.func @transform_1(%arg0: i32) -> (i32, i32) {
    %c0_i32 = arith.constant 0 : i32
    %c0_i32_0 = arith.constant 0 : i32
    return %arg0, %c0_i32 : i32, i32
  }
  func.func @transform_2(%arg0: i32) -> (i32, i32) {
    %c0_i32 = arith.constant 0 : i32
    %c0_i32_0 = arith.constant 0 : i32
    return %arg0, %c0_i32 : i32, i32
  }
  func.func @transform_3(%arg0: i32) -> (i32, i32) {
    %c0_i32 = arith.constant 0 : i32
    %c0_i32_0 = arith.constant 0 : i32
    return %arg0, %c0_i32 : i32, i32
  }
}

</mosaic_0001>

<llo_original>
// kernel: ema_update.2
$region0: #{ema_update.2}
  #allocation0 [shape = 'u32[]', space=smem, size = 0x4, offset = 0x4, fixed_abs, tag = 'smem constant byte address 0x4 - core index']
  #allocation1 [shape = 'u32[72,128]{1,0:T(1,128)}', space=vmem, size = 0x9000, scoped, tag = 'internal scratch']
  #allocation2 [shape = 'f32[1]{0:T(128)S(6)}', space=smem, size = 0x200, scoped, tag = 'scoped memory for ema_update.2']
  %s0 = inlined_call_operand.<no memory space> [shape: f32[1], index: 0, kind: input, shape index: {}]
  %s1 = inlined_call_operand.hbm [shape: f32[384,512], index: 1, kind: input, shape index: {}, may-alias: {1,3}]
  %s2 = inlined_call_operand.hbm [shape: f32[384,512], index: 2, kind: input, shape index: {}]
  %s3 = inlined_call_operand.hbm [shape: f32[384,512], index: 3, kind: output, shape index: {}, may-alias: {1,3}]
  %s4 = sld [smem:[#allocation0]]
  $region30: #{ema_update.2} parent=0
    _
  %s6 = ssub.s32 1, %s4
  %s7 = scalar_select 0, %s6, %s4
  %8 = sst [smem:[#allocation2]] %s0
  $region1: #{ema_update.2} parent=0
    #allocation3 [shape = 'u8[786432]{0}', space=vmem, size = 0xc0000, scoped, tag = 'input window, operand 1, single buffered']
    #allocation4 [shape = 's32[1]{0}', space=sflag, size = 0x4, scoped, tag = 'scoped memory for ema_update.2']
    #allocation5 [shape = 's32[1]{0}', space=sflag, size = 0x4, scoped, tag = 'scoped memory for ema_update.2']
    #allocation6 [shape = 'u8[786432]{0}', space=vmem, size = 0xc0000, scoped, tag = 'input window, operand 2, single buffered']
    #allocation7 [shape = 's32[1]{0}', space=sflag, size = 0x4, scoped, tag = 'scoped memory for ema_update.2']
    #allocation8 [shape = 'u8[786432]{0}', space=vmem, size = 0xc0000, scoped, tag = 'output window, operand 0, single buffered']
    %9 = vsyncpa [#allocation4], 0
    %10 = vsyncpa [#allocation7], 0
    %11 = vsyncpa [#allocation5], 0
    // Predicated region
    $region2: #{ema_update.2} parent=1 // pred_check
      _
    $region3: #{ema_update.2} parent=1 // pred_check_branch
      %13 = sbr.rel (0) target = $region5
    $region4: #{ema_update.2} parent=1 // pred_region
      _
    $region5: #{ema_update.2} parent=1 // pred_fallthru
      _
    // Predicated region
    $region6: #{ema_update.2} parent=1 // pred_check
      _
    $region7: #{ema_update.2} parent=1 // pred_check_branch
      %15 = sbr.rel (0) target = $region9
    $region8: #{ema_update.2} parent=1 // pred_region
      %17 = vsyncadd [#allocation4], 0
      %s18 = sshll.u32 %s1, 4
      %s19 = int_to_ptr.hbm [resolvable:$true] %s18
      %s20 = sshll.u32 [#allocation3], 4
      %s21 = int_to_ptr.vmem [resolvable:$true] %s20
      %26 = dma.hbm_to_vmem [thread:$0]  %s19, 24576, %s21, [#allocation4], 512, 512, 32
    $region9: #{ema_update.2} parent=1 // pred_fallthru
      _
    // Predicated region
    $region10: #{ema_update.2} parent=1 // pred_check
      _
    $region11: #{ema_update.2} parent=1 // pred_check_branch
      %28 = sbr.rel (0) target = $region13
    $region12: #{ema_update.2} parent=1 // pred_region
      %30 = vsyncadd [#allocation7], 0
      %s31 = sshll.u32 %s2, 4
      %s32 = int_to_ptr.hbm [resolvable:$true] %s31
      %s33 = sshll.u32 [#allocation6], 4
      %s34 = int_to_ptr.vmem [resolvable:$true] %s33
      %39 = dma.hbm_to_vmem [thread:$0]  %s32, 24576, %s34, [#allocation7], 512, 512, 32
    $region13: #{ema_update.2} parent=1 // pred_fallthru
      _
    // Predicated region
    $region14: #{ema_update.2} parent=1 // pred_check
      _
    $region15: #{ema_update.2} parent=1 // pred_check_branch
      %41 = sbr.rel (0) target = $region17
    $region16: #{ema_update.2} parent=1 // pred_region
      %43 = dma.done [#allocation4], 24576
    $region17: #{ema_update.2} parent=1 // pred_fallthru
      _
    // Predicated region
    $region18: #{ema_update.2} parent=1 // pred_check
      _
    $region19: #{ema_update.2} parent=1 // pred_check_branch
      %45 = sbr.rel (0) target = $region21
    $region20: #{ema_update.2} parent=1 // pred_region
      %47 = dma.done [#allocation7], 24576
    $region21: #{ema_update.2} parent=1 // pred_fallthru
      _
    %s48 = sld [smem:[#allocation2]]
    %v49 = vld [vmem:[#allocation3] sm:$0xff]
    %v50 = vld [vmem:[#allocation3 + $0x8] sm:$0xff]
    %v51 = vld [vmem:[#allocation3 + $0x10] sm:$0xff]
    %v52 = vld [vmem:[#allocation3 + $0x18] sm:$0xff]
    %v53 = vld [vmem:[#allocation3 + $0x20] sm:$0xff]
    %v54 = vld [vmem:[#allocation3 + $0x28] sm:$0xff]
    %v55 = vld [vmem:[#allocation3 + $0x30] sm:$0xff]
    %v56 = vld [vmem:[#allocation3 + $0x38] sm:$0xff]
    %v57 = vld [vmem:[#allocation3 + $0x40] sm:$0xff]
    %v58 = vld [vmem:[#allocation3 + $0x48] sm:$0xff]
    %v59 = vld [vmem:[#allocation3 + $0x50] sm:$0xff]
    %v60 = vld [vmem:[#allocation3 + $0x58] sm:$0xff]
    %v61 = vld [vmem:[#allocation3 + $0x60] sm:$0xff]
    %v62 = vld [vmem:[#allocation3 + $0x68] sm:$0xff]
    %v63 = vld [vmem:[#allocation3 + $0x70] sm:$0xff]
    %v64 = vld [vmem:[#allocation3 + $0x78] sm:$0xff]
    %v65 = vld [vmem:[#allocation3 + $0x80] sm:$0xff]
    %v66 = vld [vmem:[#allocation3 + $0x88] sm:$0xff]
    %v67 = vld [vmem:[#allocation3 + $0x90] sm:$0xff]
    %v68 = vld [vmem:[#allocation3 + $0x98] sm:$0xff]
    %v69 = vld [vmem:[#allocation3 + $0xa0] sm:$0xff]
    %v70 = vld [vmem:[#allocation3 + $0xa8] sm:$0xff]
    %v71 = vld [vmem:[#allocation3 + $0xb0] sm:$0xff]
    %v72 = vld [vmem:[#allocation3 + $0xb8] sm:$0xff]
    %v73 = vld [vmem:[#allocation3 + $0xc0] sm:$0xff]
    %v74 = vld [vmem:[#allocation3 + $0xc8] sm:$0xff]
    %v75 = vld [vmem:[#allocation3 + $0xd0] sm:$0xff]
    %v76 = vld [vmem:[#allocation3 + $0xd8] sm:$0xff]
    %v77 = vld [vmem:[#allocation3 + $0xe0] sm:$0xff]
    %v78 = vld [vmem:[#allocation3 + $0xe8] sm:$0xff]
    %v79 = vld [vmem:[#allocation3 + $0xf0] sm:$0xff]
    %v80 = vld [vmem:[#allocation3 + $0xf8] sm:$0xff]
    %v81 = vld [vmem:[#allocation3 + $0x100] sm:$0xff]
    %v82 = vld [vmem:[#allocation3 + $0x108] sm:$0xff]
    %v83 = vld [vmem:[#allocation3 + $0x110] sm:$0xff]
    %v84 = vld [vmem:[#allocation3 + $0x118] sm:$0xff]
    %v85 = vld [vmem:[#allocation3 + $0x120] sm:$0xff]
    %v86 = vld [vmem:[#allocation3 + $0x128] sm:$0xff]
    %v87 = vld [vmem:[#allocation3 + $0x130] sm:$0xff]
    %v88 = vld [vmem:[#allocation3 + $0x138] sm:$0xff]
    %v89 = vld [vmem:[#allocation3 + $0x140] sm:$0xff]
    %v90 = vld [vmem:[#allocation3 + $0x148] sm:$0xff]
    %v91 = vld [vmem:[#allocation3 + $0x150] sm:$0xff]
    %v92 = vld [vmem:[#allocation3 + $0x158] sm:$0xff]
    %v93 = vld [vmem:[#allocation3 + $0x160] sm:$0xff]
    %v94 = vld [vmem:[#allocation3 + $0x168] sm:$0xff]
    %v95 = vld [vmem:[#allocation3 + $0x170] sm:$0xff]
    %v96 = vld [vmem:[#allocation3 + $0x178] sm:$0xff]
    %v97 = vld [vmem:[#allocation3 + $0x180] sm:$0xff]
    %v98 = vld [vmem:[#allocation3 + $0x188] sm:$0xff]
    %v99 = vld [vmem:[#allocation3 + $0x190] sm:$0xff]
    %v100 = vld [vmem:[#allocation3 + $0x198] sm:$0xff]
    %v101 = vld [vmem:[#allocation3 + $0x1a0] sm:$0xff]
    %v102 = vld [vmem:[#allocation3 + $0x1a8] sm:$0xff]
    %v103 = vld [vmem:[#allocation3 + $0x1b0] sm:$0xff]
    %v104 = vld [vmem:[#allocation3 + $0x1b8] sm:$0xff]
    %v105 = vld [vmem:[#allocation3 + $0x1c0] sm:$0xff]
    %v106 = vld [vmem:[#allocation3 + $0x1c8] sm:$0xff]
    %v107 = vld [vmem:[#allocation3 + $0x1d0] sm:$0xff]
    %v108 = vld [vmem:[#allocation3 + $0x1d8] sm:$0xff]
    %v109 = vld [vmem:[#allocation3 + $0x1e0] sm:$0xff]
    %v110 = vld [vmem:[#allocation3 + $0x1e8] sm:$0xff]
    %v111 = vld [vmem:[#allocation3 + $0x1f0] sm:$0xff]
    %v112 = vld [vmem:[#allocation3 + $0x1f8] sm:$0xff]
    %v113 = vld [vmem:[#allocation3 + $0x200] sm:$0xff]
    %v114 = vld [vmem:[#allocation3 + $0x208] sm:$0xff]
    %v115 = vld [vmem:[#allocation3 + $0x210] sm:$0xff]
    %v116 = vld [vmem:[#allocation3 + $0x218] sm:$0xff]
    %v117 = vld [vmem:[#allocation3 + $0x220] sm:$0xff]
    %v118 = vld [vmem:[#allocation3 + $0x228] sm:$0xff]
    %v119 = vld [vmem:[#allocation3 + $0x230] sm:$0xff]
    %v120 = vld [vmem:[#allocation3 + $0x238] sm:$0xff]
    %v121 = vld [vmem:[#allocation3 + $0x240] sm:$0xff]
    %v122 = vld [vmem:[#allocation3 + $0x248] sm:$0xff]
    %v123 = vld [vmem:[#allocation3 + $0x250] sm:$0xff]
    %v124 = vld [vmem:[#allocation3 + $0x258] sm:$0xff]
    %v125 = vld [vmem:[#allocation3 + $0x260] sm:$0xff]
    %v126 = vld [vmem:[#allocation3 + $0x268] sm:$0xff]
    %v127 = vld [vmem:[#allocation3 + $0x270] sm:$0xff]
    %v128 = vld [vmem:[#allocation3 + $0x278] sm:$0xff]
    %v129 = vld [vmem:[#allocation3 + $0x280] sm:$0xff]
    %v130 = vld [vmem:[#allocation3 + $0x288] sm:$0xff]
    %v131 = vld [vmem:[#allocation3 + $0x290] sm:$0xff]
    %v132 = vld [vmem:[#allocation3 + $0x298] sm:$0xff]
    %v133 = vld [vmem:[#allocation3 + $0x2a0] sm:$0xff]
    %v134 = vld [vmem:[#allocation3 + $0x2a8] sm:$0xff]
    %v135 = vld [vmem:[#allocation3 + $0x2b0] sm:$0xff]
    %v136 = vld [vmem:[#allocation3 + $0x2b8] sm:$0xff]
    %v137 = vld [vmem:[#allocation3 + $0x2c0] sm:$0xff]
    %v138 = vld [vmem:[#allocation3 + $0x2c8] sm:$0xff]
    %v139 = vld [vmem:[#allocation3 + $0x2d0] sm:$0xff]
    %v140 = vld [vmem:[#allocation3 + $0x2d8] sm:$0xff]
    %v141 = vld [vmem:[#allocation3 + $0x2e0] sm:$0xff]
    %v142 = vld [vmem:[#allocation3 + $0x2e8] sm:$0xff]
    %v143 = vld [vmem:[#allocation3 + $0x2f0] sm:$0xff]
    %v144 = vld [vmem:[#allocation3 + $0x2f8] sm:$0xff]
    %v145 = vld [vmem:[#allocation3 + $0x300] sm:$0xff]
    %v146 = vld [vmem:[#allocation3 + $0x308] sm:$0xff]
    %v147 = vld [vmem:[#allocation3 + $0x310] sm:$0xff]
    %v148 = vld [vmem:[#allocation3 + $0x318] sm:$0xff]
    %v149 = vld [vmem:[#allocation3 + $0x320] sm:$0xff]
    %v150 = vld [vmem:[#allocation3 + $0x328] sm:$0xff]
    %v151 = vld [vmem:[#allocation3 + $0x330] sm:$0xff]
    %v152 = vld [vmem:[#allocation3 + $0x338] sm:$0xff]
    %v153 = vld [vmem:[#allocation3 + $0x340] sm:$0xff]
    %v154 = vld [vmem:[#allocation3 + $0x348] sm:$0xff]
    %v155 = vld [vmem:[#allocation3 + $0x350] sm:$0xff]
    %v156 = vld [vmem:[#allocation3 + $0x358] sm:$0xff]
    %v157 = vld [vmem:[#allocation3 + $0x360] sm:$0xff]
    %v158 = vld [vmem:[#allocation3 + $0x368] sm:$0xff]
    %v159 = vld [vmem:[#allocation3 + $0x370] sm:$0xff]
    %v160 = vld [vmem:[#allocation3 + $0x378] sm:$0xff]
    %v161 = vld [vmem:[#allocation3 + $0x380] sm:$0xff]
    %v162 = vld [vmem:[#allocation3 + $0x388] sm:$0xff]
    %v163 = vld [vmem:[#allocation3 + $0x390] sm:$0xff]
    %v164 = vld [vmem:[#allocation3 + $0x398] sm:$0xff]
    %v165 = vld [vmem:[#allocation3 + $0x3a0] sm:$0xff]
    %v166 = vld [vmem:[#allocation3 + $0x3a8] sm:$0xff]
    %v167 = vld [vmem:[#allocation3 + $0x3b0] sm:$0xff]
    %v168 = vld [vmem:[#allocation3 + $0x3b8] sm:$0xff]
    %v169 = vld [vmem:[#allocation3 + $0x3c0] sm:$0xff]
    %v170 = vld [vmem:[#allocation3 + $0x3c8] sm:$0xff]
    %v171 = vld [vmem:[#allocation3 + $0x3d0] sm:$0xff]
    %v172 = vld [vmem:[#allocation3 + $0x3d8] sm:$0xff]
    %v173 = vld [vmem:[#allocation3 + $0x3e0] sm:$0xff]
    %v174 = vld [vmem:[#allocation3 + $0x3e8] sm:$0xff]
    %v175 = vld [vmem:[#allocation3 + $0x3f0] sm:$0xff]
    %v176 = vld [vmem:[#allocation3 + $0x3f8] sm:$0xff]
    %v177 = vld [vmem:[#allocation3 + $0x400] sm:$0xff]
    %v178 = vld [vmem:[#allocation3 + $0x408] sm:$0xff]
    %v179 = vld [vmem:[#allocation3 + $0x410] sm:$0xff]
    %v180 = vld [vmem:[#allocation3 + $0x418] sm:$0xff]
    %v181 = vld [vmem:[#allocation3 + $0x420] sm:$0xff]
    %v182 = vld [vmem:[#allocation3 + $0x428] sm:$0xff]
    %v183 = vld [vmem:[#allocation3 + $0x430] sm:$0xff]
    %v184 = vld [vmem:[#allocation3 + $0x438] sm:$0xff]
    %v185 = vld [vmem:[#allocation3 + $0x440] sm:$0xff]
    %v186 = vld [vmem:[#allocation3 + $0x448] sm:$0xff]
    %v187 = vld [vmem:[#allocation3 + $0x450] sm:$0xff]
    %v188 = vld [vmem:[#allocation3 + $0x458] sm:$0xff]
    %v189 = vld [vmem:[#allocation3 + $0x460] sm:$0xff]
    %v190 = vld [vmem:[#allocation3 + $0x468] sm:$0xff]
    %v191 = vld [vmem:[#allocation3 + $0x470] sm:$0xff]
    %v192 = vld [vmem:[#allocation3 + $0x478] sm:$0xff]
    %v193 = vld [vmem:[#allocation3 + $0x480] sm:$0xff]
    %v194 = vld [vmem:[#allocation3 + $0x488] sm:$0xff]
    %v195 = vld [vmem:[#allocation3 + $0x490] sm:$0xff]
    %v196 = vld [vmem:[#allocation3 + $0x498] sm:$0xff]
    %v197 = vld [vmem:[#allocation3 + $0x4a0] sm:$0xff]
    %v198 = vld [vmem:[#allocation3 + $0x4a8] sm:$0xff]
    %v199 = vld [vmem:[#allocation3 + $0x4b0] sm:$0xff]
    %v200 = vld [vmem:[#allocation3 + $0x4b8] sm:$0xff]
    %v201 = vld [vmem:[#allocation3 + $0x4c0] sm:$0xff]
    %v202 = vld [vmem:[#allocation3 + $0x4c8] sm:$0xff]
    %v203 = vld [vmem:[#allocation3 + $0x4d0] sm:$0xff]
    %v204 = vld [vmem:[#allocation3 + $0x4d8] sm:$0xff]
    %v205 = vld [vmem:[#allocation3 + $0x4e0] sm:$0xff]
    %v206 = vld [vmem:[#allocation3 + $0x4e8] sm:$0xff]
    %v207 = vld [vmem:[#allocation3 + $0x4f0] sm:$0xff]
    %v208 = vld [vmem:[#allocation3 + $0x4f8] sm:$0xff]
    %v209 = vld [vmem:[#allocation3 + $0x500] sm:$0xff]
    %v210 = vld [vmem:[#allocation3 + $0x508] sm:$0xff]
    %v211 = vld [vmem:[#allocation3 + $0x510] sm:$0xff]
    %v212 = vld [vmem:[#allocation3 + $0x518] sm:$0xff]
    %v213 = vld [vmem:[#allocation3 + $0x520] sm:$0xff]
    %v214 = vld [vmem:[#allocation3 + $0x528] sm:$0xff]
    %v215 = vld [vmem:[#allocation3 + $0x530] sm:$0xff]
    %v216 = vld [vmem:[#allocation3 + $0x538] sm:$0xff]
    %v217 = vld [vmem:[#allocation3 + $0x540] sm:$0xff]
    %v218 = vld [vmem:[#allocation3 + $0x548] sm:$0xff]
    %v219 = vld [vmem:[#allocation3 + $0x550] sm:$0xff]
    %v220 = vld [vmem:[#allocation3 + $0x558] sm:$0xff]
    %v221 = vld [vmem:[#allocation3 + $0x560] sm:$0xff]
    %v222 = vld [vmem:[#allocation3 + $0x568] sm:$0xff]
    %v223 = vld [vmem:[#allocation3 + $0x570] sm:$0xff]
    %v224 = vld [vmem:[#allocation3 + $0x578] sm:$0xff]
    %v225 = vld [vmem:[#allocation3 + $0x580] sm:$0xff]
    %v226 = vld [vmem:[#allocation3 + $0x588] sm:$0xff]
    %v227 = vld [vmem:[#allocation3 + $0x590] sm:$0xff]
    %v228 = vld [vmem:[#allocation3 + $0x598] sm:$0xff]
    %v229 = vld [vmem:[#allocation3 + $0x5a0] sm:$0xff]
    %v230 = vld [vmem:[#allocation3 + $0x5a8] sm:$0xff]
    %v231 = vld [vmem:[#allocation3 + $0x5b0] sm:$0xff]
    %v232 = vld [vmem:[#allocation3 + $0x5b8] sm:$0xff]
    %v233 = vld [vmem:[#allocation3 + $0x5c0] sm:$0xff]
    %v234 = vld [vmem:[#allocation3 + $0x5c8] sm:$0xff]
    %v235 = vld [vmem:[#allocation3 + $0x5d0] sm:$0xff]
    %v236 = vld [vmem:[#allocation3 + $0x5d8] sm:$0xff]
    %v237 = vld [vmem:[#allocation3 + $0x5e0] sm:$0xff]
    %v238 = vld [vmem:[#allocation3 + $0x5e8] sm:$0xff]
    %v239 = vld [vmem:[#allocation3 + $0x5f0] sm:$0xff]
    %v240 = vld [vmem:[#allocation3 + $0x5f8] sm:$0xff]
    %v241 = vld [vmem:[#allocation6] sm:$0xff]
    %v242 = vld [vmem:[#allocation6 + $0x8] sm:$0xff]
    %v243 = vld [vmem:[#allocation6 + $0x10] sm:$0xff]
    %v244 = vld [vmem:[#allocation6 + $0x18] sm:$0xff]
    %v245 = vld [vmem:[#allocation6 + $0x20] sm:$0xff]
    %v246 = vld [vmem:[#allocation6 + $0x28] sm:$0xff]
    %v247 = vld [vmem:[#allocation6 + $0x30] sm:$0xff]
    %v248 = vld [vmem:[#allocation6 + $0x38] sm:$0xff]
    %v249 = vld [vmem:[#allocation6 + $0x40] sm:$0xff]
    %v250 = vld [vmem:[#allocation6 + $0x48] sm:$0xff]
    %v251 = vld [vmem:[#allocation6 + $0x50] sm:$0xff]
    %v252 = vld [vmem:[#allocation6 + $0x58] sm:$0xff]
    %v253 = vld [vmem:[#allocation6 + $0x60] sm:$0xff]
    %v254 = vld [vmem:[#allocation6 + $0x68] sm:$0xff]
    %v255 = vld [vmem:[#allocation6 + $0x70] sm:$0xff]
    %v256 = vld [vmem:[#allocation6 + $0x78] sm:$0xff]
    %v257 = vld [vmem:[#allocation6 + $0x80] sm:$0xff]
    %v258 = vld [vmem:[#allocation6 + $0x88] sm:$0xff]
    %v259 = vld [vmem:[#allocation6 + $0x90] sm:$0xff]
    %v260 = vld [vmem:[#allocation6 + $0x98] sm:$0xff]
    %v261 = vld [vmem:[#allocation6 + $0xa0] sm:$0xff]
    %v262 = vld [vmem:[#allocation6 + $0xa8] sm:$0xff]
    %v263 = vld [vmem:[#allocation6 + $0xb0] sm:$0xff]
    %v264 = vld [vmem:[#allocation6 + $0xb8] sm:$0xff]
    %v265 = vld [vmem:[#allocation6 + $0xc0] sm:$0xff]
    %v266 = vld [vmem:[#allocation6 + $0xc8] sm:$0xff]
    %v267 = vld [vmem:[#allocation6 + $0xd0] sm:$0xff]
    %v268 = vld [vmem:[#allocation6 + $0xd8] sm:$0xff]
    %v269 = vld [vmem:[#allocation6 + $0xe0] sm:$0xff]
    %v270 = vld [vmem:[#allocation6 + $0xe8] sm:$0xff]
    %v271 = vld [vmem:[#allocation6 + $0xf0] sm:$0xff]
    %v272 = vld [vmem:[#allocation6 + $0xf8] sm:$0xff]
    %v273 = vld [vmem:[#allocation6 + $0x100] sm:$0xff]
    %v274 = vld [vmem:[#allocation6 + $0x108] sm:$0xff]
    %v275 = vld [vmem:[#allocation6 + $0x110] sm:$0xff]
    %v276 = vld [vmem:[#allocation6 + $0x118] sm:$0xff]
    %v277 = vld [vmem:[#allocation6 + $0x120] sm:$0xff]
    %v278 = vld [vmem:[#allocation6 + $0x128] sm:$0xff]
    %v279 = vld [vmem:[#allocation6 + $0x130] sm:$0xff]
    %v280 = vld [vmem:[#allocation6 + $0x138] sm:$0xff]
    %v281 = vld [vmem:[#allocation6 + $0x140] sm:$0xff]
    %v282 = vld [vmem:[#allocation6 + $0x148] sm:$0xff]
    %v283 = vld [vmem:[#allocation6 + $0x150] sm:$0xff]
    %v284 = vld [vmem:[#allocation6 + $0x158] sm:$0xff]
    %v285 = vld [vmem:[#allocation6 + $0x160] sm:$0xff]
    %v286 = vld [vmem:[#allocation6 + $0x168] sm:$0xff]
    %v287 = vld [vmem:[#allocation6 + $0x170] sm:$0xff]
    %v288 = vld [vmem:[#allocation6 + $0x178] sm:$0xff]
    %v289 = vld [vmem:[#allocation6 + $0x180] sm:$0xff]
    %v290 = vld [vmem:[#allocation6 + $0x188] sm:$0xff]
    %v291 = vld [vmem:[#allocation6 + $0x190] sm:$0xff]
    %v292 = vld [vmem:[#allocation6 + $0x198] sm:$0xff]
    %v293 = vld [vmem:[#allocation6 + $0x1a0] sm:$0xff]
    %v294 = vld [vmem:[#allocation6 + $0x1a8] sm:$0xff]
    %v295 = vld [vmem:[#allocation6 + $0x1b0] sm:$0xff]
    %v296 = vld [vmem:[#allocation6 + $0x1b8] sm:$0xff]
    %v297 = vld [vmem:[#allocation6 + $0x1c0] sm:$0xff]
    %v298 = vld [vmem:[#allocation6 + $0x1c8] sm:$0xff]
    %v299 = vld [vmem:[#allocation6 + $0x1d0] sm:$0xff]
    %v300 = vld [vmem:[#allocation6 + $0x1d8] sm:$0xff]
    %v301 = vld [vmem:[#allocation6 + $0x1e0] sm:$0xff]
    %v302 = vld [vmem:[#allocation6 + $0x1e8] sm:$0xff]
    %v303 = vld [vmem:[#allocation6 + $0x1f0] sm:$0xff]
    %v304 = vld [vmem:[#allocation6 + $0x1f8] sm:$0xff]
    %v305 = vld [vmem:[#allocation6 + $0x200] sm:$0xff]
    %v306 = vld [vmem:[#allocation6 + $0x208] sm:$0xff]
    %v307 = vld [vmem:[#allocation6 + $0x210] sm:$0xff]
    %v308 = vld [vmem:[#allocation6 + $0x218] sm:$0xff]
    %v309 = vld [vmem:[#allocation6 + $0x220] sm:$0xff]
    %v310 = vld [vmem:[#allocation6 + $0x228] sm:$0xff]
    %v311 = vld [vmem:[#allocation6 + $0x230] sm:$0xff]
    %v312 = vld [vmem:[#allocation6 + $0x238] sm:$0xff]
    %v313 = vld [vmem:[#allocation6 + $0x240] sm:$0xff]
    %v314 = vld [vmem:[#allocation6 + $0x248] sm:$0xff]
    %v315 = vld [vmem:[#allocation6 + $0x250] sm:$0xff]
    %v316 = vld [vmem:[#allocation6 + $0x258] sm:$0xff]
    %v317 = vld [vmem:[#allocation6 + $0x260] sm:$0xff]
    %v318 = vld [vmem:[#allocation6 + $0x268] sm:$0xff]
    %v319 = vld [vmem:[#allocation6 + $0x270] sm:$0xff]
    %v320 = vld [vmem:[#allocation6 + $0x278] sm:$0xff]
    %v321 = vld [vmem:[#allocation6 + $0x280] sm:$0xff]
    %v322 = vld [vmem:[#allocation6 + $0x288] sm:$0xff]
    %v323 = vld [vmem:[#allocation6 + $0x290] sm:$0xff]
    %v324 = vld [vmem:[#allocation6 + $0x298] sm:$0xff]
    %v325 = vld [vmem:[#allocation6 + $0x2a0] sm:$0xff]
    %v326 = vld [vmem:[#allocation6 + $0x2a8] sm:$0xff]
    %v327 = vld [vmem:[#allocation6 + $0x2b0] sm:$0xff]
    %v328 = vld [vmem:[#allocation6 + $0x2b8] sm:$0xff]
    %v329 = vld [vmem:[#allocation6 + $0x2c0] sm:$0xff]
    %v330 = vld [vmem:[#allocation6 + $0x2c8] sm:$0xff]
    %v331 = vld [vmem:[#allocation6 + $0x2d0] sm:$0xff]
    %v332 = vld [vmem:[#allocation6 + $0x2d8] sm:$0xff]
    %v333 = vld [vmem:[#allocation6 + $0x2e0] sm:$0xff]
    %v334 = vld [vmem:[#allocation6 + $0x2e8] sm:$0xff]
    %v335 = vld [vmem:[#allocation6 + $0x2f0] sm:$0xff]
    %v336 = vld [vmem:[#allocation6 + $0x2f8] sm:$0xff]
    %v337 = vld [vmem:[#allocation6 + $0x300] sm:$0xff]
    %v338 = vld [vmem:[#allocation6 + $0x308] sm:$0xff]
    %v339 = vld [vmem:[#allocation6 + $0x310] sm:$0xff]
    %v340 = vld [vmem:[#allocation6 + $0x318] sm:$0xff]
    %v341 = vld [vmem:[#allocation6 + $0x320] sm:$0xff]
    %v342 = vld [vmem:[#allocation6 + $0x328] sm:$0xff]
    %v343 = vld [vmem:[#allocation6 + $0x330] sm:$0xff]
    %v344 = vld [vmem:[#allocation6 + $0x338] sm:$0xff]
    %v345 = vld [vmem:[#allocation6 + $0x340] sm:$0xff]
    %v346 = vld [vmem:[#allocation6 + $0x348] sm:$0xff]
    %v347 = vld [vmem:[#allocation6 + $0x350] sm:$0xff]
    %v348 = vld [vmem:[#allocation6 + $0x358] sm:$0xff]
    %v349 = vld [vmem:[#allocation6 + $0x360] sm:$0xff]
    %v350 = vld [vmem:[#allocation6 + $0x368] sm:$0xff]
    %v351 = vld [vmem:[#allocation6 + $0x370] sm:$0xff]
    %v352 = vld [vmem:[#allocation6 + $0x378] sm:$0xff]
    %v353 = vld [vmem:[#allocation6 + $0x380] sm:$0xff]
    %v354 = vld [vmem:[#allocation6 + $0x388] sm:$0xff]
    %v355 = vld [vmem:[#allocation6 + $0x390] sm:$0xff]
    %v356 = vld [vmem:[#allocation6 + $0x398] sm:$0xff]
    %v357 = vld [vmem:[#allocation6 + $0x3a0] sm:$0xff]
    %v358 = vld [vmem:[#allocation6 + $0x3a8] sm:$0xff]
    %v359 = vld [vmem:[#allocation6 + $0x3b0] sm:$0xff]
    %v360 = vld [vmem:[#allocation6 + $0x3b8] sm:$0xff]
    %v361 = vld [vmem:[#allocation6 + $0x3c0] sm:$0xff]
    %v362 = vld [vmem:[#allocation6 + $0x3c8] sm:$0xff]
    %v363 = vld [vmem:[#allocation6 + $0x3d0] sm:$0xff]
    %v364 = vld [vmem:[#allocation6 + $0x3d8] sm:$0xff]
    %v365 = vld [vmem:[#allocation6 + $0x3e0] sm:$0xff]
    %v366 = vld [vmem:[#allocation6 + $0x3e8] sm:$0xff]
    %v367 = vld [vmem:[#allocation6 + $0x3f0] sm:$0xff]
    %v368 = vld [vmem:[#allocation6 + $0x3f8] sm:$0xff]
    %v369 = vld [vmem:[#allocation6 + $0x400] sm:$0xff]
    %v370 = vld [vmem:[#allocation6 + $0x408] sm:$0xff]
    %v371 = vld [vmem:[#allocation6 + $0x410] sm:$0xff]
    %v372 = vld [vmem:[#allocation6 + $0x418] sm:$0xff]
    %v373 = vld [vmem:[#allocation6 + $0x420] sm:$0xff]
    %v374 = vld [vmem:[#allocation6 + $0x428] sm:$0xff]
    %v375 = vld [vmem:[#allocation6 + $0x430] sm:$0xff]
    %v376 = vld [vmem:[#allocation6 + $0x438] sm:$0xff]
    %v377 = vld [vmem:[#allocation6 + $0x440] sm:$0xff]
    %v378 = vld [vmem:[#allocation6 + $0x448] sm:$0xff]
    %v379 = vld [vmem:[#allocation6 + $0x450] sm:$0xff]
    %v380 = vld [vmem:[#allocation6 + $0x458] sm:$0xff]
    %v381 = vld [vmem:[#allocation6 + $0x460] sm:$0xff]
    %v382 = vld [vmem:[#allocation6 + $0x468] sm:$0xff]
    %v383 = vld [vmem:[#allocation6 + $0x470] sm:$0xff]
    %v384 = vld [vmem:[#allocation6 + $0x478] sm:$0xff]
    %v385 = vld [vmem:[#allocation6 + $0x480] sm:$0xff]
    %v386 = vld [vmem:[#allocation6 + $0x488] sm:$0xff]
    %v387 = vld [vmem:[#allocation6 + $0x490] sm:$0xff]
    %v388 = vld [vmem:[#allocation6 + $0x498] sm:$0xff]
    %v389 = vld [vmem:[#allocation6 + $0x4a0] sm:$0xff]
    %v390 = vld [vmem:[#allocation6 + $0x4a8] sm:$0xff]
    %v391 = vld [vmem:[#allocation6 + $0x4b0] sm:$0xff]
    %v392 = vld [vmem:[#allocation6 + $0x4b8] sm:$0xff]
    %v393 = vld [vmem:[#allocation6 + $0x4c0] sm:$0xff]
    %v394 = vld [vmem:[#allocation6 + $0x4c8] sm:$0xff]
    %v395 = vld [vmem:[#allocation6 + $0x4d0] sm:$0xff]
    %v396 = vld [vmem:[#allocation6 + $0x4d8] sm:$0xff]
    %v397 = vld [vmem:[#allocation6 + $0x4e0] sm:$0xff]
    %v398 = vld [vmem:[#allocation6 + $0x4e8] sm:$0xff]
    %v399 = vld [vmem:[#allocation6 + $0x4f0] sm:$0xff]
    %v400 = vld [vmem:[#allocation6 + $0x4f8] sm:$0xff]
    %v401 = vld [vmem:[#allocation6 + $0x500] sm:$0xff]
    %v402 = vld [vmem:[#allocation6 + $0x508] sm:$0xff]
    %v403 = vld [vmem:[#allocation6 + $0x510] sm:$0xff]
    %v404 = vld [vmem:[#allocation6 + $0x518] sm:$0xff]
    %v405 = vld [vmem:[#allocation6 + $0x520] sm:$0xff]
    %v406 = vld [vmem:[#allocation6 + $0x528] sm:$0xff]
    %v407 = vld [vmem:[#allocation6 + $0x530] sm:$0xff]
    %v408 = vld [vmem:[#allocation6 + $0x538] sm:$0xff]
    %v409 = vld [vmem:[#allocation6 + $0x540] sm:$0xff]
    %v410 = vld [vmem:[#allocation6 + $0x548] sm:$0xff]
    %v411 = vld [vmem:[#allocation6 + $0x550] sm:$0xff]
    %v412 = vld [vmem:[#allocation6 + $0x558] sm:$0xff]
    %v413 = vld [vmem:[#allocation6 + $0x560] sm:$0xff]
    %v414 = vld [vmem:[#allocation6 + $0x568] sm:$0xff]
    %v415 = vld [vmem:[#allocation6 + $0x570] sm:$0xff]
    %v416 = vld [vmem:[#allocation6 + $0x578] sm:$0xff]
    %v417 = vld [vmem:[#allocation6 + $0x580] sm:$0xff]
    %v418 = vld [vmem:[#allocation6 + $0x588] sm:$0xff]
    %v419 = vld [vmem:[#allocation6 + $0x590] sm:$0xff]
    %v420 = vld [vmem:[#allocation6 + $0x598] sm:$0xff]
    %v421 = vld [vmem:[#allocation6 + $0x5a0] sm:$0xff]
    %v422 = vld [vmem:[#allocation6 + $0x5a8] sm:$0xff]
    %v423 = vld [vmem:[#allocation6 + $0x5b0] sm:$0xff]
    %v424 = vld [vmem:[#allocation6 + $0x5b8] sm:$0xff]
    %v425 = vld [vmem:[#allocation6 + $0x5c0] sm:$0xff]
    %v426 = vld [vmem:[#allocation6 + $0x5c8] sm:$0xff]
    %v427 = vld [vmem:[#allocation6 + $0x5d0] sm:$0xff]
    %v428 = vld [vmem:[#allocation6 + $0x5d8] sm:$0xff]
    %v429 = vld [vmem:[#allocation6 + $0x5e0] sm:$0xff]
    %v430 = vld [vmem:[#allocation6 + $0x5e8] sm:$0xff]
    %v431 = vld [vmem:[#allocation6 + $0x5f0] sm:$0xff]
    %v432 = vld [vmem:[#allocation6 + $0x5f8] sm:$0xff]
    %v433 = vsub.f32 %v49, %v241
    %v434 = vsub.f32 %v50, %v242
    %v435 = vsub.f32 %v51, %v243
    %v436 = vsub.f32 %v52, %v244
    %v437 = vsub.f32 %v53, %v245
    %v438 = vsub.f32 %v54, %v246
    %v439 = vsub.f32 %v55, %v247
    %v440 = vsub.f32 %v56, %v248
    %v441 = vsub.f32 %v57, %v249
    %v442 = vsub.f32 %v58, %v250
    %v443 = vsub.f32 %v59, %v251
    %v444 = vsub.f32 %v60, %v252
    %v445 = vsub.f32 %v61, %v253
    %v446 = vsub.f32 %v62, %v254
    %v447 = vsub.f32 %v63, %v255
    %v448 = vsub.f32 %v64, %v256
    %v449 = vsub.f32 %v65, %v257
    %v450 = vsub.f32 %v66, %v258
    %v451 = vsub.f32 %v67, %v259
    %v452 = vsub.f32 %v68, %v260
    %v453 = vsub.f32 %v69, %v261
    %v454 = vsub.f32 %v70, %v262
    %v455 = vsub.f32 %v71, %v263
    %v456 = vsub.f32 %v72, %v264
    %v457 = vsub.f32 %v73, %v265
    %v458 = vsub.f32 %v74, %v266
    %v459 = vsub.f32 %v75, %v267
    %v460 = vsub.f32 %v76, %v268
    %v461 = vsub.f32 %v77, %v269
    %v462 = vsub.f32 %v78, %v270
    %v463 = vsub.f32 %v79, %v271
    %v464 = vsub.f32 %v80, %v272
    %v465 = vsub.f32 %v81, %v273
    %v466 = vsub.f32 %v82, %v274
    %v467 = vsub.f32 %v83, %v275
    %v468 = vsub.f32 %v84, %v276
    %v469 = vsub.f32 %v85, %v277
    %v470 = vsub.f32 %v86, %v278
    %v471 = vsub.f32 %v87, %v279
    %v472 = vsub.f32 %v88, %v280
    %v473 = vsub.f32 %v89, %v281
    %v474 = vsub.f32 %v90, %v282
    %v475 = vsub.f32 %v91, %v283
    %v476 = vsub.f32 %v92, %v284
    %v477 = vsub.f32 %v93, %v285
    %v478 = vsub.f32 %v94, %v286
    %v479 = vsub.f32 %v95, %v287
    %v480 = vsub.f32 %v96, %v288
    %v481 = vsub.f32 %v97, %v289
    %v482 = vsub.f32 %v98, %v290
    %v483 = vsub.f32 %v99, %v291
    %v484 = vsub.f32 %v100, %v292
    %v485 = vsub.f32 %v101, %v293
    %v486 = vsub.f32 %v102, %v294
    %v487 = vsub.f32 %v103, %v295
    %v488 = vsub.f32 %v104, %v296
    %v489 = vsub.f32 %v105, %v297
    %v490 = vsub.f32 %v106, %v298
    %v491 = vsub.f32 %v107, %v299
    %v492 = vsub.f32 %v108, %v300
    %v493 = vsub.f32 %v109, %v301
    %v494 = vsub.f32 %v110, %v302
    %v495 = vsub.f32 %v111, %v303
    %v496 = vsub.f32 %v112, %v304
    %v497 = vsub.f32 %v113, %v305
    %v498 = vsub.f32 %v114, %v306
    %v499 = vsub.f32 %v115, %v307
    %v500 = vsub.f32 %v116, %v308
    %v501 = vsub.f32 %v117, %v309
    %v502 = vsub.f32 %v118, %v310
    %v503 = vsub.f32 %v119, %v311
    %v504 = vsub.f32 %v120, %v312
    %v505 = vsub.f32 %v121, %v313
    %v506 = vsub.f32 %v122, %v314
    %v507 = vsub.f32 %v123, %v315
    %v508 = vsub.f32 %v124, %v316
    %v509 = vsub.f32 %v125, %v317
    %v510 = vsub.f32 %v126, %v318
    %v511 = vsub.f32 %v127, %v319
    %v512 = vsub.f32 %v128, %v320
    %v513 = vsub.f32 %v129, %v321
    %v514 = vsub.f32 %v130, %v322
    %v515 = vsub.f32 %v131, %v323
    %v516 = vsub.f32 %v132, %v324
    %v517 = vsub.f32 %v133, %v325
    %v518 = vsub.f32 %v134, %v326
    %v519 = vsub.f32 %v135, %v327
    %v520 = vsub.f32 %v136, %v328
    %v521 = vsub.f32 %v137, %v329
    %v522 = vsub.f32 %v138, %v330
    %v523 = vsub.f32 %v139, %v331
    %v524 = vsub.f32 %v140, %v332
    %v525 = vsub.f32 %v141, %v333
    %v526 = vsub.f32 %v142, %v334
    %v527 = vsub.f32 %v143, %v335
    %v528 = vsub.f32 %v144, %v336
    %v529 = vsub.f32 %v145, %v337
    %v530 = vsub.f32 %v146, %v338
    %v531 = vsub.f32 %v147, %v339
    %v532 = vsub.f32 %v148, %v340
    %v533 = vsub.f32 %v149, %v341
    %v534 = vsub.f32 %v150, %v342
    %v535 = vsub.f32 %v151, %v343
    %v536 = vsub.f32 %v152, %v344
    %v537 = vsub.f32 %v153, %v345
    %v538 = vsub.f32 %v154, %v346
    %v539 = vsub.f32 %v155, %v347
    %v540 = vsub.f32 %v156, %v348
    %v541 = vsub.f32 %v157, %v349
    %v542 = vsub.f32 %v158, %v350
    %v543 = vsub.f32 %v159, %v351
    %v544 = vsub.f32 %v160, %v352
    %v545 = vsub.f32 %v161, %v353
    %v546 = vsub.f32 %v162, %v354
    %v547 = vsub.f32 %v163, %v355
    %v548 = vsub.f32 %v164, %v356
    %v549 = vsub.f32 %v165, %v357
    %v550 = vsub.f32 %v166, %v358
    %v551 = vsub.f32 %v167, %v359
    %v552 = vsub.f32 %v168, %v360
    %v553 = vsub.f32 %v169, %v361
    %v554 = vsub.f32 %v170, %v362
    %v555 = vsub.f32 %v171, %v363
    %v556 = vsub.f32 %v172, %v364
    %v557 = vsub.f32 %v173, %v365
    %v558 = vsub.f32 %v174, %v366
    %v559 = vsub.f32 %v175, %v367
    %v560 = vsub.f32 %v176, %v368
    %v561 = vsub.f32 %v177, %v369
    %v562 = vsub.f32 %v178, %v370
    %v563 = vsub.f32 %v179, %v371
    %v564 = vsub.f32 %v180, %v372
    %v565 = vsub.f32 %v181, %v373
    %v566 = vsub.f32 %v182, %v374
    %v567 = vsub.f32 %v183, %v375
    %v568 = vsub.f32 %v184, %v376
    %v569 = vsub.f32 %v185, %v377
    %v570 = vsub.f32 %v186, %v378
    %v571 = vsub.f32 %v187, %v379
    %v572 = vsub.f32 %v188, %v380
    %v573 = vsub.f32 %v189, %v381
    %v574 = vsub.f32 %v190, %v382
    %v575 = vsub.f32 %v191, %v383
    %v576 = vsub.f32 %v192, %v384
    %v577 = vsub.f32 %v193, %v385
    %v578 = vsub.f32 %v194, %v386
    %v579 = vsub.f32 %v195, %v387
    %v580 = vsub.f32 %v196, %v388
    %v581 = vsub.f32 %v197, %v389
    %v582 = vsub.f32 %v198, %v390
    %v583 = vsub.f32 %v199, %v391
    %v584 = vsub.f32 %v200, %v392
    %v585 = vsub.f32 %v201, %v393
    %v586 = vsub.f32 %v202, %v394
    %v587 = vsub.f32 %v203, %v395
    %v588 = vsub.f32 %v204, %v396
    %v589 = vsub.f32 %v205, %v397
    %v590 = vsub.f32 %v206, %v398
    %v591 = vsub.f32 %v207, %v399
    %v592 = vsub.f32 %v208, %v400
    %v593 = vsub.f32 %v209, %v401
    %v594 = vsub.f32 %v210, %v402
    %v595 = vsub.f32 %v211, %v403
    %v596 = vsub.f32 %v212, %v404
    %v597 = vsub.f32 %v213, %v405
    %v598 = vsub.f32 %v214, %v406
    %v599 = vsub.f32 %v215, %v407
    %v600 = vsub.f32 %v216, %v408
    %v601 = vsub.f32 %v217, %v409
    %v602 = vsub.f32 %v218, %v410
    %v603 = vsub.f32 %v219, %v411
    %v604 = vsub.f32 %v220, %v412
    %v605 = vsub.f32 %v221, %v413
    %v606 = vsub.f32 %v222, %v414
    %v607 = vsub.f32 %v223, %v415
    %v608 = vsub.f32 %v224, %v416
    %v609 = vsub.f32 %v225, %v417
    %v610 = vsub.f32 %v226, %v418
    %v611 = vsub.f32 %v227, %v419
    %v612 = vsub.f32 %v228, %v420
    %v613 = vsub.f32 %v229, %v421
    %v614 = vsub.f32 %v230, %v422
    %v615 = vsub.f32 %v231, %v423
    %v616 = vsub.f32 %v232, %v424
    %v617 = vsub.f32 %v233, %v425
    %v618 = vsub.f32 %v234, %v426
    %v619 = vsub.f32 %v235, %v427
    %v620 = vsub.f32 %v236, %v428
    %v621 = vsub.f32 %v237, %v429
    %v622 = vsub.f32 %v238, %v430
    %v623 = vsub.f32 %v239, %v431
    %v624 = vsub.f32 %v240, %v432
    %v625 = vstv %s48
    %v626 = vmul.f32 %v625, %v433
    %v627 = vmul.f32 %v625, %v434
    %v628 = vmul.f32 %v625, %v435
    %v629 = vmul.f32 %v625, %v436
    %v630 = vmul.f32 %v625, %v437
    %v631 = vmul.f32 %v625, %v438
    %v632 = vmul.f32 %v625, %v439
    %v633 = vmul.f32 %v625, %v440
    %v634 = vmul.f32 %v625, %v441
    %v635 = vmul.f32 %v625, %v442
    %v636 = vmul.f32 %v625, %v443
    %v637 = vmul.f32 %v625, %v444
    %v638 = vmul.f32 %v625, %v445
    %v639 = vmul.f32 %v625, %v446
    %v640 = vmul.f32 %v625, %v447
    %v641 = vmul.f32 %v625, %v448
    %v642 = vmul.f32 %v625, %v449
    %v643 = vmul.f32 %v625, %v450
    %v644 = vmul.f32 %v625, %v451
    %v645 = vmul.f32 %v625, %v452
    %v646 = vmul.f32 %v625, %v453
    %v647 = vmul.f32 %v625, %v454
    %v648 = vmul.f32 %v625, %v455
    %v649 = vmul.f32 %v625, %v456
    %v650 = vmul.f32 %v625, %v457
    %v651 = vmul.f32 %v625, %v458
    %v652 = vmul.f32 %v625, %v459
    %v653 = vmul.f32 %v625, %v460
    %v654 = vmul.f32 %v625, %v461
    %v655 = vmul.f32 %v625, %v462
    %v656 = vmul.f32 %v625, %v463
    %v657 = vmul.f32 %v625, %v464
    %v658 = vmul.f32 %v625, %v465
    %v659 = vmul.f32 %v625, %v466
    %v660 = vmul.f32 %v625, %v467
    %v661 = vmul.f32 %v625, %v468
    %v662 = vmul.f32 %v625, %v469
    %v663 = vmul.f32 %v625, %v470
    %v664 = vmul.f32 %v625, %v471
    %v665 = vmul.f32 %v625, %v472
    %v666 = vmul.f32 %v625, %v473
    %v667 = vmul.f32 %v625, %v474
    %v668 = vmul.f32 %v625, %v475
    %v669 = vmul.f32 %v625, %v476
    %v670 = vmul.f32 %v625, %v477
    %v671 = vmul.f32 %v625, %v478
    %v672 = vmul.f32 %v625, %v479
    %v673 = vmul.f32 %v625, %v480
    %v674 = vmul.f32 %v625, %v481
    %v675 = vmul.f32 %v625, %v482
    %v676 = vmul.f32 %v625, %v483
    %v677 = vmul.f32 %v625, %v484
    %v678 = vmul.f32 %v625, %v485
    %v679 = vmul.f32 %v625, %v486
    %v680 = vmul.f32 %v625, %v487
    %v681 = vmul.f32 %v625, %v488
    %v682 = vmul.f32 %v625, %v489
    %v683 = vmul.f32 %v625, %v490
    %v684 = vmul.f32 %v625, %v491
    %v685 = vmul.f32 %v625, %v492
    %v686 = vmul.f32 %v625, %v493
    %v687 = vmul.f32 %v625, %v494
    %v688 = vmul.f32 %v625, %v495
    %v689 = vmul.f32 %v625, %v496
    %v690 = vmul.f32 %v625, %v497
    %v691 = vmul.f32 %v625, %v498
    %v692 = vmul.f32 %v625, %v499
    %v693 = vmul.f32 %v625, %v500
    %v694 = vmul.f32 %v625, %v501
    %v695 = vmul.f32 %v625, %v502
    %v696 = vmul.f32 %v625, %v503
    %v697 = vmul.f32 %v625, %v504
    %v698 = vmul.f32 %v625, %v505
    %v699 = vmul.f32 %v625, %v506
    %v700 = vmul.f32 %v625, %v507
    %v701 = vmul.f32 %v625, %v508
    %v702 = vmul.f32 %v625, %v509
    %v703 = vmul.f32 %v625, %v510
    %v704 = vmul.f32 %v625, %v511
    %v705 = vmul.f32 %v625, %v512
    %v706 = vmul.f32 %v625, %v513
    %v707 = vmul.f32 %v625, %v514
    %v708 = vmul.f32 %v625, %v515
    %v709 = vmul.f32 %v625, %v516
    %v710 = vmul.f32 %v625, %v517
    %v711 = vmul.f32 %v625, %v518
    %v712 = vmul.f32 %v625, %v519
    %v713 = vmul.f32 %v625, %v520
    %v714 = vmul.f32 %v625, %v521
    %v715 = vmul.f32 %v625, %v522
    %v716 = vmul.f32 %v625, %v523
    %v717 = vmul.f32 %v625, %v524
    %v718 = vmul.f32 %v625, %v525
    %v719 = vmul.f32 %v625, %v526
    %v720 = vmul.f32 %v625, %v527
    %v721 = vmul.f32 %v625, %v528
    %v722 = vmul.f32 %v625, %v529
    %v723 = vmul.f32 %v625, %v530
    %v724 = vmul.f32 %v625, %v531
    %v725 = vmul.f32 %v625, %v532
    %v726 = vmul.f32 %v625, %v533
    %v727 = vmul.f32 %v625, %v534
    %v728 = vmul.f32 %v625, %v535
    %v729 = vmul.f32 %v625, %v536
    %v730 = vmul.f32 %v625, %v537
    %v731 = vmul.f32 %v625, %v538
    %v732 = vmul.f32 %v625, %v539
    %v733 = vmul.f32 %v625, %v540
    %v734 = vmul.f32 %v625, %v541
    %v735 = vmul.f32 %v625, %v542
    %v736 = vmul.f32 %v625, %v543
    %v737 = vmul.f32 %v625, %v544
    %v738 = vmul.f32 %v625, %v545
    %v739 = vmul.f32 %v625, %v546
    %v740 = vmul.f32 %v625, %v547
    %v741 = vmul.f32 %v625, %v548
    %v742 = vmul.f32 %v625, %v549
    %v743 = vmul.f32 %v625, %v550
    %v744 = vmul.f32 %v625, %v551
    %v745 = vmul.f32 %v625, %v552
    %v746 = vmul.f32 %v625, %v553
    %v747 = vmul.f32 %v625, %v554
    %v748 = vmul.f32 %v625, %v555
    %v749 = vmul.f32 %v625, %v556
    %v750 = vmul.f32 %v625, %v557
    %v751 = vmul.f32 %v625, %v558
    %v752 = vmul.f32 %v625, %v559
    %v753 = vmul.f32 %v625, %v560
    %v754 = vmul.f32 %v625, %v561
    %v755 = vmul.f32 %v625, %v562
    %v756 = vmul.f32 %v625, %v563
    %v757 = vmul.f32 %v625, %v564
    %v758 = vmul.f32 %v625, %v565
    %v759 = vmul.f32 %v625, %v566
    %v760 = vmul.f32 %v625, %v567
    %v761 = vmul.f32 %v625, %v568
    %v762 = vmul.f32 %v625, %v569
    %v763 = vmul.f32 %v625, %v570
    %v764 = vmul.f32 %v625, %v571
    %v765 = vmul.f32 %v625, %v572
    %v766 = vmul.f32 %v625, %v573
    %v767 = vmul.f32 %v625, %v574
    %v768 = vmul.f32 %v625, %v575
    %v769 = vmul.f32 %v625, %v576
    %v770 = vmul.f32 %v625, %v577
    %v771 = vmul.f32 %v625, %v578
    %v772 = vmul.f32 %v625, %v579
    %v773 = vmul.f32 %v625, %v580
    %v774 = vmul.f32 %v625, %v581
    %v775 = vmul.f32 %v625, %v582
    %v776 = vmul.f32 %v625, %v583
    %v777 = vmul.f32 %v625, %v584
    %v778 = vmul.f32 %v625, %v585
    %v779 = vmul.f32 %v625, %v586
    %v780 = vmul.f32 %v625, %v587
    %v781 = vmul.f32 %v625, %v588
    %v782 = vmul.f32 %v625, %v589
    %v783 = vmul.f32 %v625, %v590
    %v784 = vmul.f32 %v625, %v591
    %v785 = vmul.f32 %v625, %v592
    %v786 = vmul.f32 %v625, %v593
    %v787 = vmul.f32 %v625, %v594
    %v788 = vmul.f32 %v625, %v595
    %v789 = vmul.f32 %v625, %v596
    %v790 = vmul.f32 %v625, %v597
    %v791 = vmul.f32 %v625, %v598
    %v792 = vmul.f32 %v625, %v599
    %v793 = vmul.f32 %v625, %v600
    %v794 = vmul.f32 %v625, %v601
    %v795 = vmul.f32 %v625, %v602
    %v796 = vmul.f32 %v625, %v603
    %v797 = vmul.f32 %v625, %v604
    %v798 = vmul.f32 %v625, %v605
    %v799 = vmul.f32 %v625, %v606
    %v800 = vmul.f32 %v625, %v607
    %v801 = vmul.f32 %v625, %v608
    %v802 = vmul.f32 %v625, %v609
    %v803 = vmul.f32 %v625, %v610
    %v804 = vmul.f32 %v625, %v611
    %v805 = vmul.f32 %v625, %v612
    %v806 = vmul.f32 %v625, %v613
    %v807 = vmul.f32 %v625, %v614
    %v808 = vmul.f32 %v625, %v615
    %v809 = vmul.f32 %v625, %v616
    %v810 = vmul.f32 %v625, %v617
    %v811 = vmul.f32 %v625, %v618
    %v812 = vmul.f32 %v625, %v619
    %v813 = vmul.f32 %v625, %v620
    %v814 = vmul.f32 %v625, %v621
    %v815 = vmul.f32 %v625, %v622
    %v816 = vmul.f32 %v625, %v623
    %v817 = vmul.f32 %v625, %v624
    %v818 = vsub.f32 %v49, %v626
    %v819 = vsub.f32 %v50, %v627
    %v820 = vsub.f32 %v51, %v628
    %v821 = vsub.f32 %v52, %v629
    %v822 = vsub.f32 %v53, %v630
    %v823 = vsub.f32 %v54, %v631
    %v824 = vsub.f32 %v55, %v632
    %v825 = vsub.f32 %v56, %v633
    %v826 = vsub.f32 %v57, %v634
    %v827 = vsub.f32 %v58, %v635
    %v828 = vsub.f32 %v59, %v636
    %v829 = vsub.f32 %v60, %v637
    %v830 = vsub.f32 %v61, %v638
    %v831 = vsub.f32 %v62, %v639
    %v832 = vsub.f32 %v63, %v640
    %v833 = vsub.f32 %v64, %v641
    %v834 = vsub.f32 %v65, %v642
    %v835 = vsub.f32 %v66, %v643
    %v836 = vsub.f32 %v67, %v644
    %v837 = vsub.f32 %v68, %v645
    %v838 = vsub.f32 %v69, %v646
    %v839 = vsub.f32 %v70, %v647
    %v840 = vsub.f32 %v71, %v648
    %v841 = vsub.f32 %v72, %v649
    %v842 = vsub.f32 %v73, %v650
    %v843 = vsub.f32 %v74, %v651
    %v844 = vsub.f32 %v75, %v652
    %v845 = vsub.f32 %v76, %v653
    %v846 = vsub.f32 %v77, %v654
    %v847 = vsub.f32 %v78, %v655
    %v848 = vsub.f32 %v79, %v656
    %v849 = vsub.f32 %v80, %v657
    %v850 = vsub.f32 %v81, %v658
    %v851 = vsub.f32 %v82, %v659
    %v852 = vsub.f32 %v83, %v660
    %v853 = vsub.f32 %v84, %v661
    %v854 = vsub.f32 %v85, %v662
    %v855 = vsub.f32 %v86, %v663
    %v856 = vsub.f32 %v87, %v664
    %v857 = vsub.f32 %v88, %v665
    %v858 = vsub.f32 %v89, %v666
    %v859 = vsub.f32 %v90, %v667
    %v860 = vsub.f32 %v91, %v668
    %v861 = vsub.f32 %v92, %v669
    %v862 = vsub.f32 %v93, %v670
    %v863 = vsub.f32 %v94, %v671
    %v864 = vsub.f32 %v95, %v672
    %v865 = vsub.f32 %v96, %v673
    %v866 = vsub.f32 %v97, %v674
    %v867 = vsub.f32 %v98, %v675
    %v868 = vsub.f32 %v99, %v676
    %v869 = vsub.f32 %v100, %v677
    %v870 = vsub.f32 %v101, %v678
    %v871 = vsub.f32 %v102, %v679
    %v872 = vsub.f32 %v103, %v680
    %v873 = vsub.f32 %v104, %v681
    %v874 = vsub.f32 %v105, %v682
    %v875 = vsub.f32 %v106, %v683
    %v876 = vsub.f32 %v107, %v684
    %v877 = vsub.f32 %v108, %v685
    %v878 = vsub.f32 %v109, %v686
    %v879 = vsub.f32 %v110, %v687
    %v880 = vsub.f32 %v111, %v688
    %v881 = vsub.f32 %v112, %v689
    %v882 = vsub.f32 %v113, %v690
    %v883 = vsub.f32 %v114, %v691
    %v884 = vsub.f32 %v115, %v692
    %v885 = vsub.f32 %v116, %v693
    %v886 = vsub.f32 %v117, %v694
    %v887 = vsub.f32 %v118, %v695
    %v888 = vsub.f32 %v119, %v696
    %v889 = vsub.f32 %v120, %v697
    %v890 = vsub.f32 %v121, %v698
    %v891 = vsub.f32 %v122, %v699
    %v892 = vsub.f32 %v123, %v700
    %v893 = vsub.f32 %v124, %v701
    %v894 = vsub.f32 %v125, %v702
    %v895 = vsub.f32 %v126, %v703
    %v896 = vsub.f32 %v127, %v704
    %v897 = vsub.f32 %v128, %v705
    %v898 = vsub.f32 %v129, %v706
    %v899 = vsub.f32 %v130, %v707
    %v900 = vsub.f32 %v131, %v708
    %v901 = vsub.f32 %v132, %v709
    %v902 = vsub.f32 %v133, %v710
    %v903 = vsub.f32 %v134, %v711
    %v904 = vsub.f32 %v135, %v712
    %v905 = vsub.f32 %v136, %v713
    %v906 = vsub.f32 %v137, %v714
    %v907 = vsub.f32 %v138, %v715
    %v908 = vsub.f32 %v139, %v716
    %v909 = vsub.f32 %v140, %v717
    %v910 = vsub.f32 %v141, %v718
    %v911 = vsub.f32 %v142, %v719
    %v912 = vsub.f32 %v143, %v720
    %v913 = vsub.f32 %v144, %v721
    %v914 = vsub.f32 %v145, %v722
    %v915 = vsub.f32 %v146, %v723
    %v916 = vsub.f32 %v147, %v724
    %v917 = vsub.f32 %v148, %v725
    %v918 = vsub.f32 %v149, %v726
    %v919 = vsub.f32 %v150, %v727
    %v920 = vsub.f32 %v151, %v728
    %v921 = vsub.f32 %v152, %v729
    %v922 = vsub.f32 %v153, %v730
    %v923 = vsub.f32 %v154, %v731
    %v924 = vsub.f32 %v155, %v732
    %v925 = vsub.f32 %v156, %v733
    %v926 = vsub.f32 %v157, %v734
    %v927 = vsub.f32 %v158, %v735
    %v928 = vsub.f32 %v159, %v736
    %v929 = vsub.f32 %v160, %v737
    %v930 = vsub.f32 %v161, %v738
    %v931 = vsub.f32 %v162, %v739
    %v932 = vsub.f32 %v163, %v740
    %v933 = vsub.f32 %v164, %v741
    %v934 = vsub.f32 %v165, %v742
    %v935 = vsub.f32 %v166, %v743
    %v936 = vsub.f32 %v167, %v744
    %v937 = vsub.f32 %v168, %v745
    %v938 = vsub.f32 %v169, %v746
    %v939 = vsub.f32 %v170, %v747
    %v940 = vsub.f32 %v171, %v748
    %v941 = vsub.f32 %v172, %v749
    %v942 = vsub.f32 %v173, %v750
    %v943 = vsub.f32 %v174, %v751
    %v944 = vsub.f32 %v175, %v752
    %v945 = vsub.f32 %v176, %v753
    %v946 = vsub.f32 %v177, %v754
    %v947 = vsub.f32 %v178, %v755
    %v948 = vsub.f32 %v179, %v756
    %v949 = vsub.f32 %v180, %v757
    %v950 = vsub.f32 %v181, %v758
    %v951 = vsub.f32 %v182, %v759
    %v952 = vsub.f32 %v183, %v760
    %v953 = vsub.f32 %v184, %v761
    %v954 = vsub.f32 %v185, %v762
    %v955 = vsub.f32 %v186, %v763
    %v956 = vsub.f32 %v187, %v764
    %v957 = vsub.f32 %v188, %v765
    %v958 = vsub.f32 %v189, %v766
    %v959 = vsub.f32 %v190, %v767
    %v960 = vsub.f32 %v191, %v768
    %v961 = vsub.f32 %v192, %v769
    %v962 = vsub.f32 %v193, %v770
    %v963 = vsub.f32 %v194, %v771
    %v964 = vsub.f32 %v195, %v772
    %v965 = vsub.f32 %v196, %v773
    %v966 = vsub.f32 %v197, %v774
    %v967 = vsub.f32 %v198, %v775
    %v968 = vsub.f32 %v199, %v776
    %v969 = vsub.f32 %v200, %v777
    %v970 = vsub.f32 %v201, %v778
    %v971 = vsub.f32 %v202, %v779
    %v972 = vsub.f32 %v203, %v780
    %v973 = vsub.f32 %v204, %v781
    %v974 = vsub.f32 %v205, %v782
    %v975 = vsub.f32 %v206, %v783
    %v976 = vsub.f32 %v207, %v784
    %v977 = vsub.f32 %v208, %v785
    %v978 = vsub.f32 %v209, %v786
    %v979 = vsub.f32 %v210, %v787
    %v980 = vsub.f32 %v211, %v788
    %v981 = vsub.f32 %v212, %v789
    %v982 = vsub.f32 %v213, %v790
    %v983 = vsub.f32 %v214, %v791
    %v984 = vsub.f32 %v215, %v792
    %v985 = vsub.f32 %v216, %v793
    %v986 = vsub.f32 %v217, %v794
    %v987 = vsub.f32 %v218, %v795
    %v988 = vsub.f32 %v219, %v796
    %v989 = vsub.f32 %v220, %v797
    %v990 = vsub.f32 %v221, %v798
    %v991 = vsub.f32 %v222, %v799
    %v992 = vsub.f32 %v223, %v800
    %v993 = vsub.f32 %v224, %v801
    %v994 = vsub.f32 %v225, %v802
    %v995 = vsub.f32 %v226, %v803
    %v996 = vsub.f32 %v227, %v804
    %v997 = vsub.f32 %v228, %v805
    %v998 = vsub.f32 %v229, %v806
    %v999 = vsub.f32 %v230, %v807
    %v1000 = vsub.f32 %v231, %v808
    %v1001 = vsub.f32 %v232, %v809
    %v1002 = vsub.f32 %v233, %v810
    %v1003 = vsub.f32 %v234, %v811
    %v1004 = vsub.f32 %v235, %v812
    %v1005 = vsub.f32 %v236, %v813
    %v1006 = vsub.f32 %v237, %v814
    %v1007 = vsub.f32 %v238, %v815
    %v1008 = vsub.f32 %v239, %v816
    %v1009 = vsub.f32 %v240, %v817
    %1010 = vst [vmem:[#allocation8] sm:$0xff] %v818
    %1011 = vst [vmem:[#allocation8 + $0x8] sm:$0xff] %v819
    %1012 = vst [vmem:[#allocation8 + $0x10] sm:$0xff] %v820
    %1013 = vst [vmem:[#allocation8 + $0x18] sm:$0xff] %v821
    %1014 = vst [vmem:[#allocation8 + $0x20] sm:$0xff] %v822
    %1015 = vst [vmem:[#allocation8 + $0x28] sm:$0xff] %v823
    %1016 = vst [vmem:[#allocation8 + $0x30] sm:$0xff] %v824
    %1017 = vst [vmem:[#allocation8 + $0x38] sm:$0xff] %v825
    %1018 = vst [vmem:[#allocation8 + $0x40] sm:$0xff] %v826
    %1019 = vst [vmem:[#allocation8 + $0x48] sm:$0xff] %v827
    %1020 = vst [vmem:[#allocation8 + $0x50] sm:$0xff] %v828
    %1021 = vst [vmem:[#allocation8 + $0x58] sm:$0xff] %v829
    %1022 = vst [vmem:[#allocation8 + $0x60] sm:$0xff] %v830
    %1023 = vst [vmem:[#allocation8 + $0x68] sm:$0xff] %v831
    %1024 = vst [vmem:[#allocation8 + $0x70] sm:$0xff] %v832
    %1025 = vst [vmem:[#allocation8 + $0x78] sm:$0xff] %v833
    %1026 = vst [vmem:[#allocation8 + $0x80] sm:$0xff] %v834
    %1027 = vst [vmem:[#allocation8 + $0x88] sm:$0xff] %v835
    %1028 = vst [vmem:[#allocation8 + $0x90] sm:$0xff] %v836
    %1029 = vst [vmem:[#allocation8 + $0x98] sm:$0xff] %v837
    %1030 = vst [vmem:[#allocation8 + $0xa0] sm:$0xff] %v838
    %1031 = vst [vmem:[#allocation8 + $0xa8] sm:$0xff] %v839
    %1032 = vst [vmem:[#allocation8 + $0xb0] sm:$0xff] %v840
    %1033 = vst [vmem:[#allocation8 + $0xb8] sm:$0xff] %v841
    %1034 = vst [vmem:[#allocation8 + $0xc0] sm:$0xff] %v842
    %1035 = vst [vmem:[#allocation8 + $0xc8] sm:$0xff] %v843
    %1036 = vst [vmem:[#allocation8 + $0xd0] sm:$0xff] %v844
    %1037 = vst [vmem:[#allocation8 + $0xd8] sm:$0xff] %v845
    %1038 = vst [vmem:[#allocation8 + $0xe0] sm:$0xff] %v846
    %1039 = vst [vmem:[#allocation8 + $0xe8] sm:$0xff] %v847
    %1040 = vst [vmem:[#allocation8 + $0xf0] sm:$0xff] %v848
    %1041 = vst [vmem:[#allocation8 + $0xf8] sm:$0xff] %v849
    %1042 = vst [vmem:[#allocation8 + $0x100] sm:$0xff] %v850
    %1043 = vst [vmem:[#allocation8 + $0x108] sm:$0xff] %v851
    %1044 = vst [vmem:[#allocation8 + $0x110] sm:$0xff] %v852
    %1045 = vst [vmem:[#allocation8 + $0x118] sm:$0xff] %v853
    %1046 = vst [vmem:[#allocation8 + $0x120] sm:$0xff] %v854
    %1047 = vst [vmem:[#allocation8 + $0x128] sm:$0xff] %v855
    %1048 = vst [vmem:[#allocation8 + $0x130] sm:$0xff] %v856
    %1049 = vst [vmem:[#allocation8 + $0x138] sm:$0xff] %v857
    %1050 = vst [vmem:[#allocation8 + $0x140] sm:$0xff] %v858
    %1051 = vst [vmem:[#allocation8 + $0x148] sm:$0xff] %v859
    %1052 = vst [vmem:[#allocation8 + $0x150] sm:$0xff] %v860
    %1053 = vst [vmem:[#allocation8 + $0x158] sm:$0xff] %v861
    %1054 = vst [vmem:[#allocation8 + $0x160] sm:$0xff] %v862
    %1055 = vst [vmem:[#allocation8 + $0x168] sm:$0xff] %v863
    %1056 = vst [vmem:[#allocation8 + $0x170] sm:$0xff] %v864
    %1057 = vst [vmem:[#allocation8 + $0x178] sm:$0xff] %v865
    %1058 = vst [vmem:[#allocation8 + $0x180] sm:$0xff] %v866
    %1059 = vst [vmem:[#allocation8 + $0x188] sm:$0xff] %v867
    %1060 = vst [vmem:[#allocation8 + $0x190] sm:$0xff] %v868
    %1061 = vst [vmem:[#allocation8 + $0x198] sm:$0xff] %v869
    %1062 = vst [vmem:[#allocation8 + $0x1a0] sm:$0xff] %v870
    %1063 = vst [vmem:[#allocation8 + $0x1a8] sm:$0xff] %v871
    %1064 = vst [vmem:[#allocation8 + $0x1b0] sm:$0xff] %v872
    %1065 = vst [vmem:[#allocation8 + $0x1b8] sm:$0xff] %v873
    %1066 = vst [vmem:[#allocation8 + $0x1c0] sm:$0xff] %v874
    %1067 = vst [vmem:[#allocation8 + $0x1c8] sm:$0xff] %v875
    %1068 = vst [vmem:[#allocation8 + $0x1d0] sm:$0xff] %v876
    %1069 = vst [vmem:[#allocation8 + $0x1d8] sm:$0xff] %v877
    %1070 = vst [vmem:[#allocation8 + $0x1e0] sm:$0xff] %v878
    %1071 = vst [vmem:[#allocation8 + $0x1e8] sm:$0xff] %v879
    %1072 = vst [vmem:[#allocation8 + $0x1f0] sm:$0xff] %v880
    %1073 = vst [vmem:[#allocation8 + $0x1f8] sm:$0xff] %v881
    %1074 = vst [vmem:[#allocation8 + $0x200] sm:$0xff] %v882
    %1075 = vst [vmem:[#allocation8 + $0x208] sm:$0xff] %v883
    %1076 = vst [vmem:[#allocation8 + $0x210] sm:$0xff] %v884
    %1077 = vst [vmem:[#allocation8 + $0x218] sm:$0xff] %v885
    %1078 = vst [vmem:[#allocation8 + $0x220] sm:$0xff] %v886
    %1079 = vst [vmem:[#allocation8 + $0x228] sm:$0xff] %v887
    %1080 = vst [vmem:[#allocation8 + $0x230] sm:$0xff] %v888
    %1081 = vst [vmem:[#allocation8 + $0x238] sm:$0xff] %v889
    %1082 = vst [vmem:[#allocation8 + $0x240] sm:$0xff] %v890
    %1083 = vst [vmem:[#allocation8 + $0x248] sm:$0xff] %v891
    %1084 = vst [vmem:[#allocation8 + $0x250] sm:$0xff] %v892
    %1085 = vst [vmem:[#allocation8 + $0x258] sm:$0xff] %v893
    %1086 = vst [vmem:[#allocation8 + $0x260] sm:$0xff] %v894
    %1087 = vst [vmem:[#allocation8 + $0x268] sm:$0xff] %v895
    %1088 = vst [vmem:[#allocation8 + $0x270] sm:$0xff] %v896
    %1089 = vst [vmem:[#allocation8 + $0x278] sm:$0xff] %v897
    %1090 = vst [vmem:[#allocation8 + $0x280] sm:$0xff] %v898
    %1091 = vst [vmem:[#allocation8 + $0x288] sm:$0xff] %v899
    %1092 = vst [vmem:[#allocation8 + $0x290] sm:$0xff] %v900
    %1093 = vst [vmem:[#allocation8 + $0x298] sm:$0xff] %v901
    %1094 = vst [vmem:[#allocation8 + $0x2a0] sm:$0xff] %v902
    %1095 = vst [vmem:[#allocation8 + $0x2a8] sm:$0xff] %v903
    %1096 = vst [vmem:[#allocation8 + $0x2b0] sm:$0xff] %v904
    %1097 = vst [vmem:[#allocation8 + $0x2b8] sm:$0xff] %v905
    %1098 = vst [vmem:[#allocation8 + $0x2c0] sm:$0xff] %v906
    %1099 = vst [vmem:[#allocation8 + $0x2c8] sm:$0xff] %v907
    %1100 = vst [vmem:[#allocation8 + $0x2d0] sm:$0xff] %v908
    %1101 = vst [vmem:[#allocation8 + $0x2d8] sm:$0xff] %v909
    %1102 = vst [vmem:[#allocation8 + $0x2e0] sm:$0xff] %v910
    %1103 = vst [vmem:[#allocation8 + $0x2e8] sm:$0xff] %v911
    %1104 = vst [vmem:[#allocation8 + $0x2f0] sm:$0xff] %v912
    %1105 = vst [vmem:[#allocation8 + $0x2f8] sm:$0xff] %v913
    %1106 = vst [vmem:[#allocation8 + $0x300] sm:$0xff] %v914
    %1107 = vst [vmem:[#allocation8 + $0x308] sm:$0xff] %v915
    %1108 = vst [vmem:[#allocation8 + $0x310] sm:$0xff] %v916
    %1109 = vst [vmem:[#allocation8 + $0x318] sm:$0xff] %v917
    %1110 = vst [vmem:[#allocation8 + $0x320] sm:$0xff] %v918
    %1111 = vst [vmem:[#allocation8 + $0x328] sm:$0xff] %v919
    %1112 = vst [vmem:[#allocation8 + $0x330] sm:$0xff] %v920
    %1113 = vst [vmem:[#allocation8 + $0x338] sm:$0xff] %v921
    %1114 = vst [vmem:[#allocation8 + $0x340] sm:$0xff] %v922
    %1115 = vst [vmem:[#allocation8 + $0x348] sm:$0xff] %v923
    %1116 = vst [vmem:[#allocation8 + $0x350] sm:$0xff] %v924
    %1117 = vst [vmem:[#allocation8 + $0x358] sm:$0xff] %v925
    %1118 = vst [vmem:[#allocation8 + $0x360] sm:$0xff] %v926
    %1119 = vst [vmem:[#allocation8 + $0x368] sm:$0xff] %v927
    %1120 = vst [vmem:[#allocation8 + $0x370] sm:$0xff] %v928
    %1121 = vst [vmem:[#allocation8 + $0x378] sm:$0xff] %v929
    %1122 = vst [vmem:[#allocation8 + $0x380] sm:$0xff] %v930
    %1123 = vst [vmem:[#allocation8 + $0x388] sm:$0xff] %v931
    %1124 = vst [vmem:[#allocation8 + $0x390] sm:$0xff] %v932
    %1125 = vst [vmem:[#allocation8 + $0x398] sm:$0xff] %v933
    %1126 = vst [vmem:[#allocation8 + $0x3a0] sm:$0xff] %v934
    %1127 = vst [vmem:[#allocation8 + $0x3a8] sm:$0xff] %v935
    %1128 = vst [vmem:[#allocation8 + $0x3b0] sm:$0xff] %v936
    %1129 = vst [vmem:[#allocation8 + $0x3b8] sm:$0xff] %v937
    %1130 = vst [vmem:[#allocation8 + $0x3c0] sm:$0xff] %v938
    %1131 = vst [vmem:[#allocation8 + $0x3c8] sm:$0xff] %v939
    %1132 = vst [vmem:[#allocation8 + $0x3d0] sm:$0xff] %v940
    %1133 = vst [vmem:[#allocation8 + $0x3d8] sm:$0xff] %v941
    %1134 = vst [vmem:[#allocation8 + $0x3e0] sm:$0xff] %v942
    %1135 = vst [vmem:[#allocation8 + $0x3e8] sm:$0xff] %v943
    %1136 = vst [vmem:[#allocation8 + $0x3f0] sm:$0xff] %v944
    %1137 = vst [vmem:[#allocation8 + $0x3f8] sm:$0xff] %v945
    %1138 = vst [vmem:[#allocation8 + $0x400] sm:$0xff] %v946
    %1139 = vst [vmem:[#allocation8 + $0x408] sm:$0xff] %v947
    %1140 = vst [vmem:[#allocation8 + $0x410] sm:$0xff] %v948
    %1141 = vst [vmem:[#allocation8 + $0x418] sm:$0xff] %v949
    %1142 = vst [vmem:[#allocation8 + $0x420] sm:$0xff] %v950
    %1143 = vst [vmem:[#allocation8 + $0x428] sm:$0xff] %v951
    %1144 = vst [vmem:[#allocation8 + $0x430] sm:$0xff] %v952
    %1145 = vst [vmem:[#allocation8 + $0x438] sm:$0xff] %v953
    %1146 = vst [vmem:[#allocation8 + $0x440] sm:$0xff] %v954
    %1147 = vst [vmem:[#allocation8 + $0x448] sm:$0xff] %v955
    %1148 = vst [vmem:[#allocation8 + $0x450] sm:$0xff] %v956
    %1149 = vst [vmem:[#allocation8 + $0x458] sm:$0xff] %v957
    %1150 = vst [vmem:[#allocation8 + $0x460] sm:$0xff] %v958
    %1151 = vst [vmem:[#allocation8 + $0x468] sm:$0xff] %v959
    %1152 = vst [vmem:[#allocation8 + $0x470] sm:$0xff] %v960
    %1153 = vst [vmem:[#allocation8 + $0x478] sm:$0xff] %v961
    %1154 = vst [vmem:[#allocation8 + $0x480] sm:$0xff] %v962
    %1155 = vst [vmem:[#allocation8 + $0x488] sm:$0xff] %v963
    %1156 = vst [vmem:[#allocation8 + $0x490] sm:$0xff] %v964
    %1157 = vst [vmem:[#allocation8 + $0x498] sm:$0xff] %v965
    %1158 = vst [vmem:[#allocation8 + $0x4a0] sm:$0xff] %v966
    %1159 = vst [vmem:[#allocation8 + $0x4a8] sm:$0xff] %v967
    %1160 = vst [vmem:[#allocation8 + $0x4b0] sm:$0xff] %v968
    %1161 = vst [vmem:[#allocation8 + $0x4b8] sm:$0xff] %v969
    %1162 = vst [vmem:[#allocation8 + $0x4c0] sm:$0xff] %v970
    %1163 = vst [vmem:[#allocation8 + $0x4c8] sm:$0xff] %v971
    %1164 = vst [vmem:[#allocation8 + $0x4d0] sm:$0xff] %v972
    %1165 = vst [vmem:[#allocation8 + $0x4d8] sm:$0xff] %v973
    %1166 = vst [vmem:[#allocation8 + $0x4e0] sm:$0xff] %v974
    %1167 = vst [vmem:[#allocation8 + $0x4e8] sm:$0xff] %v975
    %1168 = vst [vmem:[#allocation8 + $0x4f0] sm:$0xff] %v976
    %1169 = vst [vmem:[#allocation8 + $0x4f8] sm:$0xff] %v977
    %1170 = vst [vmem:[#allocation8 + $0x500] sm:$0xff] %v978
    %1171 = vst [vmem:[#allocation8 + $0x508] sm:$0xff] %v979
    %1172 = vst [vmem:[#allocation8 + $0x510] sm:$0xff] %v980
    %1173 = vst [vmem:[#allocation8 + $0x518] sm:$0xff] %v981
    %1174 = vst [vmem:[#allocation8 + $0x520] sm:$0xff] %v982
    %1175 = vst [vmem:[#allocation8 + $0x528] sm:$0xff] %v983
    %1176 = vst [vmem:[#allocation8 + $0x530] sm:$0xff] %v984
    %1177 = vst [vmem:[#allocation8 + $0x538] sm:$0xff] %v985
    %1178 = vst [vmem:[#allocation8 + $0x540] sm:$0xff] %v986
    %1179 = vst [vmem:[#allocation8 + $0x548] sm:$0xff] %v987
    %1180 = vst [vmem:[#allocation8 + $0x550] sm:$0xff] %v988
    %1181 = vst [vmem:[#allocation8 + $0x558] sm:$0xff] %v989
    %1182 = vst [vmem:[#allocation8 + $0x560] sm:$0xff] %v990
    %1183 = vst [vmem:[#allocation8 + $0x568] sm:$0xff] %v991
    %1184 = vst [vmem:[#allocation8 + $0x570] sm:$0xff] %v992
    %1185 = vst [vmem:[#allocation8 + $0x578] sm:$0xff] %v993
    %1186 = vst [vmem:[#allocation8 + $0x580] sm:$0xff] %v994
    %1187 = vst [vmem:[#allocation8 + $0x588] sm:$0xff] %v995
    %1188 = vst [vmem:[#allocation8 + $0x590] sm:$0xff] %v996
    %1189 = vst [vmem:[#allocation8 + $0x598] sm:$0xff] %v997
    %1190 = vst [vmem:[#allocation8 + $0x5a0] sm:$0xff] %v998
    %1191 = vst [vmem:[#allocation8 + $0x5a8] sm:$0xff] %v999
    %1192 = vst [vmem:[#allocation8 + $0x5b0] sm:$0xff] %v1000
    %1193 = vst [vmem:[#allocation8 + $0x5b8] sm:$0xff] %v1001
    %1194 = vst [vmem:[#allocation8 + $0x5c0] sm:$0xff] %v1002
    %1195 = vst [vmem:[#allocation8 + $0x5c8] sm:$0xff] %v1003
    %1196 = vst [vmem:[#allocation8 + $0x5d0] sm:$0xff] %v1004
    %1197 = vst [vmem:[#allocation8 + $0x5d8] sm:$0xff] %v1005
    %1198 = vst [vmem:[#allocation8 + $0x5e0] sm:$0xff] %v1006
    %1199 = vst [vmem:[#allocation8 + $0x5e8] sm:$0xff] %v1007
    %1200 = vst [vmem:[#allocation8 + $0x5f0] sm:$0xff] %v1008
    %1201 = vst [vmem:[#allocation8 + $0x5f8] sm:$0xff] %v1009
    // Predicated region
    $region22: #{ema_update.2} parent=1 // pred_check
      _
    $region23: #{ema_update.2} parent=1 // pred_check_branch
      %1203 = sbr.rel (0) target = $region25
    $region24: #{ema_update.2} parent=1 // pred_region
      %1205 = vsyncadd [#allocation5], 0
      %s1206 = sshll.u32 [#allocation8], 4
      %s1207 = int_to_ptr.vmem [resolvable:$true] %s1206
      %s1208 = sshll.u32 %s3, 4
      %s1209 = int_to_ptr.hbm [resolvable:$true] %s1208
      %1214 = dma.vmem_to_hbm [thread:$0]  %s1207, 24576, %s1209, [#allocation5], 512, 512, 32
    $region25: #{ema_update.2} parent=1 // pred_fallthru
      _
    // Predicated region
    $region26: #{ema_update.2} parent=1 // pred_check
      _
    $region27: #{ema_update.2} parent=1 // pred_check_branch
      %1216 = sbr.rel (0) target = $region29
    $region28: #{ema_update.2} parent=1 // pred_region
      %1218 = dma.done [#allocation5], 24576
    $region29: #{ema_update.2} parent=1 // pred_fallthru
      _
    %1219 = vsyncpa [#allocation4], 1
    %1220 = vsyncpa [#allocation7], 1
    %1221 = vsyncpa [#allocation5], 1

// kernel: ema_update.3
$region0: #{ema_update.3}
  #allocation0 [shape = 'u32[]', space=smem, size = 0x4, offset = 0x4, fixed_abs, tag = 'smem constant byte address 0x4 - core index']
  #allocation1 [shape = 'u32[72,128]{1,0:T(1,128)}', space=vmem, size = 0x9000, scoped, tag = 'internal scratch']
  #allocation2 [shape = 'f32[1]{0:T(128)S(6)}', space=smem, size = 0x200, scoped, tag = 'scoped memory for ema_update.3']
  %s0 = inlined_call_operand.<no memory space> [shape: f32[1], index: 0, kind: input, shape index: {}]
  %s1 = inlined_call_operand.vmem [shape: f32[1536,512], index: 1, kind: input, shape index: {}, may-alias: {1,3}]
  %s2 = inlined_call_operand.vmem [shape: f32[1536,512], index: 2, kind: input, shape index: {}]
  %s3 = inlined_call_operand.vmem [shape: f32[1536,512], index: 3, kind: output, shape index: {}, may-alias: {1,3}]
  %s4 = sld [smem:[#allocation0]]
  $region45: #{ema_update.3} parent=0
    _
  %s6 = ssub.s32 1, %s4
  %s7 = scalar_select 0, %s6, %s4
  %8 = sst [smem:[#allocation2]] %s0
  loop: start=0, step=1, limit=5
  $region2: #{ema_update.3} parent=0 // loop_pre_header
    _
  $region3: #{ema_update.3} parent=0 // loop_header
    %s10 = sphi 0, %s14
    %p11 = scmp.ge.s32.totalorder %s10, 5
    %s18 = sphi 0, %s18
    %s20 = sphi 0, %s18
    %s21 = sphi 0, %s20
    %s35 = sphi 0, %s21
    %s41 = sphi 0, %s43
    %s44 = sphi 0, %s41
    %s45 = sphi 0, %s44
    %s61 = sphi 0, %s45
    %s67 = sphi 0, %s69
    %s70 = sphi 0, %s67
    %s71 = sphi 0, %s70
    %s87 = sphi 0, %s71
    %s93 = sphi 0, %s95
    %s96 = sphi 0, %s93
    %s97 = sphi 0, %s96
    %s113 = sphi 0, %s97
  $region4: #{ema_update.3} parent=0 // loop_header_branch
    %13 = sbr.rel (%p11) target = $region8
  $region5: #{ema_update.3} parent=0 // loop_body
    %s15 = ssub.s32 %s10, 1
    %s16 = ssub.s32 %s10, 2
    %s17 = sadd.s32 %s10, 1
    %s19 = sadd.s32 %s18, 1
    %p22 = scmp.eq.s32.totalorder %s10, 2
    %p23 = scmp.ne.s32.totalorder %s18, %s20
    %p24 = scmp.eq.s32.totalorder %s10, 0
    %p25 = por %p23, %p24
    %p26 = scmp.ne.s32.totalorder %s18, %s20
    %p27 = scmp.eq.s32.totalorder %s15, 2
    %p28 = por %p26, %p27
    %p29 = scmp.ne.s32.totalorder %s20, %s21
    %p30 = scmp.eq.s32.totalorder %s15, 0
    %p31 = por %p29, %p30
    %p32 = scmp.ne.s32.totalorder %s20, %s21
    %p33 = scmp.eq.s32.totalorder %s16, 2
    %p34 = por %p32, %p33
    %p36 = scmp.ne.s32.totalorder %s21, %s35
    %p37 = scmp.eq.s32.totalorder %s16, 0
    %p38 = por %p36, %p37
    %s39 = ssub.s32 %s10, %s17
    %p40 = scmp.eq.s32.totalorder %s39, 0
    %s42 = sadd.s32 %s41, 1
    %s43 = scalar_select %p40, %s41, %s42
    %p46 = pneg %p40
    %p47 = scmp.eq.s32.totalorder %s10, 2
    %p48 = por %p46, %p47
    %p49 = scmp.ne.s32.totalorder %s41, %s44
    %p50 = scmp.eq.s32.totalorder %s10, 0
    %p51 = por %p49, %p50
    %p52 = scmp.ne.s32.totalorder %s41, %s44
    %p53 = scmp.eq.s32.totalorder %s15, 2
    %p54 = por %p52, %p53
    %p55 = scmp.ne.s32.totalorder %s44, %s45
    %p56 = scmp.eq.s32.totalorder %s15, 0
    %p57 = por %p55, %p56
    %p58 = scmp.ne.s32.totalorder %s44, %s45
    %p59 = scmp.eq.s32.totalorder %s16, 2
    %p60 = por %p58, %p59
    %p62 = scmp.ne.s32.totalorder %s45, %s61
    %p63 = scmp.eq.s32.totalorder %s16, 0
    %p64 = por %p62, %p63
    %s65 = ssub.s32 %s10, %s17
    %p66 = scmp.eq.s32.totalorder %s65, 0
    %s68 = sadd.s32 %s67, 1
    %s69 = scalar_select %p66, %s67, %s68
    %p72 = pneg %p66
    %p73 = scmp.eq.s32.totalorder %s10, 2
    %p74 = por %p72, %p73
    %p75 = scmp.ne.s32.totalorder %s67, %s70
    %p76 = scmp.eq.s32.totalorder %s10, 0
    %p77 = por %p75, %p76
    %p78 = scmp.ne.s32.totalorder %s67, %s70
    %p79 = scmp.eq.s32.totalorder %s15, 2
    %p80 = por %p78, %p79
    %p81 = scmp.ne.s32.totalorder %s70, %s71
    %p82 = scmp.eq.s32.totalorder %s15, 0
    %p83 = por %p81, %p82
    %p84 = scmp.ne.s32.totalorder %s70, %s71
    %p85 = scmp.eq.s32.totalorder %s16, 2
    %p86 = por %p84, %p85
    %p88 = scmp.ne.s32.totalorder %s71, %s87
    %p89 = scmp.eq.s32.totalorder %s16, 0
    %p90 = por %p88, %p89
    %s91 = ssub.s32 %s10, %s17
    %p92 = scmp.eq.s32.totalorder %s91, 0
    %s94 = sadd.s32 %s93, 1
    %s95 = scalar_select %p92, %s93, %s94
    %p98 = pneg %p92
    %p99 = scmp.eq.s32.totalorder %s10, 2
    %p100 = por %p98, %p99
    %p101 = scmp.ne.s32.totalorder %s93, %s96
    %p102 = scmp.eq.s32.totalorder %s10, 0
    %p103 = por %p101, %p102
    %p104 = scmp.ne.s32.totalorder %s93, %s96
    %p105 = scmp.eq.s32.totalorder %s15, 2
    %p106 = por %p104, %p105
    %p107 = scmp.ne.s32.totalorder %s96, %s97
    %p108 = scmp.eq.s32.totalorder %s15, 0
    %p109 = por %p107, %p108
    %p110 = scmp.ne.s32.totalorder %s96, %s97
    %p111 = scmp.eq.s32.totalorder %s16, 2
    %p112 = por %p110, %p111
    %p114 = scmp.ne.s32.totalorder %s97, %s113
    %p115 = scmp.eq.s32.totalorder %s16, 0
    %p116 = por %p114, %p115
    %p117 = scmp.le.s32.totalorder 1, %s10
    %p118 = scmp.lt.s32.totalorder %s10, 4
    %p119 = pnand %p117, %p118
    %p120 = pneg %p119
    // Predicated region
    $region9: #{ema_update.3} parent=5 // pred_check
      _
    $region10: #{ema_update.3} parent=5 // pred_check_branch
      %122 = sbr.rel (%p119) target = $region12
    $region11: #{ema_update.3} parent=5 // pred_region
      %s123 = ssub.s32 %s10, 1
      // Predicated region
      $region13: #{ema_update.3} parent=11 // pred_check
        %p124 = pneg %p31
      $region14: #{ema_update.3} parent=11 // pred_check_branch
        %126 = sbr.rel (%p124) target = $region16
      $region15: #{ema_update.3} parent=11 // pred_region
        _
      $region16: #{ema_update.3} parent=11 // pred_fallthru
        _
    $region12: #{ema_update.3} parent=5 // pred_fallthru
      _
    %p127 = scmp.lt.s32.totalorder %s10, 3
    // Predicated region
    $region17: #{ema_update.3} parent=5 // pred_check
      %p128 = pneg %p127
    $region18: #{ema_update.3} parent=5 // pred_check_branch
      %130 = sbr.rel (%p128) target = $region20
    $region19: #{ema_update.3} parent=5 // pred_region
      // Predicated region
      $region21: #{ema_update.3} parent=19 // pred_check
        %p131 = pneg %p51
      $region22: #{ema_update.3} parent=19 // pred_check_branch
        %133 = sbr.rel (%p131) target = $region24
      $region23: #{ema_update.3} parent=19 // pred_region
        %s134 = smul.u32 64, %s10
        %p135 = scmp.lt.s32.totalorder %s134, 191
        %s136 = scalar_select %p135, %s134, 191
        %s137 = smul.addr %s136, 4
        %s138 = smul.addr %s137, 8
        %s139 = scalar_lea.vmem %s1, %s138
        %s140 = smul.u32 64, %s10
      $region24: #{ema_update.3} parent=19 // pred_fallthru
        _
      // Predicated region
      $region25: #{ema_update.3} parent=19 // pred_check
        %p141 = pneg %p77
      $region26: #{ema_update.3} parent=19 // pred_check_branch
        %143 = sbr.rel (%p141) target = $region28
      $region27: #{ema_update.3} parent=19 // pred_region
        %s144 = smul.u32 64, %s10
        %p145 = scmp.lt.s32.totalorder %s144, 191
        %s146 = scalar_select %p145, %s144, 191
        %s147 = smul.addr %s146, 4
        %s148 = smul.addr %s147, 8
        %s149 = scalar_lea.vmem %s2, %s148
        %s150 = smul.u32 64, %s10
      $region28: #{ema_update.3} parent=19 // pred_fallthru
        _
    $region20: #{ema_update.3} parent=5 // pred_fallthru
      _
    %p151 = scmp.le.s32.totalorder 1, %s10
    %p152 = scmp.lt.s32.totalorder %s10, 4
    %p153 = pnand %p151, %p152
    %p154 = pneg %p153
    // Predicated region
    $region29: #{ema_update.3} parent=5 // pred_check
      _
    $region30: #{ema_update.3} parent=5 // pred_check_branch
      %156 = sbr.rel (%p153) target = $region32
    $region31: #{ema_update.3} parent=5 // pred_region
      %s157 = ssub.s32 %s10, 1
      %p158 = pneg %p31
      %p159 = pneg %p28
      %s160 = smul.u32 64, %s15
      %p161 = scmp.lt.s32.totalorder %s160, 191
      %s162 = scalar_select %p161, %s160, 191
      %s163 = smul.addr %s162, 4
      %s164 = smul.addr %s163, 8
      %s165 = scalar_lea.vmem %s1, %s164
      %p166 = pneg %p57
      %p167 = pneg %p54
      %s168 = smul.u32 64, %s15
      %p169 = scmp.lt.s32.totalorder %s168, 191
      %s170 = scalar_select %p169, %s168, 191
      %s171 = smul.addr %s170, 4
      %s172 = smul.addr %s171, 8
      %s173 = scalar_lea.vmem %s2, %s172
      %p174 = pneg %p83
      %p175 = pneg %p80
      %p176 = pneg %p109
      %p177 = pneg %p106
      %s178 = smul.u32 64, %s15
      %p179 = scmp.lt.s32.totalorder %s178, 191
      %s180 = scalar_select %p179, %s178, 191
      %s181 = smul.addr %s180, 4
      %s182 = smul.addr %s181, 8
      %s183 = scalar_lea.vmem %s3, %s182
      %s184 = smul.u32 64, %s15
      %p185 = scmp.lt.s32.totalorder %s184, 191
      %s186 = scalar_select %p185, %s184, 191
      %s187 = smul.addr %s186, 4
      %s188 = smul.addr %s187, 8
      %s189 = scalar_lea.vmem %s1, %s188
      %s190 = smul.u32 64, %s15
      %s191 = smul.u32 64, %s15
      %p192 = scmp.lt.s32.totalorder %s191, 191
      %s193 = scalar_select %p192, %s191, 191
      %s194 = smul.addr %s193, 4
      %s195 = smul.addr %s194, 8
      %s196 = scalar_lea.vmem %s2, %s195
      %s197 = smul.u32 64, %s15
      %s198 = smul.u32 64, %s15
      %p199 = scmp.lt.s32.totalorder %s198, 191
      %s200 = scalar_select %p199, %s198, 191
      %s201 = smul.addr %s200, 4
      %s202 = smul.addr %s201, 8
      %s203 = scalar_lea.vmem %s3, %s202
      %s204 = smul.u32 64, %s15
      %s205 = sld [smem:[#allocation2]]
      %v206 = vld [vmem:[%s189] sm:$0xff]
      %v207 = vld [vmem:[%s189 + $0x8] sm:$0xff]
      %v208 = vld [vmem:[%s189 + $0x10] sm:$0xff]
      %v209 = vld [vmem:[%s189 + $0x18] sm:$0xff]
      %v210 = vld [vmem:[%s189 + $0x20] sm:$0xff]
      %v211 = vld [vmem:[%s189 + $0x28] sm:$0xff]
      %v212 = vld [vmem:[%s189 + $0x30] sm:$0xff]
      %v213 = vld [vmem:[%s189 + $0x38] sm:$0xff]
      %v214 = vld [vmem:[%s189 + $0x40] sm:$0xff]
      %v215 = vld [vmem:[%s189 + $0x48] sm:$0xff]
      %v216 = vld [vmem:[%s189 + $0x50] sm:$0xff]
      %v217 = vld [vmem:[%s189 + $0x58] sm:$0xff]
      %v218 = vld [vmem:[%s189 + $0x60] sm:$0xff]
      %v219 = vld [vmem:[%s189 + $0x68] sm:$0xff]
      %v220 = vld [vmem:[%s189 + $0x70] sm:$0xff]
      %v221 = vld [vmem:[%s189 + $0x78] sm:$0xff]
      %v222 = vld [vmem:[%s189 + $0x80] sm:$0xff]
      %v223 = vld [vmem:[%s189 + $0x88] sm:$0xff]
      %v224 = vld [vmem:[%s189 + $0x90] sm:$0xff]
      %v225 = vld [vmem:[%s189 + $0x98] sm:$0xff]
      %v226 = vld [vmem:[%s189 + $0xa0] sm:$0xff]
      %v227 = vld [vmem:[%s189 + $0xa8] sm:$0xff]
      %v228 = vld [vmem:[%s189 + $0xb0] sm:$0xff]
      %v229 = vld [vmem:[%s189 + $0xb8] sm:$0xff]
      %v230 = vld [vmem:[%s189 + $0xc0] sm:$0xff]
      %v231 = vld [vmem:[%s189 + $0xc8] sm:$0xff]
      %v232 = vld [vmem:[%s189 + $0xd0] sm:$0xff]
      %v233 = vld [vmem:[%s189 + $0xd8] sm:$0xff]
      %v234 = vld [vmem:[%s189 + $0xe0] sm:$0xff]
      %v235 = vld [vmem:[%s189 + $0xe8] sm:$0xff]
      %v236 = vld [vmem:[%s189 + $0xf0] sm:$0xff]
      %v237 = vld [vmem:[%s189 + $0xf8] sm:$0xff]
      %v238 = vld [vmem:[%s189 + $0x100] sm:$0xff]
      %v239 = vld [vmem:[%s189 + $0x108] sm:$0xff]
      %v240 = vld [vmem:[%s189 + $0x110] sm:$0xff]
      %v241 = vld [vmem:[%s189 + $0x118] sm:$0xff]
      %v242 = vld [vmem:[%s189 + $0x120] sm:$0xff]
      %v243 = vld [vmem:[%s189 + $0x128] sm:$0xff]
      %v244 = vld [vmem:[%s189 + $0x130] sm:$0xff]
      %v245 = vld [vmem:[%s189 + $0x138] sm:$0xff]
      %v246 = vld [vmem:[%s189 + $0x140] sm:$0xff]
      %v247 = vld [vmem:[%s189 + $0x148] sm:$0xff]
      %v248 = vld [vmem:[%s189 + $0x150] sm:$0xff]
      %v249 = vld [vmem:[%s189 + $0x158] sm:$0xff]
      %v250 = vld [vmem:[%s189 + $0x160] sm:$0xff]
      %v251 = vld [vmem:[%s189 + $0x168] sm:$0xff]
      %v252 = vld [vmem:[%s189 + $0x170] sm:$0xff]
      %v253 = vld [vmem:[%s189 + $0x178] sm:$0xff]
      %v254 = vld [vmem:[%s189 + $0x180] sm:$0xff]
      %v255 = vld [vmem:[%s189 + $0x188] sm:$0xff]
      %v256 = vld [vmem:[%s189 + $0x190] sm:$0xff]
      %v257 = vld [vmem:[%s189 + $0x198] sm:$0xff]
      %v258 = vld [vmem:[%s189 + $0x1a0] sm:$0xff]
      %v259 = vld [vmem:[%s189 + $0x1a8] sm:$0xff]
      %v260 = vld [vmem:[%s189 + $0x1b0] sm:$0xff]
      %v261 = vld [vmem:[%s189 + $0x1b8] sm:$0xff]
      %v262 = vld [vmem:[%s189 + $0x1c0] sm:$0xff]
      %v263 = vld [vmem:[%s189 + $0x1c8] sm:$0xff]
      %v264 = vld [vmem:[%s189 + $0x1d0] sm:$0xff]
      %v265 = vld [vmem:[%s189 + $0x1d8] sm:$0xff]
      %v266 = vld [vmem:[%s189 + $0x1e0] sm:$0xff]
      %v267 = vld [vmem:[%s189 + $0x1e8] sm:$0xff]
      %v268 = vld [vmem:[%s189 + $0x1f0] sm:$0xff]
      %v269 = vld [vmem:[%s189 + $0x1f8] sm:$0xff]
      %v270 = vld [vmem:[%s189 + $0x200] sm:$0xff]
      %v271 = vld [vmem:[%s189 + $0x208] sm:$0xff]
      %v272 = vld [vmem:[%s189 + $0x210] sm:$0xff]
      %v273 = vld [vmem:[%s189 + $0x218] sm:$0xff]
      %v274 = vld [vmem:[%s189 + $0x220] sm:$0xff]
      %v275 = vld [vmem:[%s189 + $0x228] sm:$0xff]
      %v276 = vld [vmem:[%s189 + $0x230] sm:$0xff]
      %v277 = vld [vmem:[%s189 + $0x238] sm:$0xff]
      %v278 = vld [vmem:[%s189 + $0x240] sm:$0xff]
      %v279 = vld [vmem:[%s189 + $0x248] sm:$0xff]
      %v280 = vld [vmem:[%s189 + $0x250] sm:$0xff]
      %v281 = vld [vmem:[%s189 + $0x258] sm:$0xff]
      %v282 = vld [vmem:[%s189 + $0x260] sm:$0xff]
      %v283 = vld [vmem:[%s189 + $0x268] sm:$0xff]
      %v284 = vld [vmem:[%s189 + $0x270] sm:$0xff]
      %v285 = vld [vmem:[%s189 + $0x278] sm:$0xff]
      %v286 = vld [vmem:[%s189 + $0x280] sm:$0xff]
      %v287 = vld [vmem:[%s189 + $0x288] sm:$0xff]
      %v288 = vld [vmem:[%s189 + $0x290] sm:$0xff]
      %v289 = vld [vmem:[%s189 + $0x298] sm:$0xff]
      %v290 = vld [vmem:[%s189 + $0x2a0] sm:$0xff]
      %v291 = vld [vmem:[%s189 + $0x2a8] sm:$0xff]
      %v292 = vld [vmem:[%s189 + $0x2b0] sm:$0xff]
      %v293 = vld [vmem:[%s189 + $0x2b8] sm:$0xff]
      %v294 = vld [vmem:[%s189 + $0x2c0] sm:$0xff]
      %v295 = vld [vmem:[%s189 + $0x2c8] sm:$0xff]
      %v296 = vld [vmem:[%s189 + $0x2d0] sm:$0xff]
      %v297 = vld [vmem:[%s189 + $0x2d8] sm:$0xff]
      %v298 = vld [vmem:[%s189 + $0x2e0] sm:$0xff]
      %v299 = vld [vmem:[%s189 + $0x2e8] sm:$0xff]
      %v300 = vld [vmem:[%s189 + $0x2f0] sm:$0xff]
      %v301 = vld [vmem:[%s189 + $0x2f8] sm:$0xff]
      %v302 = vld [vmem:[%s189 + $0x300] sm:$0xff]
      %v303 = vld [vmem:[%s189 + $0x308] sm:$0xff]
      %v304 = vld [vmem:[%s189 + $0x310] sm:$0xff]
      %v305 = vld [vmem:[%s189 + $0x318] sm:$0xff]
      %v306 = vld [vmem:[%s189 + $0x320] sm:$0xff]
      %v307 = vld [vmem:[%s189 + $0x328] sm:$0xff]
      %v308 = vld [vmem:[%s189 + $0x330] sm:$0xff]
      %v309 = vld [vmem:[%s189 + $0x338] sm:$0xff]
      %v310 = vld [vmem:[%s189 + $0x340] sm:$0xff]
      %v311 = vld [vmem:[%s189 + $0x348] sm:$0xff]
      %v312 = vld [vmem:[%s189 + $0x350] sm:$0xff]
      %v313 = vld [vmem:[%s189 + $0x358] sm:$0xff]
      %v314 = vld [vmem:[%s189 + $0x360] sm:$0xff]
      %v315 = vld [vmem:[%s189 + $0x368] sm:$0xff]
      %v316 = vld [vmem:[%s189 + $0x370] sm:$0xff]
      %v317 = vld [vmem:[%s189 + $0x378] sm:$0xff]
      %v318 = vld [vmem:[%s189 + $0x380] sm:$0xff]
      %v319 = vld [vmem:[%s189 + $0x388] sm:$0xff]
      %v320 = vld [vmem:[%s189 + $0x390] sm:$0xff]
      %v321 = vld [vmem:[%s189 + $0x398] sm:$0xff]
      %v322 = vld [vmem:[%s189 + $0x3a0] sm:$0xff]
      %v323 = vld [vmem:[%s189 + $0x3a8] sm:$0xff]
      %v324 = vld [vmem:[%s189 + $0x3b0] sm:$0xff]
      %v325 = vld [vmem:[%s189 + $0x3b8] sm:$0xff]
      %v326 = vld [vmem:[%s189 + $0x3c0] sm:$0xff]
      %v327 = vld [vmem:[%s189 + $0x3c8] sm:$0xff]
      %v328 = vld [vmem:[%s189 + $0x3d0] sm:$0xff]
      %v329 = vld [vmem:[%s189 + $0x3d8] sm:$0xff]
      %v330 = vld [vmem:[%s189 + $0x3e0] sm:$0xff]
      %v331 = vld [vmem:[%s189 + $0x3e8] sm:$0xff]
      %v332 = vld [vmem:[%s189 + $0x3f0] sm:$0xff]
      %v333 = vld [vmem:[%s189 + $0x3f8] sm:$0xff]
      %v334 = vld [vmem:[%s189 + $0x400] sm:$0xff]
      %v335 = vld [vmem:[%s189 + $0x408] sm:$0xff]
      %v336 = vld [vmem:[%s189 + $0x410] sm:$0xff]
      %v337 = vld [vmem:[%s189 + $0x418] sm:$0xff]
      %v338 = vld [vmem:[%s189 + $0x420] sm:$0xff]
      %v339 = vld [vmem:[%s189 + $0x428] sm:$0xff]
      %v340 = vld [vmem:[%s189 + $0x430] sm:$0xff]
      %v341 = vld [vmem:[%s189 + $0x438] sm:$0xff]
      %v342 = vld [vmem:[%s189 + $0x440] sm:$0xff]
      %v343 = vld [vmem:[%s189 + $0x448] sm:$0xff]
      %v344 = vld [vmem:[%s189 + $0x450] sm:$0xff]
      %v345 = vld [vmem:[%s189 + $0x458] sm:$0xff]
      %v346 = vld [vmem:[%s189 + $0x460] sm:$0xff]
      %v347 = vld [vmem:[%s189 + $0x468] sm:$0xff]
      %v348 = vld [vmem:[%s189 + $0x470] sm:$0xff]
      %v349 = vld [vmem:[%s189 + $0x478] sm:$0xff]
      %v350 = vld [vmem:[%s189 + $0x480] sm:$0xff]
      %v351 = vld [vmem:[%s189 + $0x488] sm:$0xff]
      %v352 = vld [vmem:[%s189 + $0x490] sm:$0xff]
      %v353 = vld [vmem:[%s189 + $0x498] sm:$0xff]
      %v354 = vld [vmem:[%s189 + $0x4a0] sm:$0xff]
      %v355 = vld [vmem:[%s189 + $0x4a8] sm:$0xff]
      %v356 = vld [vmem:[%s189 + $0x4b0] sm:$0xff]
      %v357 = vld [vmem:[%s189 + $0x4b8] sm:$0xff]
      %v358 = vld [vmem:[%s189 + $0x4c0] sm:$0xff]
      %v359 = vld [vmem:[%s189 + $0x4c8] sm:$0xff]
      %v360 = vld [vmem:[%s189 + $0x4d0] sm:$0xff]
      %v361 = vld [vmem:[%s189 + $0x4d8] sm:$0xff]
      %v362 = vld [vmem:[%s189 + $0x4e0] sm:$0xff]
      %v363 = vld [vmem:[%s189 + $0x4e8] sm:$0xff]
      %v364 = vld [vmem:[%s189 + $0x4f0] sm:$0xff]
      %v365 = vld [vmem:[%s189 + $0x4f8] sm:$0xff]
      %v366 = vld [vmem:[%s189 + $0x500] sm:$0xff]
      %v367 = vld [vmem:[%s189 + $0x508] sm:$0xff]
      %v368 = vld [vmem:[%s189 + $0x510] sm:$0xff]
      %v369 = vld [vmem:[%s189 + $0x518] sm:$0xff]
      %v370 = vld [vmem:[%s189 + $0x520] sm:$0xff]
      %v371 = vld [vmem:[%s189 + $0x528] sm:$0xff]
      %v372 = vld [vmem:[%s189 + $0x530] sm:$0xff]
      %v373 = vld [vmem:[%s189 + $0x538] sm:$0xff]
      %v374 = vld [vmem:[%s189 + $0x540] sm:$0xff]
      %v375 = vld [vmem:[%s189 + $0x548] sm:$0xff]
      %v376 = vld [vmem:[%s189 + $0x550] sm:$0xff]
      %v377 = vld [vmem:[%s189 + $0x558] sm:$0xff]
      %v378 = vld [vmem:[%s189 + $0x560] sm:$0xff]
      %v379 = vld [vmem:[%s189 + $0x568] sm:$0xff]
      %v380 = vld [vmem:[%s189 + $0x570] sm:$0xff]
      %v381 = vld [vmem:[%s189 + $0x578] sm:$0xff]
      %v382 = vld [vmem:[%s189 + $0x580] sm:$0xff]
      %v383 = vld [vmem:[%s189 + $0x588] sm:$0xff]
      %v384 = vld [vmem:[%s189 + $0x590] sm:$0xff]
      %v385 = vld [vmem:[%s189 + $0x598] sm:$0xff]
      %v386 = vld [vmem:[%s189 + $0x5a0] sm:$0xff]
      %v387 = vld [vmem:[%s189 + $0x5a8] sm:$0xff]
      %v388 = vld [vmem:[%s189 + $0x5b0] sm:$0xff]
      %v389 = vld [vmem:[%s189 + $0x5b8] sm:$0xff]
      %v390 = vld [vmem:[%s189 + $0x5c0] sm:$0xff]
      %v391 = vld [vmem:[%s189 + $0x5c8] sm:$0xff]
      %v392 = vld [vmem:[%s189 + $0x5d0] sm:$0xff]
      %v393 = vld [vmem:[%s189 + $0x5d8] sm:$0xff]
      %v394 = vld [vmem:[%s189 + $0x5e0] sm:$0xff]
      %v395 = vld [vmem:[%s189 + $0x5e8] sm:$0xff]
      %v396 = vld [vmem:[%s189 + $0x5f0] sm:$0xff]
      %v397 = vld [vmem:[%s189 + $0x5f8] sm:$0xff]
      %v398 = vld [vmem:[%s189 + $0x600] sm:$0xff]
      %v399 = vld [vmem:[%s189 + $0x608] sm:$0xff]
      %v400 = vld [vmem:[%s189 + $0x610] sm:$0xff]
      %v401 = vld [vmem:[%s189 + $0x618] sm:$0xff]
      %v402 = vld [vmem:[%s189 + $0x620] sm:$0xff]
      %v403 = vld [vmem:[%s189 + $0x628] sm:$0xff]
      %v404 = vld [vmem:[%s189 + $0x630] sm:$0xff]
      %v405 = vld [vmem:[%s189 + $0x638] sm:$0xff]
      %v406 = vld [vmem:[%s189 + $0x640] sm:$0xff]
      %v407 = vld [vmem:[%s189 + $0x648] sm:$0xff]
      %v408 = vld [vmem:[%s189 + $0x650] sm:$0xff]
      %v409 = vld [vmem:[%s189 + $0x658] sm:$0xff]
      %v410 = vld [vmem:[%s189 + $0x660] sm:$0xff]
      %v411 = vld [vmem:[%s189 + $0x668] sm:$0xff]
      %v412 = vld [vmem:[%s189 + $0x670] sm:$0xff]
      %v413 = vld [vmem:[%s189 + $0x678] sm:$0xff]
      %v414 = vld [vmem:[%s189 + $0x680] sm:$0xff]
      %v415 = vld [vmem:[%s189 + $0x688] sm:$0xff]
      %v416 = vld [vmem:[%s189 + $0x690] sm:$0xff]
      %v417 = vld [vmem:[%s189 + $0x698] sm:$0xff]
      %v418 = vld [vmem:[%s189 + $0x6a0] sm:$0xff]
      %v419 = vld [vmem:[%s189 + $0x6a8] sm:$0xff]
      %v420 = vld [vmem:[%s189 + $0x6b0] sm:$0xff]
      %v421 = vld [vmem:[%s189 + $0x6b8] sm:$0xff]
      %v422 = vld [vmem:[%s189 + $0x6c0] sm:$0xff]
      %v423 = vld [vmem:[%s189 + $0x6c8] sm:$0xff]
      %v424 = vld [vmem:[%s189 + $0x6d0] sm:$0xff]
      %v425 = vld [vmem:[%s189 + $0x6d8] sm:$0xff]
      %v426 = vld [vmem:[%s189 + $0x6e0] sm:$0xff]
      %v427 = vld [vmem:[%s189 + $0x6e8] sm:$0xff]
      %v428 = vld [vmem:[%s189 + $0x6f0] sm:$0xff]
      %v429 = vld [vmem:[%s189 + $0x6f8] sm:$0xff]
      %v430 = vld [vmem:[%s189 + $0x700] sm:$0xff]
      %v431 = vld [vmem:[%s189 + $0x708] sm:$0xff]
      %v432 = vld [vmem:[%s189 + $0x710] sm:$0xff]
      %v433 = vld [vmem:[%s189 + $0x718] sm:$0xff]
      %v434 = vld [vmem:[%s189 + $0x720] sm:$0xff]
      %v435 = vld [vmem:[%s189 + $0x728] sm:$0xff]
      %v436 = vld [vmem:[%s189 + $0x730] sm:$0xff]
      %v437 = vld [vmem:[%s189 + $0x738] sm:$0xff]
      %v438 = vld [vmem:[%s189 + $0x740] sm:$0xff]
      %v439 = vld [vmem:[%s189 + $0x748] sm:$0xff]
      %v440 = vld [vmem:[%s189 + $0x750] sm:$0xff]
      %v441 = vld [vmem:[%s189 + $0x758] sm:$0xff]
      %v442 = vld [vmem:[%s189 + $0x760] sm:$0xff]
      %v443 = vld [vmem:[%s189 + $0x768] sm:$0xff]
      %v444 = vld [vmem:[%s189 + $0x770] sm:$0xff]
      %v445 = vld [vmem:[%s189 + $0x778] sm:$0xff]
      %v446 = vld [vmem:[%s189 + $0x780] sm:$0xff]
      %v447 = vld [vmem:[%s189 + $0x788] sm:$0xff]
      %v448 = vld [vmem:[%s189 + $0x790] sm:$0xff]
      %v449 = vld [vmem:[%s189 + $0x798] sm:$0xff]
      %v450 = vld [vmem:[%s189 + $0x7a0] sm:$0xff]
      %v451 = vld [vmem:[%s189 + $0x7a8] sm:$0xff]
      %v452 = vld [vmem:[%s189 + $0x7b0] sm:$0xff]
      %v453 = vld [vmem:[%s189 + $0x7b8] sm:$0xff]
      %v454 = vld [vmem:[%s189 + $0x7c0] sm:$0xff]
      %v455 = vld [vmem:[%s189 + $0x7c8] sm:$0xff]
      %v456 = vld [vmem:[%s189 + $0x7d0] sm:$0xff]
      %v457 = vld [vmem:[%s189 + $0x7d8] sm:$0xff]
      %v458 = vld [vmem:[%s189 + $0x7e0] sm:$0xff]
      %v459 = vld [vmem:[%s189 + $0x7e8] sm:$0xff]
      %v460 = vld [vmem:[%s189 + $0x7f0] sm:$0xff]
      %v461 = vld [vmem:[%s189 + $0x7f8] sm:$0xff]
      %v462 = vld [vmem:[%s196] sm:$0xff]
      %v463 = vld [vmem:[%s196 + $0x8] sm:$0xff]
      %v464 = vld [vmem:[%s196 + $0x10] sm:$0xff]
      %v465 = vld [vmem:[%s196 + $0x18] sm:$0xff]
      %v466 = vld [vmem:[%s196 + $0x20] sm:$0xff]
      %v467 = vld [vmem:[%s196 + $0x28] sm:$0xff]
      %v468 = vld [vmem:[%s196 + $0x30] sm:$0xff]
      %v469 = vld [vmem:[%s196 + $0x38] sm:$0xff]
      %v470 = vld [vmem:[%s196 + $0x40] sm:$0xff]
      %v471 = vld [vmem:[%s196 + $0x48] sm:$0xff]
      %v472 = vld [vmem:[%s196 + $0x50] sm:$0xff]
      %v473 = vld [vmem:[%s196 + $0x58] sm:$0xff]
      %v474 = vld [vmem:[%s196 + $0x60] sm:$0xff]
      %v475 = vld [vmem:[%s196 + $0x68] sm:$0xff]
      %v476 = vld [vmem:[%s196 + $0x70] sm:$0xff]
      %v477 = vld [vmem:[%s196 + $0x78] sm:$0xff]
      %v478 = vld [vmem:[%s196 + $0x80] sm:$0xff]
      %v479 = vld [vmem:[%s196 + $0x88] sm:$0xff]
      %v480 = vld [vmem:[%s196 + $0x90] sm:$0xff]
      %v481 = vld [vmem:[%s196 + $0x98] sm:$0xff]
      %v482 = vld [vmem:[%s196 + $0xa0] sm:$0xff]
      %v483 = vld [vmem:[%s196 + $0xa8] sm:$0xff]
      %v484 = vld [vmem:[%s196 + $0xb0] sm:$0xff]
      %v485 = vld [vmem:[%s196 + $0xb8] sm:$0xff]
      %v486 = vld [vmem:[%s196 + $0xc0] sm:$0xff]
      %v487 = vld [vmem:[%s196 + $0xc8] sm:$0xff]
      %v488 = vld [vmem:[%s196 + $0xd0] sm:$0xff]
      %v489 = vld [vmem:[%s196 + $0xd8] sm:$0xff]
      %v490 = vld [vmem:[%s196 + $0xe0] sm:$0xff]
      %v491 = vld [vmem:[%s196 + $0xe8] sm:$0xff]
      %v492 = vld [vmem:[%s196 + $0xf0] sm:$0xff]
      %v493 = vld [vmem:[%s196 + $0xf8] sm:$0xff]
      %v494 = vld [vmem:[%s196 + $0x100] sm:$0xff]
      %v495 = vld [vmem:[%s196 + $0x108] sm:$0xff]
      %v496 = vld [vmem:[%s196 + $0x110] sm:$0xff]
      %v497 = vld [vmem:[%s196 + $0x118] sm:$0xff]
      %v498 = vld [vmem:[%s196 + $0x120] sm:$0xff]
      %v499 = vld [vmem:[%s196 + $0x128] sm:$0xff]
      %v500 = vld [vmem:[%s196 + $0x130] sm:$0xff]
      %v501 = vld [vmem:[%s196 + $0x138] sm:$0xff]
      %v502 = vld [vmem:[%s196 + $0x140] sm:$0xff]
      %v503 = vld [vmem:[%s196 + $0x148] sm:$0xff]
      %v504 = vld [vmem:[%s196 + $0x150] sm:$0xff]
      %v505 = vld [vmem:[%s196 + $0x158] sm:$0xff]
      %v506 = vld [vmem:[%s196 + $0x160] sm:$0xff]
      %v507 = vld [vmem:[%s196 + $0x168] sm:$0xff]
      %v508 = vld [vmem:[%s196 + $0x170] sm:$0xff]
      %v509 = vld [vmem:[%s196 + $0x178] sm:$0xff]
      %v510 = vld [vmem:[%s196 + $0x180] sm:$0xff]
      %v511 = vld [vmem:[%s196 + $0x188] sm:$0xff]
      %v512 = vld [vmem:[%s196 + $0x190] sm:$0xff]
      %v513 = vld [vmem:[%s196 + $0x198] sm:$0xff]
      %v514 = vld [vmem:[%s196 + $0x1a0] sm:$0xff]
      %v515 = vld [vmem:[%s196 + $0x1a8] sm:$0xff]
      %v516 = vld [vmem:[%s196 + $0x1b0] sm:$0xff]
      %v517 = vld [vmem:[%s196 + $0x1b8] sm:$0xff]
      %v518 = vld [vmem:[%s196 + $0x1c0] sm:$0xff]
      %v519 = vld [vmem:[%s196 + $0x1c8] sm:$0xff]
      %v520 = vld [vmem:[%s196 + $0x1d0] sm:$0xff]
      %v521 = vld [vmem:[%s196 + $0x1d8] sm:$0xff]
      %v522 = vld [vmem:[%s196 + $0x1e0] sm:$0xff]
      %v523 = vld [vmem:[%s196 + $0x1e8] sm:$0xff]
      %v524 = vld [vmem:[%s196 + $0x1f0] sm:$0xff]
      %v525 = vld [vmem:[%s196 + $0x1f8] sm:$0xff]
      %v526 = vld [vmem:[%s196 + $0x200] sm:$0xff]
      %v527 = vld [vmem:[%s196 + $0x208] sm:$0xff]
      %v528 = vld [vmem:[%s196 + $0x210] sm:$0xff]
      %v529 = vld [vmem:[%s196 + $0x218] sm:$0xff]
      %v530 = vld [vmem:[%s196 + $0x220] sm:$0xff]
      %v531 = vld [vmem:[%s196 + $0x228] sm:$0xff]
      %v532 = vld [vmem:[%s196 + $0x230] sm:$0xff]
      %v533 = vld [vmem:[%s196 + $0x238] sm:$0xff]
      %v534 = vld [vmem:[%s196 + $0x240] sm:$0xff]
      %v535 = vld [vmem:[%s196 + $0x248] sm:$0xff]
      %v536 = vld [vmem:[%s196 + $0x250] sm:$0xff]
      %v537 = vld [vmem:[%s196 + $0x258] sm:$0xff]
      %v538 = vld [vmem:[%s196 + $0x260] sm:$0xff]
      %v539 = vld [vmem:[%s196 + $0x268] sm:$0xff]
      %v540 = vld [vmem:[%s196 + $0x270] sm:$0xff]
      %v541 = vld [vmem:[%s196 + $0x278] sm:$0xff]
      %v542 = vld [vmem:[%s196 + $0x280] sm:$0xff]
      %v543 = vld [vmem:[%s196 + $0x288] sm:$0xff]
      %v544 = vld [vmem:[%s196 + $0x290] sm:$0xff]
      %v545 = vld [vmem:[%s196 + $0x298] sm:$0xff]
      %v546 = vld [vmem:[%s196 + $0x2a0] sm:$0xff]
      %v547 = vld [vmem:[%s196 + $0x2a8] sm:$0xff]
      %v548 = vld [vmem:[%s196 + $0x2b0] sm:$0xff]
      %v549 = vld [vmem:[%s196 + $0x2b8] sm:$0xff]
      %v550 = vld [vmem:[%s196 + $0x2c0] sm:$0xff]
      %v551 = vld [vmem:[%s196 + $0x2c8] sm:$0xff]
      %v552 = vld [vmem:[%s196 + $0x2d0] sm:$0xff]
      %v553 = vld [vmem:[%s196 + $0x2d8] sm:$0xff]
      %v554 = vld [vmem:[%s196 + $0x2e0] sm:$0xff]
      %v555 = vld [vmem:[%s196 + $0x2e8] sm:$0xff]
      %v556 = vld [vmem:[%s196 + $0x2f0] sm:$0xff]
      %v557 = vld [vmem:[%s196 + $0x2f8] sm:$0xff]
      %v558 = vld [vmem:[%s196 + $0x300] sm:$0xff]
      %v559 = vld [vmem:[%s196 + $0x308] sm:$0xff]
      %v560 = vld [vmem:[%s196 + $0x310] sm:$0xff]
      %v561 = vld [vmem:[%s196 + $0x318] sm:$0xff]
      %v562 = vld [vmem:[%s196 + $0x320] sm:$0xff]
      %v563 = vld [vmem:[%s196 + $0x328] sm:$0xff]
      %v564 = vld [vmem:[%s196 + $0x330] sm:$0xff]
      %v565 = vld [vmem:[%s196 + $0x338] sm:$0xff]
      %v566 = vld [vmem:[%s196 + $0x340] sm:$0xff]
      %v567 = vld [vmem:[%s196 + $0x348] sm:$0xff]
      %v568 = vld [vmem:[%s196 + $0x350] sm:$0xff]
      %v569 = vld [vmem:[%s196 + $0x358] sm:$0xff]
      %v570 = vld [vmem:[%s196 + $0x360] sm:$0xff]
      %v571 = vld [vmem:[%s196 + $0x368] sm:$0xff]
      %v572 = vld [vmem:[%s196 + $0x370] sm:$0xff]
      %v573 = vld [vmem:[%s196 + $0x378] sm:$0xff]
      %v574 = vld [vmem:[%s196 + $0x380] sm:$0xff]
      %v575 = vld [vmem:[%s196 + $0x388] sm:$0xff]
      %v576 = vld [vmem:[%s196 + $0x390] sm:$0xff]
      %v577 = vld [vmem:[%s196 + $0x398] sm:$0xff]
      %v578 = vld [vmem:[%s196 + $0x3a0] sm:$0xff]
      %v579 = vld [vmem:[%s196 + $0x3a8] sm:$0xff]
      %v580 = vld [vmem:[%s196 + $0x3b0] sm:$0xff]
      %v581 = vld [vmem:[%s196 + $0x3b8] sm:$0xff]
      %v582 = vld [vmem:[%s196 + $0x3c0] sm:$0xff]
      %v583 = vld [vmem:[%s196 + $0x3c8] sm:$0xff]
      %v584 = vld [vmem:[%s196 + $0x3d0] sm:$0xff]
      %v585 = vld [vmem:[%s196 + $0x3d8] sm:$0xff]
      %v586 = vld [vmem:[%s196 + $0x3e0] sm:$0xff]
      %v587 = vld [vmem:[%s196 + $0x3e8] sm:$0xff]
      %v588 = vld [vmem:[%s196 + $0x3f0] sm:$0xff]
      %v589 = vld [vmem:[%s196 + $0x3f8] sm:$0xff]
      %v590 = vld [vmem:[%s196 + $0x400] sm:$0xff]
      %v591 = vld [vmem:[%s196 + $0x408] sm:$0xff]
      %v592 = vld [vmem:[%s196 + $0x410] sm:$0xff]
      %v593 = vld [vmem:[%s196 + $0x418] sm:$0xff]
      %v594 = vld [vmem:[%s196 + $0x420] sm:$0xff]
      %v595 = vld [vmem:[%s196 + $0x428] sm:$0xff]
      %v596 = vld [vmem:[%s196 + $0x430] sm:$0xff]
      %v597 = vld [vmem:[%s196 + $0x438] sm:$0xff]
      %v598 = vld [vmem:[%s196 + $0x440] sm:$0xff]
      %v599 = vld [vmem:[%s196 + $0x448] sm:$0xff]
      %v600 = vld [vmem:[%s196 + $0x450] sm:$0xff]
      %v601 = vld [vmem:[%s196 + $0x458] sm:$0xff]
      %v602 = vld [vmem:[%s196 + $0x460] sm:$0xff]
      %v603 = vld [vmem:[%s196 + $0x468] sm:$0xff]
      %v604 = vld [vmem:[%s196 + $0x470] sm:$0xff]
      %v605 = vld [vmem:[%s196 + $0x478] sm:$0xff]
      %v606 = vld [vmem:[%s196 + $0x480] sm:$0xff]
      %v607 = vld [vmem:[%s196 + $0x488] sm:$0xff]
      %v608 = vld [vmem:[%s196 + $0x490] sm:$0xff]
      %v609 = vld [vmem:[%s196 + $0x498] sm:$0xff]
      %v610 = vld [vmem:[%s196 + $0x4a0] sm:$0xff]
      %v611 = vld [vmem:[%s196 + $0x4a8] sm:$0xff]
      %v612 = vld [vmem:[%s196 + $0x4b0] sm:$0xff]
      %v613 = vld [vmem:[%s196 + $0x4b8] sm:$0xff]
      %v614 = vld [vmem:[%s196 + $0x4c0] sm:$0xff]
      %v615 = vld [vmem:[%s196 + $0x4c8] sm:$0xff]
      %v616 = vld [vmem:[%s196 + $0x4d0] sm:$0xff]
      %v617 = vld [vmem:[%s196 + $0x4d8] sm:$0xff]
      %v618 = vld [vmem:[%s196 + $0x4e0] sm:$0xff]
      %v619 = vld [vmem:[%s196 + $0x4e8] sm:$0xff]
      %v620 = vld [vmem:[%s196 + $0x4f0] sm:$0xff]
      %v621 = vld [vmem:[%s196 + $0x4f8] sm:$0xff]
      %v622 = vld [vmem:[%s196 + $0x500] sm:$0xff]
      %v623 = vld [vmem:[%s196 + $0x508] sm:$0xff]
      %v624 = vld [vmem:[%s196 + $0x510] sm:$0xff]
      %v625 = vld [vmem:[%s196 + $0x518] sm:$0xff]
      %v626 = vld [vmem:[%s196 + $0x520] sm:$0xff]
      %v627 = vld [vmem:[%s196 + $0x528] sm:$0xff]
      %v628 = vld [vmem:[%s196 + $0x530] sm:$0xff]
      %v629 = vld [vmem:[%s196 + $0x538] sm:$0xff]
      %v630 = vld [vmem:[%s196 + $0x540] sm:$0xff]
      %v631 = vld [vmem:[%s196 + $0x548] sm:$0xff]
      %v632 = vld [vmem:[%s196 + $0x550] sm:$0xff]
      %v633 = vld [vmem:[%s196 + $0x558] sm:$0xff]
      %v634 = vld [vmem:[%s196 + $0x560] sm:$0xff]
      %v635 = vld [vmem:[%s196 + $0x568] sm:$0xff]
      %v636 = vld [vmem:[%s196 + $0x570] sm:$0xff]
      %v637 = vld [vmem:[%s196 + $0x578] sm:$0xff]
      %v638 = vld [vmem:[%s196 + $0x580] sm:$0xff]
      %v639 = vld [vmem:[%s196 + $0x588] sm:$0xff]
      %v640 = vld [vmem:[%s196 + $0x590] sm:$0xff]
      %v641 = vld [vmem:[%s196 + $0x598] sm:$0xff]
      %v642 = vld [vmem:[%s196 + $0x5a0] sm:$0xff]
      %v643 = vld [vmem:[%s196 + $0x5a8] sm:$0xff]
      %v644 = vld [vmem:[%s196 + $0x5b0] sm:$0xff]
      %v645 = vld [vmem:[%s196 + $0x5b8] sm:$0xff]
      %v646 = vld [vmem:[%s196 + $0x5c0] sm:$0xff]
      %v647 = vld [vmem:[%s196 + $0x5c8] sm:$0xff]
      %v648 = vld [vmem:[%s196 + $0x5d0] sm:$0xff]
      %v649 = vld [vmem:[%s196 + $0x5d8] sm:$0xff]
      %v650 = vld [vmem:[%s196 + $0x5e0] sm:$0xff]
      %v651 = vld [vmem:[%s196 + $0x5e8] sm:$0xff]
      %v652 = vld [vmem:[%s196 + $0x5f0] sm:$0xff]
      %v653 = vld [vmem:[%s196 + $0x5f8] sm:$0xff]
      %v654 = vld [vmem:[%s196 + $0x600] sm:$0xff]
      %v655 = vld [vmem:[%s196 + $0x608] sm:$0xff]
      %v656 = vld [vmem:[%s196 + $0x610] sm:$0xff]
      %v657 = vld [vmem:[%s196 + $0x618] sm:$0xff]
      %v658 = vld [vmem:[%s196 + $0x620] sm:$0xff]
      %v659 = vld [vmem:[%s196 + $0x628] sm:$0xff]
      %v660 = vld [vmem:[%s196 + $0x630] sm:$0xff]
      %v661 = vld [vmem:[%s196 + $0x638] sm:$0xff]
      %v662 = vld [vmem:[%s196 + $0x640] sm:$0xff]
      %v663 = vld [vmem:[%s196 + $0x648] sm:$0xff]
      %v664 = vld [vmem:[%s196 + $0x650] sm:$0xff]
      %v665 = vld [vmem:[%s196 + $0x658] sm:$0xff]
      %v666 = vld [vmem:[%s196 + $0x660] sm:$0xff]
      %v667 = vld [vmem:[%s196 + $0x668] sm:$0xff]
      %v668 = vld [vmem:[%s196 + $0x670] sm:$0xff]
      %v669 = vld [vmem:[%s196 + $0x678] sm:$0xff]
      %v670 = vld [vmem:[%s196 + $0x680] sm:$0xff]
      %v671 = vld [vmem:[%s196 + $0x688] sm:$0xff]
      %v672 = vld [vmem:[%s196 + $0x690] sm:$0xff]
      %v673 = vld [vmem:[%s196 + $0x698] sm:$0xff]
      %v674 = vld [vmem:[%s196 + $0x6a0] sm:$0xff]
      %v675 = vld [vmem:[%s196 + $0x6a8] sm:$0xff]
      %v676 = vld [vmem:[%s196 + $0x6b0] sm:$0xff]
      %v677 = vld [vmem:[%s196 + $0x6b8] sm:$0xff]
      %v678 = vld [vmem:[%s196 + $0x6c0] sm:$0xff]
      %v679 = vld [vmem:[%s196 + $0x6c8] sm:$0xff]
      %v680 = vld [vmem:[%s196 + $0x6d0] sm:$0xff]
      %v681 = vld [vmem:[%s196 + $0x6d8] sm:$0xff]
      %v682 = vld [vmem:[%s196 + $0x6e0] sm:$0xff]
      %v683 = vld [vmem:[%s196 + $0x6e8] sm:$0xff]
      %v684 = vld [vmem:[%s196 + $0x6f0] sm:$0xff]
      %v685 = vld [vmem:[%s196 + $0x6f8] sm:$0xff]
      %v686 = vld [vmem:[%s196 + $0x700] sm:$0xff]
      %v687 = vld [vmem:[%s196 + $0x708] sm:$0xff]
      %v688 = vld [vmem:[%s196 + $0x710] sm:$0xff]
      %v689 = vld [vmem:[%s196 + $0x718] sm:$0xff]
      %v690 = vld [vmem:[%s196 + $0x720] sm:$0xff]
      %v691 = vld [vmem:[%s196 + $0x728] sm:$0xff]
      %v692 = vld [vmem:[%s196 + $0x730] sm:$0xff]
      %v693 = vld [vmem:[%s196 + $0x738] sm:$0xff]
      %v694 = vld [vmem:[%s196 + $0x740] sm:$0xff]
      %v695 = vld [vmem:[%s196 + $0x748] sm:$0xff]
      %v696 = vld [vmem:[%s196 + $0x750] sm:$0xff]
      %v697 = vld [vmem:[%s196 + $0x758] sm:$0xff]
      %v698 = vld [vmem:[%s196 + $0x760] sm:$0xff]
      %v699 = vld [vmem:[%s196 + $0x768] sm:$0xff]
      %v700 = vld [vmem:[%s196 + $0x770] sm:$0xff]
      %v701 = vld [vmem:[%s196 + $0x778] sm:$0xff]
      %v702 = vld [vmem:[%s196 + $0x780] sm:$0xff]
      %v703 = vld [vmem:[%s196 + $0x788] sm:$0xff]
      %v704 = vld [vmem:[%s196 + $0x790] sm:$0xff]
      %v705 = vld [vmem:[%s196 + $0x798] sm:$0xff]
      %v706 = vld [vmem:[%s196 + $0x7a0] sm:$0xff]
      %v707 = vld [vmem:[%s196 + $0x7a8] sm:$0xff]
      %v708 = vld [vmem:[%s196 + $0x7b0] sm:$0xff]
      %v709 = vld [vmem:[%s196 + $0x7b8] sm:$0xff]
      %v710 = vld [vmem:[%s196 + $0x7c0] sm:$0xff]
      %v711 = vld [vmem:[%s196 + $0x7c8] sm:$0xff]
      %v712 = vld [vmem:[%s196 + $0x7d0] sm:$0xff]
      %v713 = vld [vmem:[%s196 + $0x7d8] sm:$0xff]
      %v714 = vld [vmem:[%s196 + $0x7e0] sm:$0xff]
      %v715 = vld [vmem:[%s196 + $0x7e8] sm:$0xff]
      %v716 = vld [vmem:[%s196 + $0x7f0] sm:$0xff]
      %v717 = vld [vmem:[%s196 + $0x7f8] sm:$0xff]
      %v718 = vsub.f32 %v206, %v462
      %v719 = vsub.f32 %v207, %v463
      %v720 = vsub.f32 %v208, %v464
      %v721 = vsub.f32 %v209, %v465
      %v722 = vsub.f32 %v210, %v466
      %v723 = vsub.f32 %v211, %v467
      %v724 = vsub.f32 %v212, %v468
      %v725 = vsub.f32 %v213, %v469
      %v726 = vsub.f32 %v214, %v470
      %v727 = vsub.f32 %v215, %v471
      %v728 = vsub.f32 %v216, %v472
      %v729 = vsub.f32 %v217, %v473
      %v730 = vsub.f32 %v218, %v474
      %v731 = vsub.f32 %v219, %v475
      %v732 = vsub.f32 %v220, %v476
      %v733 = vsub.f32 %v221, %v477
      %v734 = vsub.f32 %v222, %v478
      %v735 = vsub.f32 %v223, %v479
      %v736 = vsub.f32 %v224, %v480
      %v737 = vsub.f32 %v225, %v481
      %v738 = vsub.f32 %v226, %v482
      %v739 = vsub.f32 %v227, %v483
      %v740 = vsub.f32 %v228, %v484
      %v741 = vsub.f32 %v229, %v485
      %v742 = vsub.f32 %v230, %v486
      %v743 = vsub.f32 %v231, %v487
      %v744 = vsub.f32 %v232, %v488
      %v745 = vsub.f32 %v233, %v489
      %v746 = vsub.f32 %v234, %v490
      %v747 = vsub.f32 %v235, %v491
      %v748 = vsub.f32 %v236, %v492
      %v749 = vsub.f32 %v237, %v493
      %v750 = vsub.f32 %v238, %v494
      %v751 = vsub.f32 %v239, %v495
      %v752 = vsub.f32 %v240, %v496
      %v753 = vsub.f32 %v241, %v497
      %v754 = vsub.f32 %v242, %v498
      %v755 = vsub.f32 %v243, %v499
      %v756 = vsub.f32 %v244, %v500
      %v757 = vsub.f32 %v245, %v501
      %v758 = vsub.f32 %v246, %v502
      %v759 = vsub.f32 %v247, %v503
      %v760 = vsub.f32 %v248, %v504
      %v761 = vsub.f32 %v249, %v505
      %v762 = vsub.f32 %v250, %v506
      %v763 = vsub.f32 %v251, %v507
      %v764 = vsub.f32 %v252, %v508
      %v765 = vsub.f32 %v253, %v509
      %v766 = vsub.f32 %v254, %v510
      %v767 = vsub.f32 %v255, %v511
      %v768 = vsub.f32 %v256, %v512
      %v769 = vsub.f32 %v257, %v513
      %v770 = vsub.f32 %v258, %v514
      %v771 = vsub.f32 %v259, %v515
      %v772 = vsub.f32 %v260, %v516
      %v773 = vsub.f32 %v261, %v517
      %v774 = vsub.f32 %v262, %v518
      %v775 = vsub.f32 %v263, %v519
      %v776 = vsub.f32 %v264, %v520
      %v777 = vsub.f32 %v265, %v521
      %v778 = vsub.f32 %v266, %v522
      %v779 = vsub.f32 %v267, %v523
      %v780 = vsub.f32 %v268, %v524
      %v781 = vsub.f32 %v269, %v525
      %v782 = vsub.f32 %v270, %v526
      %v783 = vsub.f32 %v271, %v527
      %v784 = vsub.f32 %v272, %v528
      %v785 = vsub.f32 %v273, %v529
      %v786 = vsub.f32 %v274, %v530
      %v787 = vsub.f32 %v275, %v531
      %v788 = vsub.f32 %v276, %v532
      %v789 = vsub.f32 %v277, %v533
      %v790 = vsub.f32 %v278, %v534
      %v791 = vsub.f32 %v279, %v535
      %v792 = vsub.f32 %v280, %v536
      %v793 = vsub.f32 %v281, %v537
      %v794 = vsub.f32 %v282, %v538
      %v795 = vsub.f32 %v283, %v539
      %v796 = vsub.f32 %v284, %v540
      %v797 = vsub.f32 %v285, %v541
      %v798 = vsub.f32 %v286, %v542
      %v799 = vsub.f32 %v287, %v543
      %v800 = vsub.f32 %v288, %v544
      %v801 = vsub.f32 %v289, %v545
      %v802 = vsub.f32 %v290, %v546
      %v803 = vsub.f32 %v291, %v547
      %v804 = vsub.f32 %v292, %v548
      %v805 = vsub.f32 %v293, %v549
      %v806 = vsub.f32 %v294, %v550
      %v807 = vsub.f32 %v295, %v551
      %v808 = vsub.f32 %v296, %v552
      %v809 = vsub.f32 %v297, %v553
      %v810 = vsub.f32 %v298, %v554
      %v811 = vsub.f32 %v299, %v555
      %v812 = vsub.f32 %v300, %v556
      %v813 = vsub.f32 %v301, %v557
      %v814 = vsub.f32 %v302, %v558
      %v815 = vsub.f32 %v303, %v559
      %v816 = vsub.f32 %v304, %v560
      %v817 = vsub.f32 %v305, %v561
      %v818 = vsub.f32 %v306, %v562
      %v819 = vsub.f32 %v307, %v563
      %v820 = vsub.f32 %v308, %v564
      %v821 = vsub.f32 %v309, %v565
      %v822 = vsub.f32 %v310, %v566
      %v823 = vsub.f32 %v311, %v567
      %v824 = vsub.f32 %v312, %v568
      %v825 = vsub.f32 %v313, %v569
      %v826 = vsub.f32 %v314, %v570
      %v827 = vsub.f32 %v315, %v571
      %v828 = vsub.f32 %v316, %v572
      %v829 = vsub.f32 %v317, %v573
      %v830 = vsub.f32 %v318, %v574
      %v831 = vsub.f32 %v319, %v575
      %v832 = vsub.f32 %v320, %v576
      %v833 = vsub.f32 %v321, %v577
      %v834 = vsub.f32 %v322, %v578
      %v835 = vsub.f32 %v323, %v579
      %v836 = vsub.f32 %v324, %v580
      %v837 = vsub.f32 %v325, %v581
      %v838 = vsub.f32 %v326, %v582
      %v839 = vsub.f32 %v327, %v583
      %v840 = vsub.f32 %v328, %v584
      %v841 = vsub.f32 %v329, %v585
      %v842 = vsub.f32 %v330, %v586
      %v843 = vsub.f32 %v331, %v587
      %v844 = vsub.f32 %v332, %v588
      %v845 = vsub.f32 %v333, %v589
      %v846 = vsub.f32 %v334, %v590
      %v847 = vsub.f32 %v335, %v591
      %v848 = vsub.f32 %v336, %v592
      %v849 = vsub.f32 %v337, %v593
      %v850 = vsub.f32 %v338, %v594
      %v851 = vsub.f32 %v339, %v595
      %v852 = vsub.f32 %v340, %v596
      %v853 = vsub.f32 %v341, %v597
      %v854 = vsub.f32 %v342, %v598
      %v855 = vsub.f32 %v343, %v599
      %v856 = vsub.f32 %v344, %v600
      %v857 = vsub.f32 %v345, %v601
      %v858 = vsub.f32 %v346, %v602
      %v859 = vsub.f32 %v347, %v603
      %v860 = vsub.f32 %v348, %v604
      %v861 = vsub.f32 %v349, %v605
      %v862 = vsub.f32 %v350, %v606
      %v863 = vsub.f32 %v351, %v607
      %v864 = vsub.f32 %v352, %v608
      %v865 = vsub.f32 %v353, %v609
      %v866 = vsub.f32 %v354, %v610
      %v867 = vsub.f32 %v355, %v611
      %v868 = vsub.f32 %v356, %v612
      %v869 = vsub.f32 %v357, %v613
      %v870 = vsub.f32 %v358, %v614
      %v871 = vsub.f32 %v359, %v615
      %v872 = vsub.f32 %v360, %v616
      %v873 = vsub.f32 %v361, %v617
      %v874 = vsub.f32 %v362, %v618
      %v875 = vsub.f32 %v363, %v619
      %v876 = vsub.f32 %v364, %v620
      %v877 = vsub.f32 %v365, %v621
      %v878 = vsub.f32 %v366, %v622
      %v879 = vsub.f32 %v367, %v623
      %v880 = vsub.f32 %v368, %v624
      %v881 = vsub.f32 %v369, %v625
      %v882 = vsub.f32 %v370, %v626
      %v883 = vsub.f32 %v371, %v627
      %v884 = vsub.f32 %v372, %v628
      %v885 = vsub.f32 %v373, %v629
      %v886 = vsub.f32 %v374, %v630
      %v887 = vsub.f32 %v375, %v631
      %v888 = vsub.f32 %v376, %v632
      %v889 = vsub.f32 %v377, %v633
      %v890 = vsub.f32 %v378, %v634
      %v891 = vsub.f32 %v379, %v635
      %v892 = vsub.f32 %v380, %v636
      %v893 = vsub.f32 %v381, %v637
      %v894 = vsub.f32 %v382, %v638
      %v895 = vsub.f32 %v383, %v639
      %v896 = vsub.f32 %v384, %v640
      %v897 = vsub.f32 %v385, %v641
      %v898 = vsub.f32 %v386, %v642
      %v899 = vsub.f32 %v387, %v643
      %v900 = vsub.f32 %v388, %v644
      %v901 = vsub.f32 %v389, %v645
      %v902 = vsub.f32 %v390, %v646
      %v903 = vsub.f32 %v391, %v647
      %v904 = vsub.f32 %v392, %v648
      %v905 = vsub.f32 %v393, %v649
      %v906 = vsub.f32 %v394, %v650
      %v907 = vsub.f32 %v395, %v651
      %v908 = vsub.f32 %v396, %v652
      %v909 = vsub.f32 %v397, %v653
      %v910 = vsub.f32 %v398, %v654
      %v911 = vsub.f32 %v399, %v655
      %v912 = vsub.f32 %v400, %v656
      %v913 = vsub.f32 %v401, %v657
      %v914 = vsub.f32 %v402, %v658
      %v915 = vsub.f32 %v403, %v659
      %v916 = vsub.f32 %v404, %v660
      %v917 = vsub.f32 %v405, %v661
      %v918 = vsub.f32 %v406, %v662
      %v919 = vsub.f32 %v407, %v663
      %v920 = vsub.f32 %v408, %v664
      %v921 = vsub.f32 %v409, %v665
      %v922 = vsub.f32 %v410, %v666
      %v923 = vsub.f32 %v411, %v667
      %v924 = vsub.f32 %v412, %v668
      %v925 = vsub.f32 %v413, %v669
      %v926 = vsub.f32 %v414, %v670
      %v927 = vsub.f32 %v415, %v671
      %v928 = vsub.f32 %v416, %v672
      %v929 = vsub.f32 %v417, %v673
      %v930 = vsub.f32 %v418, %v674
      %v931 = vsub.f32 %v419, %v675
      %v932 = vsub.f32 %v420, %v676
      %v933 = vsub.f32 %v421, %v677
      %v934 = vsub.f32 %v422, %v678
      %v935 = vsub.f32 %v423, %v679
      %v936 = vsub.f32 %v424, %v680
      %v937 = vsub.f32 %v425, %v681
      %v938 = vsub.f32 %v426, %v682
      %v939 = vsub.f32 %v427, %v683
      %v940 = vsub.f32 %v428, %v684
      %v941 = vsub.f32 %v429, %v685
      %v942 = vsub.f32 %v430, %v686
      %v943 = vsub.f32 %v431, %v687
      %v944 = vsub.f32 %v432, %v688
      %v945 = vsub.f32 %v433, %v689
      %v946 = vsub.f32 %v434, %v690
      %v947 = vsub.f32 %v435, %v691
      %v948 = vsub.f32 %v436, %v692
      %v949 = vsub.f32 %v437, %v693
      %v950 = vsub.f32 %v438, %v694
      %v951 = vsub.f32 %v439, %v695
      %v952 = vsub.f32 %v440, %v696
      %v953 = vsub.f32 %v441, %v697
      %v954 = vsub.f32 %v442, %v698
      %v955 = vsub.f32 %v443, %v699
      %v956 = vsub.f32 %v444, %v700
      %v957 = vsub.f32 %v445, %v701
      %v958 = vsub.f32 %v446, %v702
      %v959 = vsub.f32 %v447, %v703
      %v960 = vsub.f32 %v448, %v704
      %v961 = vsub.f32 %v449, %v705
      %v962 = vsub.f32 %v450, %v706
      %v963 = vsub.f32 %v451, %v707
      %v964 = vsub.f32 %v452, %v708
      %v965 = vsub.f32 %v453, %v709
      %v966 = vsub.f32 %v454, %v710
      %v967 = vsub.f32 %v455, %v711
      %v968 = vsub.f32 %v456, %v712
      %v969 = vsub.f32 %v457, %v713
      %v970 = vsub.f32 %v458, %v714
      %v971 = vsub.f32 %v459, %v715
      %v972 = vsub.f32 %v460, %v716
      %v973 = vsub.f32 %v461, %v717
      %v974 = vstv %s205
      %v975 = vmul.f32 %v974, %v718
      %v976 = vmul.f32 %v974, %v719
      %v977 = vmul.f32 %v974, %v720
      %v978 = vmul.f32 %v974, %v721
      %v979 = vmul.f32 %v974, %v722
      %v980 = vmul.f32 %v974, %v723
      %v981 = vmul.f32 %v974, %v724
      %v982 = vmul.f32 %v974, %v725
      %v983 = vmul.f32 %v974, %v726
      %v984 = vmul.f32 %v974, %v727
      %v985 = vmul.f32 %v974, %v728
      %v986 = vmul.f32 %v974, %v729
      %v987 = vmul.f32 %v974, %v730
      %v988 = vmul.f32 %v974, %v731
      %v989 = vmul.f32 %v974, %v732
      %v990 = vmul.f32 %v974, %v733
      %v991 = vmul.f32 %v974, %v734
      %v992 = vmul.f32 %v974, %v735
      %v993 = vmul.f32 %v974, %v736
      %v994 = vmul.f32 %v974, %v737
      %v995 = vmul.f32 %v974, %v738
      %v996 = vmul.f32 %v974, %v739
      %v997 = vmul.f32 %v974, %v740
      %v998 = vmul.f32 %v974, %v741
      %v999 = vmul.f32 %v974, %v742
      %v1000 = vmul.f32 %v974, %v743
      %v1001 = vmul.f32 %v974, %v744
      %v1002 = vmul.f32 %v974, %v745
      %v1003 = vmul.f32 %v974, %v746
      %v1004 = vmul.f32 %v974, %v747
      %v1005 = vmul.f32 %v974, %v748
      %v1006 = vmul.f32 %v974, %v749
      %v1007 = vmul.f32 %v974, %v750
      %v1008 = vmul.f32 %v974, %v751
      %v1009 = vmul.f32 %v974, %v752
      %v1010 = vmul.f32 %v974, %v753
      %v1011 = vmul.f32 %v974, %v754
      %v1012 = vmul.f32 %v974, %v755
      %v1013 = vmul.f32 %v974, %v756
      %v1014 = vmul.f32 %v974, %v757
      %v1015 = vmul.f32 %v974, %v758
      %v1016 = vmul.f32 %v974, %v759
      %v1017 = vmul.f32 %v974, %v760
      %v1018 = vmul.f32 %v974, %v761
      %v1019 = vmul.f32 %v974, %v762
      %v1020 = vmul.f32 %v974, %v763
      %v1021 = vmul.f32 %v974, %v764
      %v1022 = vmul.f32 %v974, %v765
      %v1023 = vmul.f32 %v974, %v766
      %v1024 = vmul.f32 %v974, %v767
      %v1025 = vmul.f32 %v974, %v768
      %v1026 = vmul.f32 %v974, %v769
      %v1027 = vmul.f32 %v974, %v770
      %v1028 = vmul.f32 %v974, %v771
      %v1029 = vmul.f32 %v974, %v772
      %v1030 = vmul.f32 %v974, %v773
      %v1031 = vmul.f32 %v974, %v774
      %v1032 = vmul.f32 %v974, %v775
      %v1033 = vmul.f32 %v974, %v776
      %v1034 = vmul.f32 %v974, %v777
      %v1035 = vmul.f32 %v974, %v778
      %v1036 = vmul.f32 %v974, %v779
      %v1037 = vmul.f32 %v974, %v780
      %v1038 = vmul.f32 %v974, %v781
      %v1039 = vmul.f32 %v974, %v782
      %v1040 = vmul.f32 %v974, %v783
      %v1041 = vmul.f32 %v974, %v784
      %v1042 = vmul.f32 %v974, %v785
      %v1043 = vmul.f32 %v974, %v786
      %v1044 = vmul.f32 %v974, %v787
      %v1045 = vmul.f32 %v974, %v788
      %v1046 = vmul.f32 %v974, %v789
      %v1047 = vmul.f32 %v974, %v790
      %v1048 = vmul.f32 %v974, %v791
      %v1049 = vmul.f32 %v974, %v792
      %v1050 = vmul.f32 %v974, %v793
      %v1051 = vmul.f32 %v974, %v794
      %v1052 = vmul.f32 %v974, %v795
      %v1053 = vmul.f32 %v974, %v796
      %v1054 = vmul.f32 %v974, %v797
      %v1055 = vmul.f32 %v974, %v798
      %v1056 = vmul.f32 %v974, %v799
      %v1057 = vmul.f32 %v974, %v800
      %v1058 = vmul.f32 %v974, %v801
      %v1059 = vmul.f32 %v974, %v802
      %v1060 = vmul.f32 %v974, %v803
      %v1061 = vmul.f32 %v974, %v804
      %v1062 = vmul.f32 %v974, %v805
      %v1063 = vmul.f32 %v974, %v806
      %v1064 = vmul.f32 %v974, %v807
      %v1065 = vmul.f32 %v974, %v808
      %v1066 = vmul.f32 %v974, %v809
      %v1067 = vmul.f32 %v974, %v810
      %v1068 = vmul.f32 %v974, %v811
      %v1069 = vmul.f32 %v974, %v812
      %v1070 = vmul.f32 %v974, %v813
      %v1071 = vmul.f32 %v974, %v814
      %v1072 = vmul.f32 %v974, %v815
      %v1073 = vmul.f32 %v974, %v816
      %v1074 = vmul.f32 %v974, %v817
      %v1075 = vmul.f32 %v974, %v818
      %v1076 = vmul.f32 %v974, %v819
      %v1077 = vmul.f32 %v974, %v820
      %v1078 = vmul.f32 %v974, %v821
      %v1079 = vmul.f32 %v974, %v822
      %v1080 = vmul.f32 %v974, %v823
      %v1081 = vmul.f32 %v974, %v824
      %v1082 = vmul.f32 %v974, %v825
      %v1083 = vmul.f32 %v974, %v826
      %v1084 = vmul.f32 %v974, %v827
      %v1085 = vmul.f32 %v974, %v828
      %v1086 = vmul.f32 %v974, %v829
      %v1087 = vmul.f32 %v974, %v830
      %v1088 = vmul.f32 %v974, %v831
      %v1089 = vmul.f32 %v974, %v832
      %v1090 = vmul.f32 %v974, %v833
      %v1091 = vmul.f32 %v974, %v834
      %v1092 = vmul.f32 %v974, %v835
      %v1093 = vmul.f32 %v974, %v836
      %v1094 = vmul.f32 %v974, %v837
      %v1095 = vmul.f32 %v974, %v838
      %v1096 = vmul.f32 %v974, %v839
      %v1097 = vmul.f32 %v974, %v840
      %v1098 = vmul.f32 %v974, %v841
      %v1099 = vmul.f32 %v974, %v842
      %v1100 = vmul.f32 %v974, %v843
      %v1101 = vmul.f32 %v974, %v844
      %v1102 = vmul.f32 %v974, %v845
      %v1103 = vmul.f32 %v974, %v846
      %v1104 = vmul.f32 %v974, %v847
      %v1105 = vmul.f32 %v974, %v848
      %v1106 = vmul.f32 %v974, %v849
      %v1107 = vmul.f32 %v974, %v850
      %v1108 = vmul.f32 %v974, %v851
      %v1109 = vmul.f32 %v974, %v852
      %v1110 = vmul.f32 %v974, %v853
      %v1111 = vmul.f32 %v974, %v854
      %v1112 = vmul.f32 %v974, %v855
      %v1113 = vmul.f32 %v974, %v856
      %v1114 = vmul.f32 %v974, %v857
      %v1115 = vmul.f32 %v974, %v858
      %v1116 = vmul.f32 %v974, %v859
      %v1117 = vmul.f32 %v974, %v860
      %v1118 = vmul.f32 %v974, %v861
      %v1119 = vmul.f32 %v974, %v862
      %v1120 = vmul.f32 %v974, %v863
      %v1121 = vmul.f32 %v974, %v864
      %v1122 = vmul.f32 %v974, %v865
      %v1123 = vmul.f32 %v974, %v866
      %v1124 = vmul.f32 %v974, %v867
      %v1125 = vmul.f32 %v974, %v868
      %v1126 = vmul.f32 %v974, %v869
      %v1127 = vmul.f32 %v974, %v870
      %v1128 = vmul.f32 %v974, %v871
      %v1129 = vmul.f32 %v974, %v872
      %v1130 = vmul.f32 %v974, %v873
      %v1131 = vmul.f32 %v974, %v874
      %v1132 = vmul.f32 %v974, %v875
      %v1133 = vmul.f32 %v974, %v876
      %v1134 = vmul.f32 %v974, %v877
      %v1135 = vmul.f32 %v974, %v878
      %v1136 = vmul.f32 %v974, %v879
      %v1137 = vmul.f32 %v974, %v880
      %v1138 = vmul.f32 %v974, %v881
      %v1139 = vmul.f32 %v974, %v882
      %v1140 = vmul.f32 %v974, %v883
      %v1141 = vmul.f32 %v974, %v884
      %v1142 = vmul.f32 %v974, %v885
      %v1143 = vmul.f32 %v974, %v886
      %v1144 = vmul.f32 %v974, %v887
      %v1145 = vmul.f32 %v974, %v888
      %v1146 = vmul.f32 %v974, %v889
      %v1147 = vmul.f32 %v974, %v890
      %v1148 = vmul.f32 %v974, %v891
      %v1149 = vmul.f32 %v974, %v892
      %v1150 = vmul.f32 %v974, %v893
      %v1151 = vmul.f32 %v974, %v894
      %v1152 = vmul.f32 %v974, %v895
      %v1153 = vmul.f32 %v974, %v896
      %v1154 = vmul.f32 %v974, %v897
      %v1155 = vmul.f32 %v974, %v898
      %v1156 = vmul.f32 %v974, %v899
      %v1157 = vmul.f32 %v974, %v900
      %v1158 = vmul.f32 %v974, %v901
      %v1159 = vmul.f32 %v974, %v902
      %v1160 = vmul.f32 %v974, %v903
      %v1161 = vmul.f32 %v974, %v904
      %v1162 = vmul.f32 %v974, %v905
      %v1163 = vmul.f32 %v974, %v906
      %v1164 = vmul.f32 %v974, %v907
      %v1165 = vmul.f32 %v974, %v908
      %v1166 = vmul.f32 %v974, %v909
      %v1167 = vmul.f32 %v974, %v910
      %v1168 = vmul.f32 %v974, %v911
      %v1169 = vmul.f32 %v974, %v912
      %v1170 = vmul.f32 %v974, %v913
      %v1171 = vmul.f32 %v974, %v914
      %v1172 = vmul.f32 %v974, %v915
      %v1173 = vmul.f32 %v974, %v916
      %v1174 = vmul.f32 %v974, %v917
      %v1175 = vmul.f32 %v974, %v918
      %v1176 = vmul.f32 %v974, %v919
      %v1177 = vmul.f32 %v974, %v920
      %v1178 = vmul.f32 %v974, %v921
      %v1179 = vmul.f32 %v974, %v922
      %v1180 = vmul.f32 %v974, %v923
      %v1181 = vmul.f32 %v974, %v924
      %v1182 = vmul.f32 %v974, %v925
      %v1183 = vmul.f32 %v974, %v926
      %v1184 = vmul.f32 %v974, %v927
      %v1185 = vmul.f32 %v974, %v928
      %v1186 = vmul.f32 %v974, %v929
      %v1187 = vmul.f32 %v974, %v930
      %v1188 = vmul.f32 %v974, %v931
      %v1189 = vmul.f32 %v974, %v932
      %v1190 = vmul.f32 %v974, %v933
      %v1191 = vmul.f32 %v974, %v934
      %v1192 = vmul.f32 %v974, %v935
      %v1193 = vmul.f32 %v974, %v936
      %v1194 = vmul.f32 %v974, %v937
      %v1195 = vmul.f32 %v974, %v938
      %v1196 = vmul.f32 %v974, %v939
      %v1197 = vmul.f32 %v974, %v940
      %v1198 = vmul.f32 %v974, %v941
      %v1199 = vmul.f32 %v974, %v942
      %v1200 = vmul.f32 %v974, %v943
      %v1201 = vmul.f32 %v974, %v944
      %v1202 = vmul.f32 %v974, %v945
      %v1203 = vmul.f32 %v974, %v946
      %v1204 = vmul.f32 %v974, %v947
      %v1205 = vmul.f32 %v974, %v948
      %v1206 = vmul.f32 %v974, %v949
      %v1207 = vmul.f32 %v974, %v950
      %v1208 = vmul.f32 %v974, %v951
      %v1209 = vmul.f32 %v974, %v952
      %v1210 = vmul.f32 %v974, %v953
      %v1211 = vmul.f32 %v974, %v954
      %v1212 = vmul.f32 %v974, %v955
      %v1213 = vmul.f32 %v974, %v956
      %v1214 = vmul.f32 %v974, %v957
      %v1215 = vmul.f32 %v974, %v958
      %v1216 = vmul.f32 %v974, %v959
      %v1217 = vmul.f32 %v974, %v960
      %v1218 = vmul.f32 %v974, %v961
      %v1219 = vmul.f32 %v974, %v962
      %v1220 = vmul.f32 %v974, %v963
      %v1221 = vmul.f32 %v974, %v964
      %v1222 = vmul.f32 %v974, %v965
      %v1223 = vmul.f32 %v974, %v966
      %v1224 = vmul.f32 %v974, %v967
      %v1225 = vmul.f32 %v974, %v968
      %v1226 = vmul.f32 %v974, %v969
      %v1227 = vmul.f32 %v974, %v970
      %v1228 = vmul.f32 %v974, %v971
      %v1229 = vmul.f32 %v974, %v972
      %v1230 = vmul.f32 %v974, %v973
      %v1231 = vsub.f32 %v206, %v975
      %v1232 = vsub.f32 %v207, %v976
      %v1233 = vsub.f32 %v208, %v977
      %v1234 = vsub.f32 %v209, %v978
      %v1235 = vsub.f32 %v210, %v979
      %v1236 = vsub.f32 %v211, %v980
      %v1237 = vsub.f32 %v212, %v981
      %v1238 = vsub.f32 %v213, %v982
      %v1239 = vsub.f32 %v214, %v983
      %v1240 = vsub.f32 %v215, %v984
      %v1241 = vsub.f32 %v216, %v985
      %v1242 = vsub.f32 %v217, %v986
      %v1243 = vsub.f32 %v218, %v987
      %v1244 = vsub.f32 %v219, %v988
      %v1245 = vsub.f32 %v220, %v989
      %v1246 = vsub.f32 %v221, %v990
      %v1247 = vsub.f32 %v222, %v991
      %v1248 = vsub.f32 %v223, %v992
      %v1249 = vsub.f32 %v224, %v993
      %v1250 = vsub.f32 %v225, %v994
      %v1251 = vsub.f32 %v226, %v995
      %v1252 = vsub.f32 %v227, %v996
      %v1253 = vsub.f32 %v228, %v997
      %v1254 = vsub.f32 %v229, %v998
      %v1255 = vsub.f32 %v230, %v999
      %v1256 = vsub.f32 %v231, %v1000
      %v1257 = vsub.f32 %v232, %v1001
      %v1258 = vsub.f32 %v233, %v1002
      %v1259 = vsub.f32 %v234, %v1003
      %v1260 = vsub.f32 %v235, %v1004
      %v1261 = vsub.f32 %v236, %v1005
      %v1262 = vsub.f32 %v237, %v1006
      %v1263 = vsub.f32 %v238, %v1007
      %v1264 = vsub.f32 %v239, %v1008
      %v1265 = vsub.f32 %v240, %v1009
      %v1266 = vsub.f32 %v241, %v1010
      %v1267 = vsub.f32 %v242, %v1011
      %v1268 = vsub.f32 %v243, %v1012
      %v1269 = vsub.f32 %v244, %v1013
      %v1270 = vsub.f32 %v245, %v1014
      %v1271 = vsub.f32 %v246, %v1015
      %v1272 = vsub.f32 %v247, %v1016
      %v1273 = vsub.f32 %v248, %v1017
      %v1274 = vsub.f32 %v249, %v1018
      %v1275 = vsub.f32 %v250, %v1019
      %v1276 = vsub.f32 %v251, %v1020
      %v1277 = vsub.f32 %v252, %v1021
      %v1278 = vsub.f32 %v253, %v1022
      %v1279 = vsub.f32 %v254, %v1023
      %v1280 = vsub.f32 %v255, %v1024
      %v1281 = vsub.f32 %v256, %v1025
      %v1282 = vsub.f32 %v257, %v1026
      %v1283 = vsub.f32 %v258, %v1027
      %v1284 = vsub.f32 %v259, %v1028
      %v1285 = vsub.f32 %v260, %v1029
      %v1286 = vsub.f32 %v261, %v1030
      %v1287 = vsub.f32 %v262, %v1031
      %v1288 = vsub.f32 %v263, %v1032
      %v1289 = vsub.f32 %v264, %v1033
      %v1290 = vsub.f32 %v265, %v1034
      %v1291 = vsub.f32 %v266, %v1035
      %v1292 = vsub.f32 %v267, %v1036
      %v1293 = vsub.f32 %v268, %v1037
      %v1294 = vsub.f32 %v269, %v1038
      %v1295 = vsub.f32 %v270, %v1039
      %v1296 = vsub.f32 %v271, %v1040
      %v1297 = vsub.f32 %v272, %v1041
      %v1298 = vsub.f32 %v273, %v1042
      %v1299 = vsub.f32 %v274, %v1043
      %v1300 = vsub.f32 %v275, %v1044
      %v1301 = vsub.f32 %v276, %v1045
      %v1302 = vsub.f32 %v277, %v1046
      %v1303 = vsub.f32 %v278, %v1047
      %v1304 = vsub.f32 %v279, %v1048
      %v1305 = vsub.f32 %v280, %v1049
      %v1306 = vsub.f32 %v281, %v1050
      %v1307 = vsub.f32 %v282, %v1051
      %v1308 = vsub.f32 %v283, %v1052
      %v1309 = vsub.f32 %v284, %v1053
      %v1310 = vsub.f32 %v285, %v1054
      %v1311 = vsub.f32 %v286, %v1055
      %v1312 = vsub.f32 %v287, %v1056
      %v1313 = vsub.f32 %v288, %v1057
      %v1314 = vsub.f32 %v289, %v1058
      %v1315 = vsub.f32 %v290, %v1059
      %v1316 = vsub.f32 %v291, %v1060
      %v1317 = vsub.f32 %v292, %v1061
      %v1318 = vsub.f32 %v293, %v1062
      %v1319 = vsub.f32 %v294, %v1063
      %v1320 = vsub.f32 %v295, %v1064
      %v1321 = vsub.f32 %v296, %v1065
      %v1322 = vsub.f32 %v297, %v1066
      %v1323 = vsub.f32 %v298, %v1067
      %v1324 = vsub.f32 %v299, %v1068
      %v1325 = vsub.f32 %v300, %v1069
      %v1326 = vsub.f32 %v301, %v1070
      %v1327 = vsub.f32 %v302, %v1071
      %v1328 = vsub.f32 %v303, %v1072
      %v1329 = vsub.f32 %v304, %v1073
      %v1330 = vsub.f32 %v305, %v1074
      %v1331 = vsub.f32 %v306, %v1075
      %v1332 = vsub.f32 %v307, %v1076
      %v1333 = vsub.f32 %v308, %v1077
      %v1334 = vsub.f32 %v309, %v1078
      %v1335 = vsub.f32 %v310, %v1079
      %v1336 = vsub.f32 %v311, %v1080
      %v1337 = vsub.f32 %v312, %v1081
      %v1338 = vsub.f32 %v313, %v1082
      %v1339 = vsub.f32 %v314, %v1083
      %v1340 = vsub.f32 %v315, %v1084
      %v1341 = vsub.f32 %v316, %v1085
      %v1342 = vsub.f32 %v317, %v1086
      %v1343 = vsub.f32 %v318, %v1087
      %v1344 = vsub.f32 %v319, %v1088
      %v1345 = vsub.f32 %v320, %v1089
      %v1346 = vsub.f32 %v321, %v1090
      %v1347 = vsub.f32 %v322, %v1091
      %v1348 = vsub.f32 %v323, %v1092
      %v1349 = vsub.f32 %v324, %v1093
      %v1350 = vsub.f32 %v325, %v1094
      %v1351 = vsub.f32 %v326, %v1095
      %v1352 = vsub.f32 %v327, %v1096
      %v1353 = vsub.f32 %v328, %v1097
      %v1354 = vsub.f32 %v329, %v1098
      %v1355 = vsub.f32 %v330, %v1099
      %v1356 = vsub.f32 %v331, %v1100
      %v1357 = vsub.f32 %v332, %v1101
      %v1358 = vsub.f32 %v333, %v1102
      %v1359 = vsub.f32 %v334, %v1103
      %v1360 = vsub.f32 %v335, %v1104
      %v1361 = vsub.f32 %v336, %v1105
      %v1362 = vsub.f32 %v337, %v1106
      %v1363 = vsub.f32 %v338, %v1107
      %v1364 = vsub.f32 %v339, %v1108
      %v1365 = vsub.f32 %v340, %v1109
      %v1366 = vsub.f32 %v341, %v1110
      %v1367 = vsub.f32 %v342, %v1111
      %v1368 = vsub.f32 %v343, %v1112
      %v1369 = vsub.f32 %v344, %v1113
      %v1370 = vsub.f32 %v345, %v1114
      %v1371 = vsub.f32 %v346, %v1115
      %v1372 = vsub.f32 %v347, %v1116
      %v1373 = vsub.f32 %v348, %v1117
      %v1374 = vsub.f32 %v349, %v1118
      %v1375 = vsub.f32 %v350, %v1119
      %v1376 = vsub.f32 %v351, %v1120
      %v1377 = vsub.f32 %v352, %v1121
      %v1378 = vsub.f32 %v353, %v1122
      %v1379 = vsub.f32 %v354, %v1123
      %v1380 = vsub.f32 %v355, %v1124
      %v1381 = vsub.f32 %v356, %v1125
      %v1382 = vsub.f32 %v357, %v1126
      %v1383 = vsub.f32 %v358, %v1127
      %v1384 = vsub.f32 %v359, %v1128
      %v1385 = vsub.f32 %v360, %v1129
      %v1386 = vsub.f32 %v361, %v1130
      %v1387 = vsub.f32 %v362, %v1131
      %v1388 = vsub.f32 %v363, %v1132
      %v1389 = vsub.f32 %v364, %v1133
      %v1390 = vsub.f32 %v365, %v1134
      %v1391 = vsub.f32 %v366, %v1135
      %v1392 = vsub.f32 %v367, %v1136
      %v1393 = vsub.f32 %v368, %v1137
      %v1394 = vsub.f32 %v369, %v1138
      %v1395 = vsub.f32 %v370, %v1139
      %v1396 = vsub.f32 %v371, %v1140
      %v1397 = vsub.f32 %v372, %v1141
      %v1398 = vsub.f32 %v373, %v1142
      %v1399 = vsub.f32 %v374, %v1143
      %v1400 = vsub.f32 %v375, %v1144
      %v1401 = vsub.f32 %v376, %v1145
      %v1402 = vsub.f32 %v377, %v1146
      %v1403 = vsub.f32 %v378, %v1147
      %v1404 = vsub.f32 %v379, %v1148
      %v1405 = vsub.f32 %v380, %v1149
      %v1406 = vsub.f32 %v381, %v1150
      %v1407 = vsub.f32 %v382, %v1151
      %v1408 = vsub.f32 %v383, %v1152
      %v1409 = vsub.f32 %v384, %v1153
      %v1410 = vsub.f32 %v385, %v1154
      %v1411 = vsub.f32 %v386, %v1155
      %v1412 = vsub.f32 %v387, %v1156
      %v1413 = vsub.f32 %v388, %v1157
      %v1414 = vsub.f32 %v389, %v1158
      %v1415 = vsub.f32 %v390, %v1159
      %v1416 = vsub.f32 %v391, %v1160
      %v1417 = vsub.f32 %v392, %v1161
      %v1418 = vsub.f32 %v393, %v1162
      %v1419 = vsub.f32 %v394, %v1163
      %v1420 = vsub.f32 %v395, %v1164
      %v1421 = vsub.f32 %v396, %v1165
      %v1422 = vsub.f32 %v397, %v1166
      %v1423 = vsub.f32 %v398, %v1167
      %v1424 = vsub.f32 %v399, %v1168
      %v1425 = vsub.f32 %v400, %v1169
      %v1426 = vsub.f32 %v401, %v1170
      %v1427 = vsub.f32 %v402, %v1171
      %v1428 = vsub.f32 %v403, %v1172
      %v1429 = vsub.f32 %v404, %v1173
      %v1430 = vsub.f32 %v405, %v1174
      %v1431 = vsub.f32 %v406, %v1175
      %v1432 = vsub.f32 %v407, %v1176
      %v1433 = vsub.f32 %v408, %v1177
      %v1434 = vsub.f32 %v409, %v1178
      %v1435 = vsub.f32 %v410, %v1179
      %v1436 = vsub.f32 %v411, %v1180
      %v1437 = vsub.f32 %v412, %v1181
      %v1438 = vsub.f32 %v413, %v1182
      %v1439 = vsub.f32 %v414, %v1183
      %v1440 = vsub.f32 %v415, %v1184
      %v1441 = vsub.f32 %v416, %v1185
      %v1442 = vsub.f32 %v417, %v1186
      %v1443 = vsub.f32 %v418, %v1187
      %v1444 = vsub.f32 %v419, %v1188
      %v1445 = vsub.f32 %v420, %v1189
      %v1446 = vsub.f32 %v421, %v1190
      %v1447 = vsub.f32 %v422, %v1191
      %v1448 = vsub.f32 %v423, %v1192
      %v1449 = vsub.f32 %v424, %v1193
      %v1450 = vsub.f32 %v425, %v1194
      %v1451 = vsub.f32 %v426, %v1195
      %v1452 = vsub.f32 %v427, %v1196
      %v1453 = vsub.f32 %v428, %v1197
      %v1454 = vsub.f32 %v429, %v1198
      %v1455 = vsub.f32 %v430, %v1199
      %v1456 = vsub.f32 %v431, %v1200
      %v1457 = vsub.f32 %v432, %v1201
      %v1458 = vsub.f32 %v433, %v1202
      %v1459 = vsub.f32 %v434, %v1203
      %v1460 = vsub.f32 %v435, %v1204
      %v1461 = vsub.f32 %v436, %v1205
      %v1462 = vsub.f32 %v437, %v1206
      %v1463 = vsub.f32 %v438, %v1207
      %v1464 = vsub.f32 %v439, %v1208
      %v1465 = vsub.f32 %v440, %v1209
      %v1466 = vsub.f32 %v441, %v1210
      %v1467 = vsub.f32 %v442, %v1211
      %v1468 = vsub.f32 %v443, %v1212
      %v1469 = vsub.f32 %v444, %v1213
      %v1470 = vsub.f32 %v445, %v1214
      %v1471 = vsub.f32 %v446, %v1215
      %v1472 = vsub.f32 %v447, %v1216
      %v1473 = vsub.f32 %v448, %v1217
      %v1474 = vsub.f32 %v449, %v1218
      %v1475 = vsub.f32 %v450, %v1219
      %v1476 = vsub.f32 %v451, %v1220
      %v1477 = vsub.f32 %v452, %v1221
      %v1478 = vsub.f32 %v453, %v1222
      %v1479 = vsub.f32 %v454, %v1223
      %v1480 = vsub.f32 %v455, %v1224
      %v1481 = vsub.f32 %v456, %v1225
      %v1482 = vsub.f32 %v457, %v1226
      %v1483 = vsub.f32 %v458, %v1227
      %v1484 = vsub.f32 %v459, %v1228
      %v1485 = vsub.f32 %v460, %v1229
      %v1486 = vsub.f32 %v461, %v1230
      %1487 = vst [vmem:[%s203] sm:$0xff] %v1231
      %1488 = vst [vmem:[%s203 + $0x8] sm:$0xff] %v1232
      %1489 = vst [vmem:[%s203 + $0x10] sm:$0xff] %v1233
      %1490 = vst [vmem:[%s203 + $0x18] sm:$0xff] %v1234
      %1491 = vst [vmem:[%s203 + $0x20] sm:$0xff] %v1235
      %1492 = vst [vmem:[%s203 + $0x28] sm:$0xff] %v1236
      %1493 = vst [vmem:[%s203 + $0x30] sm:$0xff] %v1237
      %1494 = vst [vmem:[%s203 + $0x38] sm:$0xff] %v1238
      %1495 = vst [vmem:[%s203 + $0x40] sm:$0xff] %v1239
      %1496 = vst [vmem:[%s203 + $0x48] sm:$0xff] %v1240
      %1497 = vst [vmem:[%s203 + $0x50] sm:$0xff] %v1241
      %1498 = vst [vmem:[%s203 + $0x58] sm:$0xff] %v1242
      %1499 = vst [vmem:[%s203 + $0x60] sm:$0xff] %v1243
      %1500 = vst [vmem:[%s203 + $0x68] sm:$0xff] %v1244
      %1501 = vst [vmem:[%s203 + $0x70] sm:$0xff] %v1245
      %1502 = vst [vmem:[%s203 + $0x78] sm:$0xff] %v1246
      %1503 = vst [vmem:[%s203 + $0x80] sm:$0xff] %v1247
      %1504 = vst [vmem:[%s203 + $0x88] sm:$0xff] %v1248
      %1505 = vst [vmem:[%s203 + $0x90] sm:$0xff] %v1249
      %1506 = vst [vmem:[%s203 + $0x98] sm:$0xff] %v1250
      %1507 = vst [vmem:[%s203 + $0xa0] sm:$0xff] %v1251
      %1508 = vst [vmem:[%s203 + $0xa8] sm:$0xff] %v1252
      %1509 = vst [vmem:[%s203 + $0xb0] sm:$0xff] %v1253
      %1510 = vst [vmem:[%s203 + $0xb8] sm:$0xff] %v1254
      %1511 = vst [vmem:[%s203 + $0xc0] sm:$0xff] %v1255
      %1512 = vst [vmem:[%s203 + $0xc8] sm:$0xff] %v1256
      %1513 = vst [vmem:[%s203 + $0xd0] sm:$0xff] %v1257
      %1514 = vst [vmem:[%s203 + $0xd8] sm:$0xff] %v1258
      %1515 = vst [vmem:[%s203 + $0xe0] sm:$0xff] %v1259
      %1516 = vst [vmem:[%s203 + $0xe8] sm:$0xff] %v1260
      %1517 = vst [vmem:[%s203 + $0xf0] sm:$0xff] %v1261
      %1518 = vst [vmem:[%s203 + $0xf8] sm:$0xff] %v1262
      %1519 = vst [vmem:[%s203 + $0x100] sm:$0xff] %v1263
      %1520 = vst [vmem:[%s203 + $0x108] sm:$0xff] %v1264
      %1521 = vst [vmem:[%s203 + $0x110] sm:$0xff] %v1265
      %1522 = vst [vmem:[%s203 + $0x118] sm:$0xff] %v1266
      %1523 = vst [vmem:[%s203 + $0x120] sm:$0xff] %v1267
      %1524 = vst [vmem:[%s203 + $0x128] sm:$0xff] %v1268
      %1525 = vst [vmem:[%s203 + $0x130] sm:$0xff] %v1269
      %1526 = vst [vmem:[%s203 + $0x138] sm:$0xff] %v1270
      %1527 = vst [vmem:[%s203 + $0x140] sm:$0xff] %v1271
      %1528 = vst [vmem:[%s203 + $0x148] sm:$0xff] %v1272
      %1529 = vst [vmem:[%s203 + $0x150] sm:$0xff] %v1273
      %1530 = vst [vmem:[%s203 + $0x158] sm:$0xff] %v1274
      %1531 = vst [vmem:[%s203 + $0x160] sm:$0xff] %v1275
      %1532 = vst [vmem:[%s203 + $0x168] sm:$0xff] %v1276
      %1533 = vst [vmem:[%s203 + $0x170] sm:$0xff] %v1277
      %1534 = vst [vmem:[%s203 + $0x178] sm:$0xff] %v1278
      %1535 = vst [vmem:[%s203 + $0x180] sm:$0xff] %v1279
      %1536 = vst [vmem:[%s203 + $0x188] sm:$0xff] %v1280
      %1537 = vst [vmem:[%s203 + $0x190] sm:$0xff] %v1281
      %1538 = vst [vmem:[%s203 + $0x198] sm:$0xff] %v1282
      %1539 = vst [vmem:[%s203 + $0x1a0] sm:$0xff] %v1283
      %1540 = vst [vmem:[%s203 + $0x1a8] sm:$0xff] %v1284
      %1541 = vst [vmem:[%s203 + $0x1b0] sm:$0xff] %v1285
      %1542 = vst [vmem:[%s203 + $0x1b8] sm:$0xff] %v1286
      %1543 = vst [vmem:[%s203 + $0x1c0] sm:$0xff] %v1287
      %1544 = vst [vmem:[%s203 + $0x1c8] sm:$0xff] %v1288
      %1545 = vst [vmem:[%s203 + $0x1d0] sm:$0xff] %v1289
      %1546 = vst [vmem:[%s203 + $0x1d8] sm:$0xff] %v1290
      %1547 = vst [vmem:[%s203 + $0x1e0] sm:$0xff] %v1291
      %1548 = vst [vmem:[%s203 + $0x1e8] sm:$0xff] %v1292
      %1549 = vst [vmem:[%s203 + $0x1f0] sm:$0xff] %v1293
      %1550 = vst [vmem:[%s203 + $0x1f8] sm:$0xff] %v1294
      %1551 = vst [vmem:[%s203 + $0x200] sm:$0xff] %v1295
      %1552 = vst [vmem:[%s203 + $0x208] sm:$0xff] %v1296
      %1553 = vst [vmem:[%s203 + $0x210] sm:$0xff] %v1297
      %1554 = vst [vmem:[%s203 + $0x218] sm:$0xff] %v1298
      %1555 = vst [vmem:[%s203 + $0x220] sm:$0xff] %v1299
      %1556 = vst [vmem:[%s203 + $0x228] sm:$0xff] %v1300
      %1557 = vst [vmem:[%s203 + $0x230] sm:$0xff] %v1301
      %1558 = vst [vmem:[%s203 + $0x238] sm:$0xff] %v1302
      %1559 = vst [vmem:[%s203 + $0x240] sm:$0xff] %v1303
      %1560 = vst [vmem:[%s203 + $0x248] sm:$0xff] %v1304
      %1561 = vst [vmem:[%s203 + $0x250] sm:$0xff] %v1305
      %1562 = vst [vmem:[%s203 + $0x258] sm:$0xff] %v1306
      %1563 = vst [vmem:[%s203 + $0x260] sm:$0xff] %v1307
      %1564 = vst [vmem:[%s203 + $0x268] sm:$0xff] %v1308
      %1565 = vst [vmem:[%s203 + $0x270] sm:$0xff] %v1309
      %1566 = vst [vmem:[%s203 + $0x278] sm:$0xff] %v1310
      %1567 = vst [vmem:[%s203 + $0x280] sm:$0xff] %v1311
      %1568 = vst [vmem:[%s203 + $0x288] sm:$0xff] %v1312
      %1569 = vst [vmem:[%s203 + $0x290] sm:$0xff] %v1313
      %1570 = vst [vmem:[%s203 + $0x298] sm:$0xff] %v1314
      %1571 = vst [vmem:[%s203 + $0x2a0] sm:$0xff] %v1315
      %1572 = vst [vmem:[%s203 + $0x2a8] sm:$0xff] %v1316
      %1573 = vst [vmem:[%s203 + $0x2b0] sm:$0xff] %v1317
      %1574 = vst [vmem:[%s203 + $0x2b8] sm:$0xff] %v1318
      %1575 = vst [vmem:[%s203 + $0x2c0] sm:$0xff] %v1319
      %1576 = vst [vmem:[%s203 + $0x2c8] sm:$0xff] %v1320
      %1577 = vst [vmem:[%s203 + $0x2d0] sm:$0xff] %v1321
      %1578 = vst [vmem:[%s203 + $0x2d8] sm:$0xff] %v1322
      %1579 = vst [vmem:[%s203 + $0x2e0] sm:$0xff] %v1323
      %1580 = vst [vmem:[%s203 + $0x2e8] sm:$0xff] %v1324
      %1581 = vst [vmem:[%s203 + $0x2f0] sm:$0xff] %v1325
      %1582 = vst [vmem:[%s203 + $0x2f8] sm:$0xff] %v1326
      %1583 = vst [vmem:[%s203 + $0x300] sm:$0xff] %v1327
      %1584 = vst [vmem:[%s203 + $0x308] sm:$0xff] %v1328
      %1585 = vst [vmem:[%s203 + $0x310] sm:$0xff] %v1329
      %1586 = vst [vmem:[%s203 + $0x318] sm:$0xff] %v1330
      %1587 = vst [vmem:[%s203 + $0x320] sm:$0xff] %v1331
      %1588 = vst [vmem:[%s203 + $0x328] sm:$0xff] %v1332
      %1589 = vst [vmem:[%s203 + $0x330] sm:$0xff] %v1333
      %1590 = vst [vmem:[%s203 + $0x338] sm:$0xff] %v1334
      %1591 = vst [vmem:[%s203 + $0x340] sm:$0xff] %v1335
      %1592 = vst [vmem:[%s203 + $0x348] sm:$0xff] %v1336
      %1593 = vst [vmem:[%s203 + $0x350] sm:$0xff] %v1337
      %1594 = vst [vmem:[%s203 + $0x358] sm:$0xff] %v1338
      %1595 = vst [vmem:[%s203 + $0x360] sm:$0xff] %v1339
      %1596 = vst [vmem:[%s203 + $0x368] sm:$0xff] %v1340
      %1597 = vst [vmem:[%s203 + $0x370] sm:$0xff] %v1341
      %1598 = vst [vmem:[%s203 + $0x378] sm:$0xff] %v1342
      %1599 = vst [vmem:[%s203 + $0x380] sm:$0xff] %v1343
      %1600 = vst [vmem:[%s203 + $0x388] sm:$0xff] %v1344
      %1601 = vst [vmem:[%s203 + $0x390] sm:$0xff] %v1345
      %1602 = vst [vmem:[%s203 + $0x398] sm:$0xff] %v1346
      %1603 = vst [vmem:[%s203 + $0x3a0] sm:$0xff] %v1347
      %1604 = vst [vmem:[%s203 + $0x3a8] sm:$0xff] %v1348
      %1605 = vst [vmem:[%s203 + $0x3b0] sm:$0xff] %v1349
      %1606 = vst [vmem:[%s203 + $0x3b8] sm:$0xff] %v1350
      %1607 = vst [vmem:[%s203 + $0x3c0] sm:$0xff] %v1351
      %1608 = vst [vmem:[%s203 + $0x3c8] sm:$0xff] %v1352
      %1609 = vst [vmem:[%s203 + $0x3d0] sm:$0xff] %v1353
      %1610 = vst [vmem:[%s203 + $0x3d8] sm:$0xff] %v1354
      %1611 = vst [vmem:[%s203 + $0x3e0] sm:$0xff] %v1355
      %1612 = vst [vmem:[%s203 + $0x3e8] sm:$0xff] %v1356
      %1613 = vst [vmem:[%s203 + $0x3f0] sm:$0xff] %v1357
      %1614 = vst [vmem:[%s203 + $0x3f8] sm:$0xff] %v1358
      %1615 = vst [vmem:[%s203 + $0x400] sm:$0xff] %v1359
      %1616 = vst [vmem:[%s203 + $0x408] sm:$0xff] %v1360
      %1617 = vst [vmem:[%s203 + $0x410] sm:$0xff] %v1361
      %1618 = vst [vmem:[%s203 + $0x418] sm:$0xff] %v1362
      %1619 = vst [vmem:[%s203 + $0x420] sm:$0xff] %v1363
      %1620 = vst [vmem:[%s203 + $0x428] sm:$0xff] %v1364
      %1621 = vst [vmem:[%s203 + $0x430] sm:$0xff] %v1365
      %1622 = vst [vmem:[%s203 + $0x438] sm:$0xff] %v1366
      %1623 = vst [vmem:[%s203 + $0x440] sm:$0xff] %v1367
      %1624 = vst [vmem:[%s203 + $0x448] sm:$0xff] %v1368
      %1625 = vst [vmem:[%s203 + $0x450] sm:$0xff] %v1369
      %1626 = vst [vmem:[%s203 + $0x458] sm:$0xff] %v1370
      %1627 = vst [vmem:[%s203 + $0x460] sm:$0xff] %v1371
      %1628 = vst [vmem:[%s203 + $0x468] sm:$0xff] %v1372
      %1629 = vst [vmem:[%s203 + $0x470] sm:$0xff] %v1373
      %1630 = vst [vmem:[%s203 + $0x478] sm:$0xff] %v1374
      %1631 = vst [vmem:[%s203 + $0x480] sm:$0xff] %v1375
      %1632 = vst [vmem:[%s203 + $0x488] sm:$0xff] %v1376
      %1633 = vst [vmem:[%s203 + $0x490] sm:$0xff] %v1377
      %1634 = vst [vmem:[%s203 + $0x498] sm:$0xff] %v1378
      %1635 = vst [vmem:[%s203 + $0x4a0] sm:$0xff] %v1379
      %1636 = vst [vmem:[%s203 + $0x4a8] sm:$0xff] %v1380
      %1637 = vst [vmem:[%s203 + $0x4b0] sm:$0xff] %v1381
      %1638 = vst [vmem:[%s203 + $0x4b8] sm:$0xff] %v1382
      %1639 = vst [vmem:[%s203 + $0x4c0] sm:$0xff] %v1383
      %1640 = vst [vmem:[%s203 + $0x4c8] sm:$0xff] %v1384
      %1641 = vst [vmem:[%s203 + $0x4d0] sm:$0xff] %v1385
      %1642 = vst [vmem:[%s203 + $0x4d8] sm:$0xff] %v1386
      %1643 = vst [vmem:[%s203 + $0x4e0] sm:$0xff] %v1387
      %1644 = vst [vmem:[%s203 + $0x4e8] sm:$0xff] %v1388
      %1645 = vst [vmem:[%s203 + $0x4f0] sm:$0xff] %v1389
      %1646 = vst [vmem:[%s203 + $0x4f8] sm:$0xff] %v1390
      %1647 = vst [vmem:[%s203 + $0x500] sm:$0xff] %v1391
      %1648 = vst [vmem:[%s203 + $0x508] sm:$0xff] %v1392
      %1649 = vst [vmem:[%s203 + $0x510] sm:$0xff] %v1393
      %1650 = vst [vmem:[%s203 + $0x518] sm:$0xff] %v1394
      %1651 = vst [vmem:[%s203 + $0x520] sm:$0xff] %v1395
      %1652 = vst [vmem:[%s203 + $0x528] sm:$0xff] %v1396
      %1653 = vst [vmem:[%s203 + $0x530] sm:$0xff] %v1397
      %1654 = vst [vmem:[%s203 + $0x538] sm:$0xff] %v1398
      %1655 = vst [vmem:[%s203 + $0x540] sm:$0xff] %v1399
      %1656 = vst [vmem:[%s203 + $0x548] sm:$0xff] %v1400
      %1657 = vst [vmem:[%s203 + $0x550] sm:$0xff] %v1401
      %1658 = vst [vmem:[%s203 + $0x558] sm:$0xff] %v1402
      %1659 = vst [vmem:[%s203 + $0x560] sm:$0xff] %v1403
      %1660 = vst [vmem:[%s203 + $0x568] sm:$0xff] %v1404
      %1661 = vst [vmem:[%s203 + $0x570] sm:$0xff] %v1405
      %1662 = vst [vmem:[%s203 + $0x578] sm:$0xff] %v1406
      %1663 = vst [vmem:[%s203 + $0x580] sm:$0xff] %v1407
      %1664 = vst [vmem:[%s203 + $0x588] sm:$0xff] %v1408
      %1665 = vst [vmem:[%s203 + $0x590] sm:$0xff] %v1409
      %1666 = vst [vmem:[%s203 + $0x598] sm:$0xff] %v1410
      %1667 = vst [vmem:[%s203 + $0x5a0] sm:$0xff] %v1411
      %1668 = vst [vmem:[%s203 + $0x5a8] sm:$0xff] %v1412
      %1669 = vst [vmem:[%s203 + $0x5b0] sm:$0xff] %v1413
      %1670 = vst [vmem:[%s203 + $0x5b8] sm:$0xff] %v1414
      %1671 = vst [vmem:[%s203 + $0x5c0] sm:$0xff] %v1415
      %1672 = vst [vmem:[%s203 + $0x5c8] sm:$0xff] %v1416
      %1673 = vst [vmem:[%s203 + $0x5d0] sm:$0xff] %v1417
      %1674 = vst [vmem:[%s203 + $0x5d8] sm:$0xff] %v1418
      %1675 = vst [vmem:[%s203 + $0x5e0] sm:$0xff] %v1419
      %1676 = vst [vmem:[%s203 + $0x5e8] sm:$0xff] %v1420
      %1677 = vst [vmem:[%s203 + $0x5f0] sm:$0xff] %v1421
      %1678 = vst [vmem:[%s203 + $0x5f8] sm:$0xff] %v1422
      %1679 = vst [vmem:[%s203 + $0x600] sm:$0xff] %v1423
      %1680 = vst [vmem:[%s203 + $0x608] sm:$0xff] %v1424
      %1681 = vst [vmem:[%s203 + $0x610] sm:$0xff] %v1425
      %1682 = vst [vmem:[%s203 + $0x618] sm:$0xff] %v1426
      %1683 = vst [vmem:[%s203 + $0x620] sm:$0xff] %v1427
      %1684 = vst [vmem:[%s203 + $0x628] sm:$0xff] %v1428
      %1685 = vst [vmem:[%s203 + $0x630] sm:$0xff] %v1429
      %1686 = vst [vmem:[%s203 + $0x638] sm:$0xff] %v1430
      %1687 = vst [vmem:[%s203 + $0x640] sm:$0xff] %v1431
      %1688 = vst [vmem:[%s203 + $0x648] sm:$0xff] %v1432
      %1689 = vst [vmem:[%s203 + $0x650] sm:$0xff] %v1433
      %1690 = vst [vmem:[%s203 + $0x658] sm:$0xff] %v1434
      %1691 = vst [vmem:[%s203 + $0x660] sm:$0xff] %v1435
      %1692 = vst [vmem:[%s203 + $0x668] sm:$0xff] %v1436
      %1693 = vst [vmem:[%s203 + $0x670] sm:$0xff] %v1437
      %1694 = vst [vmem:[%s203 + $0x678] sm:$0xff] %v1438
      %1695 = vst [vmem:[%s203 + $0x680] sm:$0xff] %v1439
      %1696 = vst [vmem:[%s203 + $0x688] sm:$0xff] %v1440
      %1697 = vst [vmem:[%s203 + $0x690] sm:$0xff] %v1441
      %1698 = vst [vmem:[%s203 + $0x698] sm:$0xff] %v1442
      %1699 = vst [vmem:[%s203 + $0x6a0] sm:$0xff] %v1443
      %1700 = vst [vmem:[%s203 + $0x6a8] sm:$0xff] %v1444
      %1701 = vst [vmem:[%s203 + $0x6b0] sm:$0xff] %v1445
      %1702 = vst [vmem:[%s203 + $0x6b8] sm:$0xff] %v1446
      %1703 = vst [vmem:[%s203 + $0x6c0] sm:$0xff] %v1447
      %1704 = vst [vmem:[%s203 + $0x6c8] sm:$0xff] %v1448
      %1705 = vst [vmem:[%s203 + $0x6d0] sm:$0xff] %v1449
      %1706 = vst [vmem:[%s203 + $0x6d8] sm:$0xff] %v1450
      %1707 = vst [vmem:[%s203 + $0x6e0] sm:$0xff] %v1451
      %1708 = vst [vmem:[%s203 + $0x6e8] sm:$0xff] %v1452
      %1709 = vst [vmem:[%s203 + $0x6f0] sm:$0xff] %v1453
      %1710 = vst [vmem:[%s203 + $0x6f8] sm:$0xff] %v1454
      %1711 = vst [vmem:[%s203 + $0x700] sm:$0xff] %v1455
      %1712 = vst [vmem:[%s203 + $0x708] sm:$0xff] %v1456
      %1713 = vst [vmem:[%s203 + $0x710] sm:$0xff] %v1457
      %1714 = vst [vmem:[%s203 + $0x718] sm:$0xff] %v1458
      %1715 = vst [vmem:[%s203 + $0x720] sm:$0xff] %v1459
      %1716 = vst [vmem:[%s203 + $0x728] sm:$0xff] %v1460
      %1717 = vst [vmem:[%s203 + $0x730] sm:$0xff] %v1461
      %1718 = vst [vmem:[%s203 + $0x738] sm:$0xff] %v1462
      %1719 = vst [vmem:[%s203 + $0x740] sm:$0xff] %v1463
      %1720 = vst [vmem:[%s203 + $0x748] sm:$0xff] %v1464
      %1721 = vst [vmem:[%s203 + $0x750] sm:$0xff] %v1465
      %1722 = vst [vmem:[%s203 + $0x758] sm:$0xff] %v1466
      %1723 = vst [vmem:[%s203 + $0x760] sm:$0xff] %v1467
      %1724 = vst [vmem:[%s203 + $0x768] sm:$0xff] %v1468
      %1725 = vst [vmem:[%s203 + $0x770] sm:$0xff] %v1469
      %1726 = vst [vmem:[%s203 + $0x778] sm:$0xff] %v1470
      %1727 = vst [vmem:[%s203 + $0x780] sm:$0xff] %v1471
      %1728 = vst [vmem:[%s203 + $0x788] sm:$0xff] %v1472
      %1729 = vst [vmem:[%s203 + $0x790] sm:$0xff] %v1473
      %1730 = vst [vmem:[%s203 + $0x798] sm:$0xff] %v1474
      %1731 = vst [vmem:[%s203 + $0x7a0] sm:$0xff] %v1475
      %1732 = vst [vmem:[%s203 + $0x7a8] sm:$0xff] %v1476
      %1733 = vst [vmem:[%s203 + $0x7b0] sm:$0xff] %v1477
      %1734 = vst [vmem:[%s203 + $0x7b8] sm:$0xff] %v1478
      %1735 = vst [vmem:[%s203 + $0x7c0] sm:$0xff] %v1479
      %1736 = vst [vmem:[%s203 + $0x7c8] sm:$0xff] %v1480
      %1737 = vst [vmem:[%s203 + $0x7d0] sm:$0xff] %v1481
      %1738 = vst [vmem:[%s203 + $0x7d8] sm:$0xff] %v1482
      %1739 = vst [vmem:[%s203 + $0x7e0] sm:$0xff] %v1483
      %1740 = vst [vmem:[%s203 + $0x7e8] sm:$0xff] %v1484
      %1741 = vst [vmem:[%s203 + $0x7f0] sm:$0xff] %v1485
      %1742 = vst [vmem:[%s203 + $0x7f8] sm:$0xff] %v1486
      %s1743 = smul.u32 64, %s15
      %p1744 = scmp.lt.s32.totalorder %s1743, 191
      %s1745 = scalar_select %p1744, %s1743, 191
      %s1746 = smul.addr %s1745, 4
      %s1747 = smul.addr %s1746, 8
      %s1748 = scalar_lea.vmem %s3, %s1747
      // Predicated region
      $region33: #{ema_update.3} parent=31 // pred_check
        %p1749 = pneg %p106
      $region34: #{ema_update.3} parent=31 // pred_check_branch
        %1751 = sbr.rel (%p1749) target = $region36
      $region35: #{ema_update.3} parent=31 // pred_region
        %s1752 = smul.u32 64, %s15
      $region36: #{ema_update.3} parent=31 // pred_fallthru
        _
    $region32: #{ema_update.3} parent=5 // pred_fallthru
      _
    %p1753 = scmp.le.s32.totalorder 2, %s10
    // Predicated region
    $region37: #{ema_update.3} parent=5 // pred_check
      %p1754 = pneg %p1753
    $region38: #{ema_update.3} parent=5 // pred_check_branch
      %1756 = sbr.rel (%p1754) target = $region40
    $region39: #{ema_update.3} parent=5 // pred_region
      %s1757 = ssub.s32 %s10, 2
      // Predicated region
      $region41: #{ema_update.3} parent=39 // pred_check
        %p1758 = pneg %p112
      $region42: #{ema_update.3} parent=39 // pred_check_branch
        %1760 = sbr.rel (%p1758) target = $region44
      $region43: #{ema_update.3} parent=39 // pred_region
        %s1761 = smul.u32 64, %s16
        %p1762 = scmp.lt.s32.totalorder %s1761, 191
        %s1763 = scalar_select %p1762, %s1761, 191
        %s1764 = smul.addr %s1763, 4
        %s1765 = smul.addr %s1764, 8
        %s1766 = scalar_lea.vmem %s3, %s1765
      $region44: #{ema_update.3} parent=39 // pred_fallthru
        _
    $region40: #{ema_update.3} parent=5 // pred_fallthru
      _
  $region6: #{ema_update.3} parent=0 // loop_footer
    %s14 = sadd.s32 1, %s10
  $region7: #{ema_update.3} parent=0 // loop_footer_branch
    %9 = sbr.rel target = $region3
  $region8: #{ema_update.3} parent=0 // loop_exit
    _

</llo_original>
